<compile_context>
chip_gen: v5e
topology: v5e:2x2
jax: 0.10.0
libtpu: 0.0.40
codegen_flags: <defaults>
</compile_context>

<pallas_src>
import functools

import jax
import jax.numpy as jnp
from jax.experimental import pallas as pl
from jax.experimental.pallas import tpu as pltpu

# Layer sizes of the Generator MLP (fc1 .. fc10).
HIDDEN = [64, 128, 256, 512, 1024, 512, 256, 128, 64]
N_LAYERS = 10

_LANES = 128      # vreg lane width
_BF16_ROWS = 16   # bf16 packs 16 rows per sublane group


def _round_up(x, m):
    return (x + m - 1) // m * m


def _cdiv(a, b):
    return -(-a // b)


def _chip_profile():
    """Best-effort (max_batch_tile, num_tensorcores) from the device kind.

    v5e: cap tiles at 256 (197 TF/s MXU: a 256-row step is already ~3.5 us so
    per-step overhead is <10%; larger tiles buy little).
    v7x: 2 TensorCores per chip -> keep the grid splittable across cores.
    """
    max_tile, num_tc = 512, 1
    try:
        kind = jax.devices()[0].device_kind.lower().replace(" ", "")
    except Exception:
        return max_tile, num_tc
    if "v5lite" in kind or "v5e" in kind:
        max_tile = 256
    if "v7" in kind:
        num_tc = 2
    return max_tile, num_tc


def _pick_batch_tile(B, max_tile, num_tc):
    """MXU-friendly batch (row) tile.

    - rows rounded to 16 (bf16 sublane packing; 8-row tiles force half-empty
      MXU row groups and relayout work)
    - large batches: big tiles to amortize the ~0.35 us per-grid-step overhead
    - 2-TC chips (v7x): guarantee an even number of >=2 grid steps whenever
      B >= 64 so both TensorCores get equal work.
    """
    B16 = _round_up(B, _BF16_ROWS)
    if num_tc >= 2 and B >= 64:
        steps = _round_up(max(num_tc, _cdiv(B16, max_tile)), num_tc)
        return _round_up(_cdiv(B16, steps), _BF16_ROWS)
    if B >= 2 * max_tile:      # v6e: 512-row tiles for B >= 1024; v5e: 256
        return max_tile
    if B >= 512:
        return 256
    if B >= 256:
        return 128
    return B16


def _resident_spec(shape):
    """Whole-array BlockSpec with a constant index_map: the block index never
    changes, so Mosaic keeps the operand resident in VMEM and does not re-DMA
    it between grid steps.  Single-buffered (pl.Buffered(1)) because a second
    buffer would never be used; falls back cleanly if pipeline_mode is not
    supported by this BlockSpec."""
    index_map = lambda i: (0, 0)
    try:
        return pl.BlockSpec(shape, index_map, pipeline_mode=pl.Buffered(1))
    except TypeError:
        return pl.BlockSpec(shape, index_map)


def _mlp_kernel(x_ref, *refs):
    """Entire 10-layer MLP for one batch tile, fully resident in VMEM.

    refs = (w1..w10 (bf16, [in, out]), b1..b10 (f32, [1, out]), out_ref (f32)).
    bf16 operands drive the MXU with f32 accumulation; the bias-add / ReLU
    epilogue stays in f32 (also the fast path on v5e's VPU), then activations
    are narrowed back to bf16 for the next MXU pass.
    """
    w_refs = refs[:N_LAYERS]
    b_refs = refs[N_LAYERS:2 * N_LAYERS]
    out_ref = refs[2 * N_LAYERS]

    # In-kernel bf16 cast of the f32 input tile (hidden under MXU work).
    h = x_ref[...].astype(jnp.bfloat16)
    for i in range(N_LAYERS):
        acc = jnp.dot(h, w_refs[i][...], preferred_element_type=jnp.float32)
        acc = acc + b_refs[i][...]          # (1, out_i) broadcasts over rows
        if i < N_LAYERS - 1:
            h = jnp.maximum(acc, 0.0).astype(jnp.bfloat16)   # ReLU + narrow
        else:
            out_ref[...] = acc.astype(out_ref.dtype)  # lane-dense padded store


def prepare_params(weights, biases):
    """One-time parameter preparation (hoisted out of the forward path).

    weights[i]: [in_i, out_i] (transposed vs torch), any float dtype.
    biases[i]:  [out_i] or [1, out_i].
    Returns (bf16 weights, f32 [1, out] biases, out_dim); the last layer is
    padded to a multiple of 128 lanes so the kernel stores are lane-dense.
    """
    w_p = [jnp.asarray(w, jnp.bfloat16) for w in weights]
    b_p = [jnp.asarray(b, jnp.float32).reshape(1, -1) for b in biases]
    out_dim = w_p[-1].shape[1]
    out_pad = _round_up(out_dim, _LANES)
    if out_pad != out_dim:
        w_p[-1] = jnp.pad(w_p[-1], ((0, 0), (0, out_pad - out_dim)))
        b_p[-1] = jnp.pad(b_p[-1], ((0, 0), (0, out_pad - out_dim)))
    return tuple(w_p), tuple(b_p), out_dim


def generator_forward(x, weights, biases, *, out_dim=None, batch_tile=None):
    """Runs the Generator MLP via a single Pallas kernel, tiled over the batch.

    x:        [B, input_size] float32
    weights:  10 bf16 arrays [in_i, out_i]   (from prepare_params)
    biases:   10 f32 arrays  [1, out_i]      (from prepare_params)
    Returns [B, out_dim] float32.
    """
    B, in_dim = x.shape
    out_pad = weights[-1].shape[1]          # already lane-padded
    if out_dim is None:
        out_dim = out_pad

    max_tile, num_tc = _chip_profile()
    if batch_tile is None:
        batch_tile = _pick_batch_tile(B, max_tile, num_tc)
    B_pad = _round_up(B, batch_tile)

    # Only trivial f32 row padding in the wrapper (small-B case); the bf16
    # cast of x happens inside the kernel.
    x_p = x if B_pad == B else jnp.pad(x, ((0, B_pad - B), (0, 0)))

    grid = (B_pad // batch_tile,)

    x_spec = pl.BlockSpec((batch_tile, in_dim), lambda i: (i, 0))
    w_specs = [_resident_spec(w.shape) for w in weights]
    b_specs = [_resident_spec(b.shape) for b in biases]
    out_spec = pl.BlockSpec((batch_tile, out_pad), lambda i: (i, 0))

    # VMEM budget: resident params (x2 headroom in case they end up
    # double-buffered) + per-step activation working set + margin; clamped
    # well under v7x's 64 MiB physical VMEM.
    param_bytes = (sum(w.size * w.dtype.itemsize for w in weights)
                   + sum(b.size * b.dtype.itemsize for b in biases))
    act_bytes = batch_tile * (in_dim * 6 + max(HIDDEN) * 6 + out_pad * 4)
    vmem_limit = int(min(max(2 * param_bytes + 4 * act_bytes + (8 << 20),
                             24 << 20), 48 << 20))

    flops = 2 * B_pad * sum(w.shape[0] * w.shape[1] for w in weights)
    bytes_accessed = param_bytes + x_p.size * 4 + B_pad * out_pad * 4

    out = pl.pallas_call(
        _mlp_kernel,
        out_shape=jax.ShapeDtypeStruct((B_pad, out_pad), jnp.float32),
        grid_spec=pltpu.PrefetchScalarGridSpec(
            num_scalar_prefetch=0,
            grid=grid,
            in_specs=[x_spec] + w_specs + b_specs,
            out_specs=out_spec,
        ),
        compiler_params=pltpu.CompilerParams(
            dimension_semantics=("parallel",),
            vmem_limit_bytes=vmem_limit,
        ),
        cost_estimate=pl.CostEstimate(
            flops=flops, transcendentals=0, bytes_accessed=bytes_accessed),
    )(x_p, *weights, *biases)

    # TODO(synk): for serving-style small-batch loops, keep the bf16 weights
    # resident across calls via a cross-pallas_call VMEM/semaphore future (P10)
    # instead of re-reading ~2.8 MB from HBM each call; optionally fp8 for the
    # two 512x1024 layers on v7x (needs an accuracy gate).
    if B_pad == B and out_pad == out_dim:
        return out
    return out[:B, :out_dim]


def init_generator_params(key, input_size, output_size):
    """PyTorch-style nn.Linear init (uniform(+-1/sqrt(fan_in))), weights as [in, out]."""
    dims = [input_size] + HIDDEN + [output_size]
    weights, biases = [], []
    for i in range(N_LAYERS):
        fan_in, fan_out = dims[i], dims[i + 1]
        key, kw, kb = jax.random.split(key, 3)
        bound = 1.0 / jnp.sqrt(fan_in)
        w = jax.random.uniform(kw, (fan_in, fan_out), jnp.float32, -bound, bound)
        b = jax.random.uniform(kb, (1, fan_out), jnp.float32, -bound, bound)
        weights.append(w)
        biases.append(b)
    return weights, biases


def reference_forward(x, weights, biases):
    """Pure-JAX reference with the same numerics as the kernel
    (bf16 matmul operands, f32 accumulation, f32 epilogue)."""
    h = x.astype(jnp.bfloat16)
    out = None
    for i in range(N_LAYERS):
        acc = jnp.dot(h, weights[i].astype(jnp.bfloat16),
                      preferred_element_type=jnp.float32) + biases[i]
        if i < N_LAYERS - 1:
            h = jnp.maximum(acc, 0.0).astype(jnp.bfloat16)
        else:
            out = acc
    return out


if __name__ == "__main__":
    INPUT_SIZE = 32
    OUTPUT_SIZE = 16
    BATCH = 8

    key = jax.random.PRNGKey(0)
    key, kx = jax.random.split(key)
    x = jax.random.normal(kx, (BATCH, INPUT_SIZE), jnp.float32)

    weights, biases = init_generator_params(key, INPUT_SIZE, OUTPUT_SIZE)

    # One-time parameter prep (bf16 cast + lane pad) — NOT inside the jitted
    # forward, per the perf review.
    w_bf16, b_f32, out_dim = prepare_params(weights, biases)

    fwd = jax.jit(functools.partial(generator_forward, out_dim=out_dim))
    out = jax.block_until_ready(fwd(x, w_bf16, b_f32))

    ref = reference_forward(x, weights, biases)
    assert out.shape == (BATCH, OUTPUT_SIZE)
    assert out.dtype == jnp.float32
    assert jnp.allclose(out, ref, atol=5e-2, rtol=5e-2), "mismatch vs reference"

    print("KERNEL_OK")
</pallas_src>

<mosaic_0001>
module attributes {stable_mosaic.version = 11 : i64} {
  func.func @_mlp_kernel(%arg0: i32, %arg1: memref<16x32xf32, #tpu.memory_space<vmem>>, %arg2: memref<32x64xbf16, #tpu.memory_space<vmem>>, %arg3: memref<64x128xbf16, #tpu.memory_space<vmem>>, %arg4: memref<128x256xbf16, #tpu.memory_space<vmem>>, %arg5: memref<256x512xbf16, #tpu.memory_space<vmem>>, %arg6: memref<512x1024xbf16, #tpu.memory_space<vmem>>, %arg7: memref<1024x512xbf16, #tpu.memory_space<vmem>>, %arg8: memref<512x256xbf16, #tpu.memory_space<vmem>>, %arg9: memref<256x128xbf16, #tpu.memory_space<vmem>>, %arg10: memref<128x64xbf16, #tpu.memory_space<vmem>>, %arg11: memref<64x128xbf16, #tpu.memory_space<vmem>>, %arg12: memref<1x64xf32, #tpu.memory_space<vmem>>, %arg13: memref<1x128xf32, #tpu.memory_space<vmem>>, %arg14: memref<1x256xf32, #tpu.memory_space<vmem>>, %arg15: memref<1x512xf32, #tpu.memory_space<vmem>>, %arg16: memref<1x1024xf32, #tpu.memory_space<vmem>>, %arg17: memref<1x512xf32, #tpu.memory_space<vmem>>, %arg18: memref<1x256xf32, #tpu.memory_space<vmem>>, %arg19: memref<1x128xf32, #tpu.memory_space<vmem>>, %arg20: memref<1x64xf32, #tpu.memory_space<vmem>>, %arg21: memref<1x128xf32, #tpu.memory_space<vmem>>, %arg22: memref<16x128xf32, #tpu.memory_space<vmem>>) attributes {dimension_semantics = [#tpu.dimension_semantics<parallel>], iteration_bounds = array<i64: 1>, scalar_prefetch = 0 : i64, scratch_operands = 0 : i64, tpu.core_type = #tpu.core_type<tc>, window_params = [{transform_indices = @transform_0, window_bounds = array<i64: 16, 32>}, {pipeline_mode = #tpu.pipeline_mode<synchronous>, transform_indices = @transform_1, window_bounds = array<i64: 32, 64>}, {pipeline_mode = #tpu.pipeline_mode<synchronous>, transform_indices = @transform_2, window_bounds = array<i64: 64, 128>}, {pipeline_mode = #tpu.pipeline_mode<synchronous>, transform_indices = @transform_3, window_bounds = array<i64: 128, 256>}, {pipeline_mode = #tpu.pipeline_mode<synchronous>, transform_indices = @transform_4, window_bounds = array<i64: 256, 512>}, {pipeline_mode = #tpu.pipeline_mode<synchronous>, transform_indices = @transform_5, window_bounds = array<i64: 512, 1024>}, {pipeline_mode = #tpu.pipeline_mode<synchronous>, transform_indices = @transform_6, window_bounds = array<i64: 1024, 512>}, {pipeline_mode = #tpu.pipeline_mode<synchronous>, transform_indices = @transform_7, window_bounds = array<i64: 512, 256>}, {pipeline_mode = #tpu.pipeline_mode<synchronous>, transform_indices = @transform_8, window_bounds = array<i64: 256, 128>}, {pipeline_mode = #tpu.pipeline_mode<synchronous>, transform_indices = @transform_9, window_bounds = array<i64: 128, 64>}, {pipeline_mode = #tpu.pipeline_mode<synchronous>, transform_indices = @transform_10, window_bounds = array<i64: 64, 128>}, {pipeline_mode = #tpu.pipeline_mode<synchronous>, transform_indices = @transform_11, window_bounds = array<i64: 1, 64>}, {pipeline_mode = #tpu.pipeline_mode<synchronous>, transform_indices = @transform_12, window_bounds = array<i64: 1, 128>}, {pipeline_mode = #tpu.pipeline_mode<synchronous>, transform_indices = @transform_13, window_bounds = array<i64: 1, 256>}, {pipeline_mode = #tpu.pipeline_mode<synchronous>, transform_indices = @transform_14, window_bounds = array<i64: 1, 512>}, {pipeline_mode = #tpu.pipeline_mode<synchronous>, transform_indices = @transform_15, window_bounds = array<i64: 1, 1024>}, {pipeline_mode = #tpu.pipeline_mode<synchronous>, transform_indices = @transform_16, window_bounds = array<i64: 1, 512>}, {pipeline_mode = #tpu.pipeline_mode<synchronous>, transform_indices = @transform_17, window_bounds = array<i64: 1, 256>}, {pipeline_mode = #tpu.pipeline_mode<synchronous>, transform_indices = @transform_18, window_bounds = array<i64: 1, 128>}, {pipeline_mode = #tpu.pipeline_mode<synchronous>, transform_indices = @transform_19, window_bounds = array<i64: 1, 64>}, {pipeline_mode = #tpu.pipeline_mode<synchronous>, transform_indices = @transform_20, window_bounds = array<i64: 1, 128>}, {transform_indices = @transform_21, window_bounds = array<i64: 16, 128>}]} {
    %c0 = arith.constant 0 : index
    %c0_0 = arith.constant 0 : index
    %0 = vector.load %arg1[%c0, %c0_0] : memref<16x32xf32, #tpu.memory_space<vmem>>, vector<16x32xf32>
    %1 = arith.truncf %0 : vector<16x32xf32> to vector<16x32xbf16>
    %c0_1 = arith.constant 0 : index
    %c0_2 = arith.constant 0 : index
    %2 = vector.load %arg2[%c0_1, %c0_2] : memref<32x64xbf16, #tpu.memory_space<vmem>>, vector<32x64xbf16>
    %cst = arith.constant dense<0.000000e+00> : vector<16x64xf32>
    %3 = tpu.matmul %1, %2, %cst {dimension_numbers = #tpu.dot_dimension_numbers<[1], [0], [0], [1], [0, 0, 1, 1], [], []>} : vector<16x32xbf16>, vector<32x64xbf16>, vector<16x64xf32> -> vector<16x64xf32>
    %c0_3 = arith.constant 0 : index
    %c0_4 = arith.constant 0 : index
    %4 = vector.load %arg12[%c0_3, %c0_4] : memref<1x64xf32, #tpu.memory_space<vmem>>, vector<1x64xf32>
    %5 = vector.broadcast %4 : vector<1x64xf32> to vector<16x64xf32>
    %6 = arith.addf %3, %5 : vector<16x64xf32>
    %cst_5 = arith.constant 0.000000e+00 : f32
    %7 = vector.broadcast %cst_5 : f32 to vector<16x64xf32>
    %8 = arith.maximumf %6, %7 : vector<16x64xf32>
    %9 = arith.truncf %8 : vector<16x64xf32> to vector<16x64xbf16>
    %c0_6 = arith.constant 0 : index
    %c0_7 = arith.constant 0 : index
    %10 = vector.load %arg3[%c0_6, %c0_7] : memref<64x128xbf16, #tpu.memory_space<vmem>>, vector<64x128xbf16>
    %cst_8 = arith.constant dense<0.000000e+00> : vector<16x128xf32>
    %11 = tpu.matmul %9, %10, %cst_8 {dimension_numbers = #tpu.dot_dimension_numbers<[1], [0], [0], [1], [0, 0, 1, 1], [], []>} : vector<16x64xbf16>, vector<64x128xbf16>, vector<16x128xf32> -> vector<16x128xf32>
    %c0_9 = arith.constant 0 : index
    %c0_10 = arith.constant 0 : index
    %12 = vector.load %arg13[%c0_9, %c0_10] : memref<1x128xf32, #tpu.memory_space<vmem>>, vector<1x128xf32>
    %13 = vector.broadcast %12 : vector<1x128xf32> to vector<16x128xf32>
    %14 = arith.addf %11, %13 : vector<16x128xf32>
    %cst_11 = arith.constant 0.000000e+00 : f32
    %15 = vector.broadcast %cst_11 : f32 to vector<16x128xf32>
    %16 = arith.maximumf %14, %15 : vector<16x128xf32>
    %17 = arith.truncf %16 : vector<16x128xf32> to vector<16x128xbf16>
    %c0_12 = arith.constant 0 : index
    %c0_13 = arith.constant 0 : index
    %18 = vector.load %arg4[%c0_12, %c0_13] : memref<128x256xbf16, #tpu.memory_space<vmem>>, vector<128x256xbf16>
    %cst_14 = arith.constant dense<0.000000e+00> : vector<16x256xf32>
    %19 = tpu.matmul %17, %18, %cst_14 {dimension_numbers = #tpu.dot_dimension_numbers<[1], [0], [0], [1], [0, 0, 1, 1], [], []>} : vector<16x128xbf16>, vector<128x256xbf16>, vector<16x256xf32> -> vector<16x256xf32>
    %c0_15 = arith.constant 0 : index
    %c0_16 = arith.constant 0 : index
    %20 = vector.load %arg14[%c0_15, %c0_16] : memref<1x256xf32, #tpu.memory_space<vmem>>, vector<1x256xf32>
    %21 = vector.broadcast %20 : vector<1x256xf32> to vector<16x256xf32>
    %22 = arith.addf %19, %21 : vector<16x256xf32>
    %cst_17 = arith.constant 0.000000e+00 : f32
    %23 = vector.broadcast %cst_17 : f32 to vector<16x256xf32>
    %24 = arith.maximumf %22, %23 : vector<16x256xf32>
    %25 = arith.truncf %24 : vector<16x256xf32> to vector<16x256xbf16>
    %c0_18 = arith.constant 0 : index
    %c0_19 = arith.constant 0 : index
    %26 = vector.load %arg5[%c0_18, %c0_19] : memref<256x512xbf16, #tpu.memory_space<vmem>>, vector<256x512xbf16>
    %cst_20 = arith.constant dense<0.000000e+00> : vector<16x512xf32>
    %27 = tpu.matmul %25, %26, %cst_20 {dimension_numbers = #tpu.dot_dimension_numbers<[1], [0], [0], [1], [0, 0, 1, 1], [], []>} : vector<16x256xbf16>, vector<256x512xbf16>, vector<16x512xf32> -> vector<16x512xf32>
    %c0_21 = arith.constant 0 : index
    %c0_22 = arith.constant 0 : index
    %28 = vector.load %arg15[%c0_21, %c0_22] : memref<1x512xf32, #tpu.memory_space<vmem>>, vector<1x512xf32>
    %29 = vector.broadcast %28 : vector<1x512xf32> to vector<16x512xf32>
    %30 = arith.addf %27, %29 : vector<16x512xf32>
    %cst_23 = arith.constant 0.000000e+00 : f32
    %31 = vector.broadcast %cst_23 : f32 to vector<16x512xf32>
    %32 = arith.maximumf %30, %31 : vector<16x512xf32>
    %33 = arith.truncf %32 : vector<16x512xf32> to vector<16x512xbf16>
    %c0_24 = arith.constant 0 : index
    %c0_25 = arith.constant 0 : index
    %34 = vector.load %arg6[%c0_24, %c0_25] : memref<512x1024xbf16, #tpu.memory_space<vmem>>, vector<512x1024xbf16>
    %cst_26 = arith.constant dense<0.000000e+00> : vector<16x1024xf32>
    %35 = tpu.matmul %33, %34, %cst_26 {dimension_numbers = #tpu.dot_dimension_numbers<[1], [0], [0], [1], [0, 0, 1, 1], [], []>} : vector<16x512xbf16>, vector<512x1024xbf16>, vector<16x1024xf32> -> vector<16x1024xf32>
    %c0_27 = arith.constant 0 : index
    %c0_28 = arith.constant 0 : index
    %36 = vector.load %arg16[%c0_27, %c0_28] : memref<1x1024xf32, #tpu.memory_space<vmem>>, vector<1x1024xf32>
    %37 = vector.broadcast %36 : vector<1x1024xf32> to vector<16x1024xf32>
    %38 = arith.addf %35, %37 : vector<16x1024xf32>
    %cst_29 = arith.constant 0.000000e+00 : f32
    %39 = vector.broadcast %cst_29 : f32 to vector<16x1024xf32>
    %40 = arith.maximumf %38, %39 : vector<16x1024xf32>
    %41 = arith.truncf %40 : vector<16x1024xf32> to vector<16x1024xbf16>
    %c0_30 = arith.constant 0 : index
    %c0_31 = arith.constant 0 : index
    %42 = vector.load %arg7[%c0_30, %c0_31] : memref<1024x512xbf16, #tpu.memory_space<vmem>>, vector<1024x512xbf16>
    %cst_32 = arith.constant dense<0.000000e+00> : vector<16x512xf32>
    %43 = tpu.matmul %41, %42, %cst_32 {dimension_numbers = #tpu.dot_dimension_numbers<[1], [0], [0], [1], [0, 0, 1, 1], [], []>} : vector<16x1024xbf16>, vector<1024x512xbf16>, vector<16x512xf32> -> vector<16x512xf32>
    %c0_33 = arith.constant 0 : index
    %c0_34 = arith.constant 0 : index
    %44 = vector.load %arg17[%c0_33, %c0_34] : memref<1x512xf32, #tpu.memory_space<vmem>>, vector<1x512xf32>
    %45 = vector.broadcast %44 : vector<1x512xf32> to vector<16x512xf32>
    %46 = arith.addf %43, %45 : vector<16x512xf32>
    %cst_35 = arith.constant 0.000000e+00 : f32
    %47 = vector.broadcast %cst_35 : f32 to vector<16x512xf32>
    %48 = arith.maximumf %46, %47 : vector<16x512xf32>
    %49 = arith.truncf %48 : vector<16x512xf32> to vector<16x512xbf16>
    %c0_36 = arith.constant 0 : index
    %c0_37 = arith.constant 0 : index
    %50 = vector.load %arg8[%c0_36, %c0_37] : memref<512x256xbf16, #tpu.memory_space<vmem>>, vector<512x256xbf16>
    %cst_38 = arith.constant dense<0.000000e+00> : vector<16x256xf32>
    %51 = tpu.matmul %49, %50, %cst_38 {dimension_numbers = #tpu.dot_dimension_numbers<[1], [0], [0], [1], [0, 0, 1, 1], [], []>} : vector<16x512xbf16>, vector<512x256xbf16>, vector<16x256xf32> -> vector<16x256xf32>
    %c0_39 = arith.constant 0 : index
    %c0_40 = arith.constant 0 : index
    %52 = vector.load %arg18[%c0_39, %c0_40] : memref<1x256xf32, #tpu.memory_space<vmem>>, vector<1x256xf32>
    %53 = vector.broadcast %52 : vector<1x256xf32> to vector<16x256xf32>
    %54 = arith.addf %51, %53 : vector<16x256xf32>
    %cst_41 = arith.constant 0.000000e+00 : f32
    %55 = vector.broadcast %cst_41 : f32 to vector<16x256xf32>
    %56 = arith.maximumf %54, %55 : vector<16x256xf32>
    %57 = arith.truncf %56 : vector<16x256xf32> to vector<16x256xbf16>
    %c0_42 = arith.constant 0 : index
    %c0_43 = arith.constant 0 : index
    %58 = vector.load %arg9[%c0_42, %c0_43] : memref<256x128xbf16, #tpu.memory_space<vmem>>, vector<256x128xbf16>
    %cst_44 = arith.constant dense<0.000000e+00> : vector<16x128xf32>
    %59 = tpu.matmul %57, %58, %cst_44 {dimension_numbers = #tpu.dot_dimension_numbers<[1], [0], [0], [1], [0, 0, 1, 1], [], []>} : vector<16x256xbf16>, vector<256x128xbf16>, vector<16x128xf32> -> vector<16x128xf32>
    %c0_45 = arith.constant 0 : index
    %c0_46 = arith.constant 0 : index
    %60 = vector.load %arg19[%c0_45, %c0_46] : memref<1x128xf32, #tpu.memory_space<vmem>>, vector<1x128xf32>
    %61 = vector.broadcast %60 : vector<1x128xf32> to vector<16x128xf32>
    %62 = arith.addf %59, %61 : vector<16x128xf32>
    %cst_47 = arith.constant 0.000000e+00 : f32
    %63 = vector.broadcast %cst_47 : f32 to vector<16x128xf32>
    %64 = arith.maximumf %62, %63 : vector<16x128xf32>
    %65 = arith.truncf %64 : vector<16x128xf32> to vector<16x128xbf16>
    %c0_48 = arith.constant 0 : index
    %c0_49 = arith.constant 0 : index
    %66 = vector.load %arg10[%c0_48, %c0_49] : memref<128x64xbf16, #tpu.memory_space<vmem>>, vector<128x64xbf16>
    %cst_50 = arith.constant dense<0.000000e+00> : vector<16x64xf32>
    %67 = tpu.matmul %65, %66, %cst_50 {dimension_numbers = #tpu.dot_dimension_numbers<[1], [0], [0], [1], [0, 0, 1, 1], [], []>} : vector<16x128xbf16>, vector<128x64xbf16>, vector<16x64xf32> -> vector<16x64xf32>
    %c0_51 = arith.constant 0 : index
    %c0_52 = arith.constant 0 : index
    %68 = vector.load %arg20[%c0_51, %c0_52] : memref<1x64xf32, #tpu.memory_space<vmem>>, vector<1x64xf32>
    %69 = vector.broadcast %68 : vector<1x64xf32> to vector<16x64xf32>
    %70 = arith.addf %67, %69 : vector<16x64xf32>
    %cst_53 = arith.constant 0.000000e+00 : f32
    %71 = vector.broadcast %cst_53 : f32 to vector<16x64xf32>
    %72 = arith.maximumf %70, %71 : vector<16x64xf32>
    %73 = arith.truncf %72 : vector<16x64xf32> to vector<16x64xbf16>
    %c0_54 = arith.constant 0 : index
    %c0_55 = arith.constant 0 : index
    %74 = vector.load %arg11[%c0_54, %c0_55] : memref<64x128xbf16, #tpu.memory_space<vmem>>, vector<64x128xbf16>
    %cst_56 = arith.constant dense<0.000000e+00> : vector<16x128xf32>
    %75 = tpu.matmul %73, %74, %cst_56 {dimension_numbers = #tpu.dot_dimension_numbers<[1], [0], [0], [1], [0, 0, 1, 1], [], []>} : vector<16x64xbf16>, vector<64x128xbf16>, vector<16x128xf32> -> vector<16x128xf32>
    %c0_57 = arith.constant 0 : index
    %c0_58 = arith.constant 0 : index
    %76 = vector.load %arg21[%c0_57, %c0_58] : memref<1x128xf32, #tpu.memory_space<vmem>>, vector<1x128xf32>
    %77 = vector.broadcast %76 : vector<1x128xf32> to vector<16x128xf32>
    %78 = arith.addf %75, %77 : vector<16x128xf32>
    %c0_59 = arith.constant 0 : index
    %c0_60 = arith.constant 0 : index
    %79 = vector.load %arg22[%c0_59, %c0_60] : memref<16x128xf32, #tpu.memory_space<vmem>>, vector<16x128xf32>
    tpu.vector_store %arg22[%c0_59, %c0_60], %78 {strides = array<i32>} : memref<16x128xf32, #tpu.memory_space<vmem>>, vector<16x128xf32>,
    return
  }
  func.func @transform_0(%arg0: i32) -> (i32, i32) {
    %c0_i32 = arith.constant 0 : i32
    %c0_i32_0 = arith.constant 0 : i32
    return %arg0, %c0_i32 : i32, i32
  }
  func.func @transform_1(%arg0: i32) -> (i32, i32) {
    %c0_i32 = arith.constant 0 : i32
    %c0_i32_0 = arith.constant 0 : i32
    %c0_i32_1 = arith.constant 0 : i32
    return %c0_i32, %c0_i32_0 : i32, i32
  }
  func.func @transform_2(%arg0: i32) -> (i32, i32) {
    %c0_i32 = arith.constant 0 : i32
    %c0_i32_0 = arith.constant 0 : i32
    %c0_i32_1 = arith.constant 0 : i32
    return %c0_i32, %c0_i32_0 : i32, i32
  }
  func.func @transform_3(%arg0: i32) -> (i32, i32) {
    %c0_i32 = arith.constant 0 : i32
    %c0_i32_0 = arith.constant 0 : i32
    %c0_i32_1 = arith.constant 0 : i32
    return %c0_i32, %c0_i32_0 : i32, i32
  }
  func.func @transform_4(%arg0: i32) -> (i32, i32) {
    %c0_i32 = arith.constant 0 : i32
    %c0_i32_0 = arith.constant 0 : i32
    %c0_i32_1 = arith.constant 0 : i32
    return %c0_i32, %c0_i32_0 : i32, i32
  }
  func.func @transform_5(%arg0: i32) -> (i32, i32) {
    %c0_i32 = arith.constant 0 : i32
    %c0_i32_0 = arith.constant 0 : i32
    %c0_i32_1 = arith.constant 0 : i32
    return %c0_i32, %c0_i32_0 : i32, i32
  }
  func.func @transform_6(%arg0: i32) -> (i32, i32) {
    %c0_i32 = arith.constant 0 : i32
    %c0_i32_0 = arith.constant 0 : i32
    %c0_i32_1 = arith.constant 0 : i32
    return %c0_i32, %c0_i32_0 : i32, i32
  }
  func.func @transform_7(%arg0: i32) -> (i32, i32) {
    %c0_i32 = arith.constant 0 : i32
    %c0_i32_0 = arith.constant 0 : i32
    %c0_i32_1 = arith.constant 0 : i32
    return %c0_i32, %c0_i32_0 : i32, i32
  }
  func.func @transform_8(%arg0: i32) -> (i32, i32) {
    %c0_i32 = arith.constant 0 : i32
    %c0_i32_0 = arith.constant 0 : i32
    %c0_i32_1 = arith.constant 0 : i32
    return %c0_i32, %c0_i32_0 : i32, i32
  }
  func.func @transform_9(%arg0: i32) -> (i32, i32) {
    %c0_i32 = arith.constant 0 : i32
    %c0_i32_0 = arith.constant 0 : i32
    %c0_i32_1 = arith.constant 0 : i32
    return %c0_i32, %c0_i32_0 : i32, i32
  }
  func.func @transform_10(%arg0: i32) -> (i32, i32) {
    %c0_i32 = arith.constant 0 : i32
    %c0_i32_0 = arith.constant 0 : i32
    %c0_i32_1 = arith.constant 0 : i32
    return %c0_i32, %c0_i32_0 : i32, i32
  }
  func.func @transform_11(%arg0: i32) -> (i32, i32) {
    %c0_i32 = arith.constant 0 : i32
    %c0_i32_0 = arith.constant 0 : i32
    %c0_i32_1 = arith.constant 0 : i32
    return %c0_i32, %c0_i32_0 : i32, i32
  }
  func.func @transform_12(%arg0: i32) -> (i32, i32) {
    %c0_i32 = arith.constant 0 : i32
    %c0_i32_0 = arith.constant 0 : i32
    %c0_i32_1 = arith.constant 0 : i32
    return %c0_i32, %c0_i32_0 : i32, i32
  }
  func.func @transform_13(%arg0: i32) -> (i32, i32) {
    %c0_i32 = arith.constant 0 : i32
    %c0_i32_0 = arith.constant 0 : i32
    %c0_i32_1 = arith.constant 0 : i32
    return %c0_i32, %c0_i32_0 : i32, i32
  }
  func.func @transform_14(%arg0: i32) -> (i32, i32) {
    %c0_i32 = arith.constant 0 : i32
    %c0_i32_0 = arith.constant 0 : i32
    %c0_i32_1 = arith.constant 0 : i32
    return %c0_i32, %c0_i32_0 : i32, i32
  }
  func.func @transform_15(%arg0: i32) -> (i32, i32) {
    %c0_i32 = arith.constant 0 : i32
    %c0_i32_0 = arith.constant 0 : i32
    %c0_i32_1 = arith.constant 0 : i32
    return %c0_i32, %c0_i32_0 : i32, i32
  }
  func.func @transform_16(%arg0: i32) -> (i32, i32) {
    %c0_i32 = arith.constant 0 : i32
    %c0_i32_0 = arith.constant 0 : i32
    %c0_i32_1 = arith.constant 0 : i32
    return %c0_i32, %c0_i32_0 : i32, i32
  }
  func.func @transform_17(%arg0: i32) -> (i32, i32) {
    %c0_i32 = arith.constant 0 : i32
    %c0_i32_0 = arith.constant 0 : i32
    %c0_i32_1 = arith.constant 0 : i32
    return %c0_i32, %c0_i32_0 : i32, i32
  }
  func.func @transform_18(%arg0: i32) -> (i32, i32) {
    %c0_i32 = arith.constant 0 : i32
    %c0_i32_0 = arith.constant 0 : i32
    %c0_i32_1 = arith.constant 0 : i32
    return %c0_i32, %c0_i32_0 : i32, i32
  }
  func.func @transform_19(%arg0: i32) -> (i32, i32) {
    %c0_i32 = arith.constant 0 : i32
    %c0_i32_0 = arith.constant 0 : i32
    %c0_i32_1 = arith.constant 0 : i32
    return %c0_i32, %c0_i32_0 : i32, i32
  }
  func.func @transform_20(%arg0: i32) -> (i32, i32) {
    %c0_i32 = arith.constant 0 : i32
    %c0_i32_0 = arith.constant 0 : i32
    %c0_i32_1 = arith.constant 0 : i32
    return %c0_i32, %c0_i32_0 : i32, i32
  }
  func.func @transform_21(%arg0: i32) -> (i32, i32) {
    %c0_i32 = arith.constant 0 : i32
    %c0_i32_0 = arith.constant 0 : i32
    return %arg0, %c0_i32 : i32, i32
  }
}

</mosaic_0001>

<llo_original>
// kernel: generator_forward.1
$region0: #{generator_forward.1}
  #allocation0 [shape = 'u32[]', space=smem, size = 0x4, offset = 0x4, fixed_abs, tag = 'smem constant byte address 0x4 - core index']
  #allocation1 [shape = 'u32[72,128]{1,0:T(1,128)}', space=vmem, size = 0x9000, scoped, tag = 'internal scratch']
  %s0 = inlined_call_operand.vmem [shape: f32[16,32], index: 0, kind: input, shape index: {}]
  %s1 = inlined_call_operand.hbm [shape: bf16[32,64], index: 1, kind: input, shape index: {}]
  %s2 = inlined_call_operand.hbm [shape: bf16[64,128], index: 2, kind: input, shape index: {}]
  %s3 = inlined_call_operand.hbm [shape: bf16[128,256], index: 3, kind: input, shape index: {}]
  %s4 = inlined_call_operand.hbm [shape: bf16[256,512], index: 4, kind: input, shape index: {}]
  %s5 = inlined_call_operand.hbm [shape: bf16[512,1024], index: 5, kind: input, shape index: {}]
  %s6 = inlined_call_operand.hbm [shape: bf16[1024,512], index: 6, kind: input, shape index: {}]
  %s7 = inlined_call_operand.hbm [shape: bf16[512,256], index: 7, kind: input, shape index: {}]
  %s8 = inlined_call_operand.vmem [shape: bf16[256,128], index: 8, kind: input, shape index: {}]
  %s9 = inlined_call_operand.vmem [shape: bf16[128,64], index: 9, kind: input, shape index: {}]
  %s10 = inlined_call_operand.hbm [shape: bf16[64,128], index: 10, kind: input, shape index: {}]
  %s11 = inlined_call_operand.hbm [shape: f32[1,64], index: 11, kind: input, shape index: {}]
  %s12 = inlined_call_operand.hbm [shape: f32[1,128], index: 12, kind: input, shape index: {}]
  %s13 = inlined_call_operand.hbm [shape: f32[1,256], index: 13, kind: input, shape index: {}]
  %s14 = inlined_call_operand.vmem [shape: f32[1,512], index: 14, kind: input, shape index: {}]
  %s15 = inlined_call_operand.hbm [shape: f32[1,1024], index: 15, kind: input, shape index: {}]
  %s16 = inlined_call_operand.vmem [shape: f32[1,512], index: 16, kind: input, shape index: {}]
  %s17 = inlined_call_operand.hbm [shape: f32[1,256], index: 17, kind: input, shape index: {}]
  %s18 = inlined_call_operand.vmem [shape: f32[1,128], index: 18, kind: input, shape index: {}]
  %s19 = inlined_call_operand.vmem [shape: f32[1,64], index: 19, kind: input, shape index: {}]
  %s20 = inlined_call_operand.vmem [shape: f32[1,128], index: 20, kind: input, shape index: {}]
  %s21 = inlined_call_operand.vmem [shape: f32[16,128], index: 21, kind: output, shape index: {}]
  %s22 = sld [smem:[#allocation0]]
  $region146: #{generator_forward.1} parent=0
    _
  %s24 = ssub.s32 1, %s22
  %s25 = scalar_select 0, %s24, %s22
  $region1: #{generator_forward.1} parent=0
    #allocation2 [shape = 'u8[8192]{0}', space=vmem, size = 0x2000, scoped, tag = 'input window, operand 1, single buffered']
    #allocation3 [shape = 's32[1]{0}', space=sflag, size = 0x4, scoped, tag = 'scoped memory for generator_forward.1']
    #allocation4 [shape = 'u8[16384]{0}', space=vmem, size = 0x4000, scoped, tag = 'input window, operand 2, single buffered']
    #allocation5 [shape = 's32[1]{0}', space=sflag, size = 0x4, scoped, tag = 'scoped memory for generator_forward.1']
    #allocation6 [shape = 'u8[65536]{0}', space=vmem, size = 0x10000, scoped, tag = 'input window, operand 3, single buffered']
    #allocation7 [shape = 'u8[262144]{0}', space=vmem, size = 0x40000, scoped, tag = 'input window, operand 4, single buffered']
    #allocation8 [shape = 's32[1]{0}', space=sflag, size = 0x4, scoped, tag = 'scoped memory for generator_forward.1']
    #allocation9 [shape = 'u8[1048576]{0}', space=vmem, size = 0x100000, scoped, tag = 'input window, operand 5, single buffered']
    #allocation10 [shape = 'u8[1048576]{0}', space=vmem, size = 0x100000, scoped, tag = 'input window, operand 6, single buffered']
    #allocation11 [shape = 's32[1]{0}', space=sflag, size = 0x4, scoped, tag = 'scoped memory for generator_forward.1']
    #allocation12 [shape = 'u8[262144]{0}', space=vmem, size = 0x40000, scoped, tag = 'input window, operand 7, single buffered']
    #allocation13 [shape = 'u8[16384]{0}', space=vmem, size = 0x4000, scoped, tag = 'input window, operand 10, single buffered']
    #allocation14 [shape = 's32[1]{0}', space=sflag, size = 0x4, scoped, tag = 'scoped memory for generator_forward.1']
    #allocation15 [shape = 'u8[512]{0}', space=vmem, size = 0x400, scoped, tag = 'input window, operand 11, single buffered']
    #allocation16 [shape = 'u8[512]{0}', space=vmem, size = 0x400, scoped, tag = 'input window, operand 12, single buffered']
    #allocation17 [shape = 's32[1]{0}', space=sflag, size = 0x4, scoped, tag = 'scoped memory for generator_forward.1']
    #allocation18 [shape = 'u8[1024]{0}', space=vmem, size = 0x400, scoped, tag = 'input window, operand 13, single buffered']
    #allocation19 [shape = 'u8[4096]{0}', space=vmem, size = 0x1000, scoped, tag = 'input window, operand 15, single buffered']
    #allocation20 [shape = 's32[1]{0}', space=sflag, size = 0x4, scoped, tag = 'scoped memory for generator_forward.1']
    #allocation21 [shape = 'u8[1024]{0}', space=vmem, size = 0x400, scoped, tag = 'input window, operand 17, single buffered']
    %26 = vsyncpa [#allocation3], 0
    %27 = vsyncpa [#allocation5], 0
    %28 = vsyncpa [#allocation8], 0
    %29 = vsyncpa [#allocation11], 0
    %30 = vsyncpa [#allocation14], 0
    %31 = vsyncpa [#allocation17], 0
    %32 = vsyncpa [#allocation20], 0
    // Predicated region
    $region2: #{generator_forward.1} parent=1 // pred_check
      _
    $region3: #{generator_forward.1} parent=1 // pred_check_branch
      %34 = sbr.rel (0) target = $region5
    $region4: #{generator_forward.1} parent=1 // pred_region
      _
    $region5: #{generator_forward.1} parent=1 // pred_fallthru
      _
    // Predicated region
    $region6: #{generator_forward.1} parent=1 // pred_check
      _
    $region7: #{generator_forward.1} parent=1 // pred_check_branch
      %36 = sbr.rel (0) target = $region9
    $region8: #{generator_forward.1} parent=1 // pred_region
      %38 = vsyncadd [#allocation3], 0
      %s39 = sshll.u32 %s1, 4
      %s40 = int_to_ptr.hbm [resolvable:$true] %s39
      %s41 = sshll.u32 [#allocation2], 4
      %s42 = int_to_ptr.vmem [resolvable:$true] %s41
      %47 = dma.hbm_to_vmem [thread:$0]  %s40, 256, %s42, [#allocation3], 64, 64, 4
    $region9: #{generator_forward.1} parent=1 // pred_fallthru
      _
    // Predicated region
    $region10: #{generator_forward.1} parent=1 // pred_check
      _
    $region11: #{generator_forward.1} parent=1 // pred_check_branch
      %49 = sbr.rel (0) target = $region13
    $region12: #{generator_forward.1} parent=1 // pred_region
      %51 = vsyncadd [#allocation5], 0
      %s52 = sshll.u32 %s2, 4
      %s53 = int_to_ptr.hbm [resolvable:$true] %s52
      %s54 = sshll.u32 [#allocation4], 4
      %s55 = int_to_ptr.vmem [resolvable:$true] %s54
      %60 = dma.hbm_to_vmem [thread:$0]  %s53, 512, %s55, [#allocation5], 64, 64, 4
    $region13: #{generator_forward.1} parent=1 // pred_fallthru
      _
    // Predicated region
    $region14: #{generator_forward.1} parent=1 // pred_check
      _
    $region15: #{generator_forward.1} parent=1 // pred_check_branch
      %62 = sbr.rel (0) target = $region17
    $region16: #{generator_forward.1} parent=1 // pred_region
      %64 = vsyncadd [#allocation5], 0
      %s65 = sshll.u32 %s3, 4
      %s66 = int_to_ptr.hbm [resolvable:$true] %s65
      %s67 = sshll.u32 [#allocation6], 4
      %s68 = int_to_ptr.vmem [resolvable:$true] %s67
      %73 = dma.hbm_to_vmem [thread:$0]  %s66, 2048, %s68, [#allocation5], 128, 128, 8
    $region17: #{generator_forward.1} parent=1 // pred_fallthru
      _
    // Predicated region
    $region18: #{generator_forward.1} parent=1 // pred_check
      _
    $region19: #{generator_forward.1} parent=1 // pred_check_branch
      %75 = sbr.rel (0) target = $region21
    $region20: #{generator_forward.1} parent=1 // pred_region
      %77 = vsyncadd [#allocation8], 0
      %s78 = sshll.u32 %s4, 4
      %s79 = int_to_ptr.hbm [resolvable:$true] %s78
      %s80 = sshll.u32 [#allocation7], 4
      %s81 = int_to_ptr.vmem [resolvable:$true] %s80
      %86 = dma.hbm_to_vmem [thread:$0]  %s79, 8192, %s81, [#allocation8], 256, 256, 16
    $region21: #{generator_forward.1} parent=1 // pred_fallthru
      _
    // Predicated region
    $region22: #{generator_forward.1} parent=1 // pred_check
      _
    $region23: #{generator_forward.1} parent=1 // pred_check_branch
      %88 = sbr.rel (0) target = $region25
    $region24: #{generator_forward.1} parent=1 // pred_region
      %90 = vsyncadd [#allocation8], 0
      %s91 = sshll.u32 %s5, 4
      %s92 = int_to_ptr.hbm [resolvable:$true] %s91
      %s93 = sshll.u32 [#allocation9], 4
      %s94 = int_to_ptr.vmem [resolvable:$true] %s93
      %99 = dma.hbm_to_vmem [thread:$0]  %s92, 32768, %s94, [#allocation8], 512, 512, 32
    $region25: #{generator_forward.1} parent=1 // pred_fallthru
      _
    // Predicated region
    $region26: #{generator_forward.1} parent=1 // pred_check
      _
    $region27: #{generator_forward.1} parent=1 // pred_check_branch
      %101 = sbr.rel (0) target = $region29
    $region28: #{generator_forward.1} parent=1 // pred_region
      %103 = vsyncadd [#allocation11], 0
      %s104 = sshll.u32 %s6, 4
      %s105 = int_to_ptr.hbm [resolvable:$true] %s104
      %s106 = sshll.u32 [#allocation10], 4
      %s107 = int_to_ptr.vmem [resolvable:$true] %s106
      %112 = dma.hbm_to_vmem [thread:$0]  %s105, 32768, %s107, [#allocation11], 256, 256, 16
    $region29: #{generator_forward.1} parent=1 // pred_fallthru
      _
    // Predicated region
    $region30: #{generator_forward.1} parent=1 // pred_check
      _
    $region31: #{generator_forward.1} parent=1 // pred_check_branch
      %114 = sbr.rel (0) target = $region33
    $region32: #{generator_forward.1} parent=1 // pred_region
      %116 = vsyncadd [#allocation11], 0
      %s117 = sshll.u32 %s7, 4
      %s118 = int_to_ptr.hbm [resolvable:$true] %s117
      %s119 = sshll.u32 [#allocation12], 4
      %s120 = int_to_ptr.vmem [resolvable:$true] %s119
      %125 = dma.hbm_to_vmem [thread:$0]  %s118, 8192, %s120, [#allocation11], 128, 128, 8
    $region33: #{generator_forward.1} parent=1 // pred_fallthru
      _
    // Predicated region
    $region34: #{generator_forward.1} parent=1 // pred_check
      _
    $region35: #{generator_forward.1} parent=1 // pred_check_branch
      %127 = sbr.rel (0) target = $region37
    $region36: #{generator_forward.1} parent=1 // pred_region
      _
    $region37: #{generator_forward.1} parent=1 // pred_fallthru
      _
    // Predicated region
    $region38: #{generator_forward.1} parent=1 // pred_check
      _
    $region39: #{generator_forward.1} parent=1 // pred_check_branch
      %129 = sbr.rel (0) target = $region41
    $region40: #{generator_forward.1} parent=1 // pred_region
      _
    $region41: #{generator_forward.1} parent=1 // pred_fallthru
      _
    // Predicated region
    $region42: #{generator_forward.1} parent=1 // pred_check
      _
    $region43: #{generator_forward.1} parent=1 // pred_check_branch
      %131 = sbr.rel (0) target = $region45
    $region44: #{generator_forward.1} parent=1 // pred_region
      %133 = vsyncadd [#allocation14], 0
      %s134 = sshll.u32 %s10, 4
      %s135 = int_to_ptr.hbm [resolvable:$true] %s134
      %s136 = sshll.u32 [#allocation13], 4
      %s137 = int_to_ptr.vmem [resolvable:$true] %s136
      %142 = dma.hbm_to_vmem [thread:$0]  %s135, 512, %s137, [#allocation14], 64, 64, 4
    $region45: #{generator_forward.1} parent=1 // pred_fallthru
      _
    // Predicated region
    $region46: #{generator_forward.1} parent=1 // pred_check
      _
    $region47: #{generator_forward.1} parent=1 // pred_check_branch
      %144 = sbr.rel (0) target = $region49
    $region48: #{generator_forward.1} parent=1 // pred_region
      %146 = vsyncadd [#allocation14], 0
      %s148 = sshll.u32 %s11, 4
      %s149 = int_to_ptr.hbm [resolvable:$true] %s148
      %s150 = sshll.u32 [#allocation15], 4
      %s151 = int_to_ptr.vmem [resolvable:$true] %s150
      %153 = dma.hbm_to_vmem [thread:$0]  %s149, 16, %s151, [#allocation14]
    $region49: #{generator_forward.1} parent=1 // pred_fallthru
      _
    // Predicated region
    $region50: #{generator_forward.1} parent=1 // pred_check
      _
    $region51: #{generator_forward.1} parent=1 // pred_check_branch
      %155 = sbr.rel (0) target = $region53
    $region52: #{generator_forward.1} parent=1 // pred_region
      %157 = vsyncadd [#allocation17], 0
      %s159 = sshll.u32 %s12, 4
      %s160 = int_to_ptr.hbm [resolvable:$true] %s159
      %s161 = sshll.u32 [#allocation16], 4
      %s162 = int_to_ptr.vmem [resolvable:$true] %s161
      %164 = dma.hbm_to_vmem [thread:$0]  %s160, 16, %s162, [#allocation17]
    $region53: #{generator_forward.1} parent=1 // pred_fallthru
      _
    // Predicated region
    $region54: #{generator_forward.1} parent=1 // pred_check
      _
    $region55: #{generator_forward.1} parent=1 // pred_check_branch
      %166 = sbr.rel (0) target = $region57
    $region56: #{generator_forward.1} parent=1 // pred_region
      %168 = vsyncadd [#allocation17], 0
      %s170 = sshll.u32 %s13, 4
      %s171 = int_to_ptr.hbm [resolvable:$true] %s170
      %s172 = sshll.u32 [#allocation18], 4
      %s173 = int_to_ptr.vmem [resolvable:$true] %s172
      %175 = dma.hbm_to_vmem [thread:$0]  %s171, 32, %s173, [#allocation17]
    $region57: #{generator_forward.1} parent=1 // pred_fallthru
      _
    // Predicated region
    $region58: #{generator_forward.1} parent=1 // pred_check
      _
    $region59: #{generator_forward.1} parent=1 // pred_check_branch
      %177 = sbr.rel (0) target = $region61
    $region60: #{generator_forward.1} parent=1 // pred_region
      _
    $region61: #{generator_forward.1} parent=1 // pred_fallthru
      _
    // Predicated region
    $region62: #{generator_forward.1} parent=1 // pred_check
      _
    $region63: #{generator_forward.1} parent=1 // pred_check_branch
      %179 = sbr.rel (0) target = $region65
    $region64: #{generator_forward.1} parent=1 // pred_region
      %181 = vsyncadd [#allocation20], 0
      %s183 = sshll.u32 %s15, 4
      %s184 = int_to_ptr.hbm [resolvable:$true] %s183
      %s185 = sshll.u32 [#allocation19], 4
      %s186 = int_to_ptr.vmem [resolvable:$true] %s185
      %188 = dma.hbm_to_vmem [thread:$0]  %s184, 128, %s186, [#allocation20]
    $region65: #{generator_forward.1} parent=1 // pred_fallthru
      _
    // Predicated region
    $region66: #{generator_forward.1} parent=1 // pred_check
      _
    $region67: #{generator_forward.1} parent=1 // pred_check_branch
      %190 = sbr.rel (0) target = $region69
    $region68: #{generator_forward.1} parent=1 // pred_region
      _
    $region69: #{generator_forward.1} parent=1 // pred_fallthru
      _
    // Predicated region
    $region70: #{generator_forward.1} parent=1 // pred_check
      _
    $region71: #{generator_forward.1} parent=1 // pred_check_branch
      %192 = sbr.rel (0) target = $region73
    $region72: #{generator_forward.1} parent=1 // pred_region
      %194 = vsyncadd [#allocation20], 0
      %s196 = sshll.u32 %s17, 4
      %s197 = int_to_ptr.hbm [resolvable:$true] %s196
      %s198 = sshll.u32 [#allocation21], 4
      %s199 = int_to_ptr.vmem [resolvable:$true] %s198
      %201 = dma.hbm_to_vmem [thread:$0]  %s197, 32, %s199, [#allocation20]
    $region73: #{generator_forward.1} parent=1 // pred_fallthru
      _
    // Predicated region
    $region74: #{generator_forward.1} parent=1 // pred_check
      _
    $region75: #{generator_forward.1} parent=1 // pred_check_branch
      %203 = sbr.rel (0) target = $region77
    $region76: #{generator_forward.1} parent=1 // pred_region
      _
    $region77: #{generator_forward.1} parent=1 // pred_fallthru
      _
    // Predicated region
    $region78: #{generator_forward.1} parent=1 // pred_check
      _
    $region79: #{generator_forward.1} parent=1 // pred_check_branch
      %205 = sbr.rel (0) target = $region81
    $region80: #{generator_forward.1} parent=1 // pred_region
      _
    $region81: #{generator_forward.1} parent=1 // pred_fallthru
      _
    // Predicated region
    $region82: #{generator_forward.1} parent=1 // pred_check
      _
    $region83: #{generator_forward.1} parent=1 // pred_check_branch
      %207 = sbr.rel (0) target = $region85
    $region84: #{generator_forward.1} parent=1 // pred_region
      _
    $region85: #{generator_forward.1} parent=1 // pred_fallthru
      _
    // Predicated region
    $region86: #{generator_forward.1} parent=1 // pred_check
      _
    $region87: #{generator_forward.1} parent=1 // pred_check_branch
      %209 = sbr.rel (0) target = $region89
    $region88: #{generator_forward.1} parent=1 // pred_region
      %211 = dma.done [#allocation3], 256
    $region89: #{generator_forward.1} parent=1 // pred_fallthru
      _
    // Predicated region
    $region90: #{generator_forward.1} parent=1 // pred_check
      _
    $region91: #{generator_forward.1} parent=1 // pred_check_branch
      %213 = sbr.rel (0) target = $region93
    $region92: #{generator_forward.1} parent=1 // pred_region
      %215 = dma.done [#allocation5], 512
    $region93: #{generator_forward.1} parent=1 // pred_fallthru
      _
    // Predicated region
    $region94: #{generator_forward.1} parent=1 // pred_check
      _
    $region95: #{generator_forward.1} parent=1 // pred_check_branch
      %217 = sbr.rel (0) target = $region97
    $region96: #{generator_forward.1} parent=1 // pred_region
      %219 = dma.done [#allocation5], 2048
    $region97: #{generator_forward.1} parent=1 // pred_fallthru
      _
    // Predicated region
    $region98: #{generator_forward.1} parent=1 // pred_check
      _
    $region99: #{generator_forward.1} parent=1 // pred_check_branch
      %221 = sbr.rel (0) target = $region101
    $region100: #{generator_forward.1} parent=1 // pred_region
      %223 = dma.done [#allocation8], 8192
    $region101: #{generator_forward.1} parent=1 // pred_fallthru
      _
    // Predicated region
    $region102: #{generator_forward.1} parent=1 // pred_check
      _
    $region103: #{generator_forward.1} parent=1 // pred_check_branch
      %225 = sbr.rel (0) target = $region105
    $region104: #{generator_forward.1} parent=1 // pred_region
      %227 = dma.done [#allocation8], 32768
    $region105: #{generator_forward.1} parent=1 // pred_fallthru
      _
    // Predicated region
    $region106: #{generator_forward.1} parent=1 // pred_check
      _
    $region107: #{generator_forward.1} parent=1 // pred_check_branch
      %229 = sbr.rel (0) target = $region109
    $region108: #{generator_forward.1} parent=1 // pred_region
      %231 = dma.done [#allocation11], 32768
    $region109: #{generator_forward.1} parent=1 // pred_fallthru
      _
    // Predicated region
    $region110: #{generator_forward.1} parent=1 // pred_check
      _
    $region111: #{generator_forward.1} parent=1 // pred_check_branch
      %233 = sbr.rel (0) target = $region113
    $region112: #{generator_forward.1} parent=1 // pred_region
      %235 = dma.done [#allocation11], 8192
    $region113: #{generator_forward.1} parent=1 // pred_fallthru
      _
    // Predicated region
    $region114: #{generator_forward.1} parent=1 // pred_check
      _
    $region115: #{generator_forward.1} parent=1 // pred_check_branch
      %237 = sbr.rel (0) target = $region117
    $region116: #{generator_forward.1} parent=1 // pred_region
      %239 = dma.done [#allocation14], 512
    $region117: #{generator_forward.1} parent=1 // pred_fallthru
      _
    // Predicated region
    $region118: #{generator_forward.1} parent=1 // pred_check
      _
    $region119: #{generator_forward.1} parent=1 // pred_check_branch
      %241 = sbr.rel (0) target = $region121
    $region120: #{generator_forward.1} parent=1 // pred_region
      %243 = dma.done [#allocation14], 16
    $region121: #{generator_forward.1} parent=1 // pred_fallthru
      _
    // Predicated region
    $region122: #{generator_forward.1} parent=1 // pred_check
      _
    $region123: #{generator_forward.1} parent=1 // pred_check_branch
      %245 = sbr.rel (0) target = $region125
    $region124: #{generator_forward.1} parent=1 // pred_region
      %247 = dma.done [#allocation17], 16
    $region125: #{generator_forward.1} parent=1 // pred_fallthru
      _
    // Predicated region
    $region126: #{generator_forward.1} parent=1 // pred_check
      _
    $region127: #{generator_forward.1} parent=1 // pred_check_branch
      %249 = sbr.rel (0) target = $region129
    $region128: #{generator_forward.1} parent=1 // pred_region
      %251 = dma.done [#allocation17], 32
    $region129: #{generator_forward.1} parent=1 // pred_fallthru
      _
    // Predicated region
    $region130: #{generator_forward.1} parent=1 // pred_check
      _
    $region131: #{generator_forward.1} parent=1 // pred_check_branch
      %253 = sbr.rel (0) target = $region133
    $region132: #{generator_forward.1} parent=1 // pred_region
      %255 = dma.done [#allocation20], 128
    $region133: #{generator_forward.1} parent=1 // pred_fallthru
      _
    // Predicated region
    $region134: #{generator_forward.1} parent=1 // pred_check
      _
    $region135: #{generator_forward.1} parent=1 // pred_check_branch
      %257 = sbr.rel (0) target = $region137
    $region136: #{generator_forward.1} parent=1 // pred_region
      %259 = dma.done [#allocation20], 32
    $region137: #{generator_forward.1} parent=1 // pred_fallthru
      _
    %v261 = vld [vmem:[%s0] sm:$0xff]
    %v262 = vld [vmem:[%s0 + $0x8] sm:$0xff]
    %v263 = vpack.c.bf16 %v262, %v261
    %v264 = vld [vmem:[#allocation2] sm:$0xf]
    %v265 = vld [vmem:[#allocation2 + $0x4] sm:$0xf]
    %v266 = vld [vmem:[#allocation2 + $0x8] sm:$0xf]
    %v267 = vld [vmem:[#allocation2 + $0xc] sm:$0xf]
    %v268 = vld [vmem:[#allocation15] sm:$0x1]
    %v270 = vperm.slane %v268, 0
    %v276 = vunpack.c.l.b16 %v264
    %v277 = vunpack.c.l.b16 %v265
    %v278 = vunpack.c.l.b16 %v266
    %v279 = vunpack.c.l.b16 %v267
    %v280 = vpack.c.b16 %v277, %v276
    %v281 = vpack.c.b16 %v279, %v278
    %vm284 = vcmask 261120
    %v286 = vsel %vm284, %v263, 0
    %288 = vmatpush.bf16.msra.mxu0 0
    %289 = vmatpush.bf16.msra.mxu0 0
    %290 = vmatpush.bf16.msra.mxu0 0
    %291 = vmatpush.bf16.msra.mxu0 0
    %292 = vmatpush.bf16.msra.mxu0 0
    %293 = vmatpush.bf16.msra.mxu0 0
    %294 = vmatpush.bf16.msra.mxu0 %v281
    %295 = vmatpush.bf16.msra.mxu0 %v280
    %296 = vmatmul.bf16.gmra.mxu0 %v286
    %v297 = vpop.f32.mrf.mxu0
    %v298 = vadd.f32 %v270, %v297
    %v299 = vpop.f32.mrf.mxu0
    %v300 = vadd.f32 %v270, %v299
    %301 = vdwg.mxu0
    %v302 = vmax.f32 %v298, 0.0
    %v303 = vmax.f32 %v300, 0.0
    %v304 = vpack.c.bf16 %v303, %v302
    %v305 = vld [vmem:[#allocation4] sm:$0xf]
    %v306 = vld [vmem:[#allocation4 + $0x4] sm:$0xf]
    %v307 = vld [vmem:[#allocation4 + $0x8] sm:$0xf]
    %v308 = vld [vmem:[#allocation4 + $0xc] sm:$0xf]
    %v309 = vld [vmem:[#allocation4 + $0x10] sm:$0xf]
    %v310 = vld [vmem:[#allocation4 + $0x14] sm:$0xf]
    %v311 = vld [vmem:[#allocation4 + $0x18] sm:$0xf]
    %v312 = vld [vmem:[#allocation4 + $0x1c] sm:$0xf]
    %v313 = vld [vmem:[#allocation16] sm:$0x1]
    %v315 = vperm.slane %v313, 0
    %v325 = vunpack.c.l.b16 %v305
    %v326 = vunpack.c.l.b16 %v306
    %v327 = vunpack.c.l.b16 %v307
    %v328 = vunpack.c.l.b16 %v308
    %v329 = vunpack.c.l.b16 %v309
    %v330 = vunpack.c.l.b16 %v310
    %v331 = vunpack.c.l.b16 %v311
    %v332 = vunpack.c.l.b16 %v312
    %v333 = vpack.c.b16 %v326, %v325
    %v334 = vpack.c.b16 %v328, %v327
    %v335 = vpack.c.b16 %v330, %v329
    %v336 = vpack.c.b16 %v332, %v331
    %vm341 = vcmask 523264
    %v343 = vsel %vm341, %v304, 0
    %345 = vmatpush.bf16.msra.mxu0 0
    %346 = vmatpush.bf16.msra.mxu0 0
    %347 = vmatpush.bf16.msra.mxu0 0
    %348 = vmatpush.bf16.msra.mxu0 0
    %349 = vmatpush.bf16.msra.mxu0 %v336
    %350 = vmatpush.bf16.msra.mxu0 %v335
    %351 = vmatpush.bf16.msra.mxu0 %v334
    %352 = vmatpush.bf16.msra.mxu0 %v333
    %353 = vmatmul.bf16.gmra.mxu0 %v343
    %v354 = vpop.f32.mrf.mxu0
    %v355 = vadd.f32 %v315, %v354
    %v356 = vpop.f32.mrf.mxu0
    %v357 = vadd.f32 %v315, %v356
    %358 = vdwg.mxu0
    %v359 = vmax.f32 %v355, 0.0
    %v360 = vmax.f32 %v357, 0.0
    %v361 = vpack.c.bf16 %v360, %v359
    %v362 = vld [vmem:[#allocation6] sm:$0xff]
    %v363 = vld [vmem:[#allocation6 + $0x8] sm:$0xff]
    %v364 = vld [vmem:[#allocation6 + $0x10] sm:$0xff]
    %v365 = vld [vmem:[#allocation6 + $0x18] sm:$0xff]
    %v366 = vld [vmem:[#allocation6 + $0x20] sm:$0xff]
    %v367 = vld [vmem:[#allocation6 + $0x28] sm:$0xff]
    %v368 = vld [vmem:[#allocation6 + $0x30] sm:$0xff]
    %v369 = vld [vmem:[#allocation6 + $0x38] sm:$0xff]
    %v370 = vld [vmem:[#allocation6 + $0x40] sm:$0xff]
    %v371 = vld [vmem:[#allocation6 + $0x48] sm:$0xff]
    %v372 = vld [vmem:[#allocation6 + $0x50] sm:$0xff]
    %v373 = vld [vmem:[#allocation6 + $0x58] sm:$0xff]
    %v374 = vld [vmem:[#allocation6 + $0x60] sm:$0xff]
    %v375 = vld [vmem:[#allocation6 + $0x68] sm:$0xff]
    %v376 = vld [vmem:[#allocation6 + $0x70] sm:$0xff]
    %v377 = vld [vmem:[#allocation6 + $0x78] sm:$0xff]
    %v378 = vld [vmem:[#allocation18] sm:$0x3]
    %v380 = vperm.slane %v378, 0
    %v381 = vperm.slane %v378, 1
    %v400 = vunpack.c.l.b16 %v362
    %v401 = vunpack.c.h.b16 %v362
    %v402 = vunpack.c.l.b16 %v363
    %v403 = vunpack.c.h.b16 %v363
    %v404 = vunpack.c.l.b16 %v364
    %v405 = vunpack.c.h.b16 %v364
    %v406 = vunpack.c.l.b16 %v365
    %v407 = vunpack.c.h.b16 %v365
    %v408 = vunpack.c.l.b16 %v366
    %v409 = vunpack.c.h.b16 %v366
    %v410 = vunpack.c.l.b16 %v367
    %v411 = vunpack.c.h.b16 %v367
    %v412 = vunpack.c.l.b16 %v368
    %v413 = vunpack.c.h.b16 %v368
    %v414 = vunpack.c.l.b16 %v369
    %v415 = vunpack.c.h.b16 %v369
    %v416 = vunpack.c.l.b16 %v370
    %v417 = vunpack.c.h.b16 %v370
    %v418 = vunpack.c.l.b16 %v371
    %v419 = vunpack.c.h.b16 %v371
    %v420 = vunpack.c.l.b16 %v372
    %v421 = vunpack.c.h.b16 %v372
    %v422 = vunpack.c.l.b16 %v373
    %v423 = vunpack.c.h.b16 %v373
    %v424 = vunpack.c.l.b16 %v374
    %v425 = vunpack.c.h.b16 %v374
    %v426 = vunpack.c.l.b16 %v375
    %v427 = vunpack.c.h.b16 %v375
    %v428 = vunpack.c.l.b16 %v376
    %v429 = vunpack.c.h.b16 %v376
    %v430 = vunpack.c.l.b16 %v377
    %v431 = vunpack.c.h.b16 %v377
    %v432 = vpack.c.b16 %v402, %v400
    %v433 = vpack.c.b16 %v403, %v401
    %v434 = vpack.c.b16 %v406, %v404
    %v435 = vpack.c.b16 %v407, %v405
    %v436 = vpack.c.b16 %v410, %v408
    %v437 = vpack.c.b16 %v411, %v409
    %v438 = vpack.c.b16 %v414, %v412
    %v439 = vpack.c.b16 %v415, %v413
    %v440 = vpack.c.b16 %v418, %v416
    %v441 = vpack.c.b16 %v419, %v417
    %v442 = vpack.c.b16 %v422, %v420
    %v443 = vpack.c.b16 %v423, %v421
    %v444 = vpack.c.b16 %v426, %v424
    %v445 = vpack.c.b16 %v427, %v425
    %v446 = vpack.c.b16 %v430, %v428
    %v447 = vpack.c.b16 %v431, %v429
    %464 = vmatpush.bf16.msra.mxu0 %v446
    %465 = vmatpush.bf16.msra.mxu0 %v444
    %466 = vmatpush.bf16.msra.mxu0 %v442
    %467 = vmatpush.bf16.msra.mxu0 %v440
    %468 = vmatpush.bf16.msra.mxu0 %v438
    %469 = vmatpush.bf16.msra.mxu0 %v436
    %470 = vmatpush.bf16.msra.mxu0 %v434
    %471 = vmatpush.bf16.msra.mxu0 %v432
    %472 = vmatmul.bf16.gmra.mxu0 %v361
    %v473 = vpop.f32.mrf.mxu0
    %v474 = vadd.f32 %v380, %v473
    %v475 = vpop.f32.mrf.mxu0
    %v476 = vadd.f32 %v380, %v475
    %477 = vdwg.mxu0
    %478 = vmatpush.bf16.msra.mxu0 %v447
    %479 = vmatpush.bf16.msra.mxu0 %v445
    %480 = vmatpush.bf16.msra.mxu0 %v443
    %481 = vmatpush.bf16.msra.mxu0 %v441
    %482 = vmatpush.bf16.msra.mxu0 %v439
    %483 = vmatpush.bf16.msra.mxu0 %v437
    %484 = vmatpush.bf16.msra.mxu0 %v435
    %485 = vmatpush.bf16.msra.mxu0 %v433
    %486 = vmatmul.bf16.gmra.mxu0 %v361
    %v487 = vpop.f32.mrf.mxu0
    %v488 = vadd.f32 %v381, %v487
    %v489 = vpop.f32.mrf.mxu0
    %v490 = vadd.f32 %v381, %v489
    %491 = vdwg.mxu0
    %v492 = vmax.f32 %v474, 0.0
    %v493 = vmax.f32 %v488, 0.0
    %v494 = vmax.f32 %v476, 0.0
    %v495 = vmax.f32 %v490, 0.0
    %v496 = vpack.c.bf16 %v494, %v492
    %v497 = vpack.c.bf16 %v495, %v493
    %v498 = vld [vmem:[#allocation7] sm:$0xff]
    %v499 = vld [vmem:[#allocation7 + $0x8] sm:$0xff]
    %v500 = vld [vmem:[#allocation7 + $0x10] sm:$0xff]
    %v501 = vld [vmem:[#allocation7 + $0x18] sm:$0xff]
    %v502 = vld [vmem:[#allocation7 + $0x20] sm:$0xff]
    %v503 = vld [vmem:[#allocation7 + $0x28] sm:$0xff]
    %v504 = vld [vmem:[#allocation7 + $0x30] sm:$0xff]
    %v505 = vld [vmem:[#allocation7 + $0x38] sm:$0xff]
    %v506 = vld [vmem:[#allocation7 + $0x40] sm:$0xff]
    %v507 = vld [vmem:[#allocation7 + $0x48] sm:$0xff]
    %v508 = vld [vmem:[#allocation7 + $0x50] sm:$0xff]
    %v509 = vld [vmem:[#allocation7 + $0x58] sm:$0xff]
    %v510 = vld [vmem:[#allocation7 + $0x60] sm:$0xff]
    %v511 = vld [vmem:[#allocation7 + $0x68] sm:$0xff]
    %v512 = vld [vmem:[#allocation7 + $0x70] sm:$0xff]
    %v513 = vld [vmem:[#allocation7 + $0x78] sm:$0xff]
    %v514 = vld [vmem:[#allocation7 + $0x80] sm:$0xff]
    %v515 = vld [vmem:[#allocation7 + $0x88] sm:$0xff]
    %v516 = vld [vmem:[#allocation7 + $0x90] sm:$0xff]
    %v517 = vld [vmem:[#allocation7 + $0x98] sm:$0xff]
    %v518 = vld [vmem:[#allocation7 + $0xa0] sm:$0xff]
    %v519 = vld [vmem:[#allocation7 + $0xa8] sm:$0xff]
    %v520 = vld [vmem:[#allocation7 + $0xb0] sm:$0xff]
    %v521 = vld [vmem:[#allocation7 + $0xb8] sm:$0xff]
    %v522 = vld [vmem:[#allocation7 + $0xc0] sm:$0xff]
    %v523 = vld [vmem:[#allocation7 + $0xc8] sm:$0xff]
    %v524 = vld [vmem:[#allocation7 + $0xd0] sm:$0xff]
    %v525 = vld [vmem:[#allocation7 + $0xd8] sm:$0xff]
    %v526 = vld [vmem:[#allocation7 + $0xe0] sm:$0xff]
    %v527 = vld [vmem:[#allocation7 + $0xe8] sm:$0xff]
    %v528 = vld [vmem:[#allocation7 + $0xf0] sm:$0xff]
    %v529 = vld [vmem:[#allocation7 + $0xf8] sm:$0xff]
    %v530 = vld [vmem:[#allocation7 + $0x100] sm:$0xff]
    %v531 = vld [vmem:[#allocation7 + $0x108] sm:$0xff]
    %v532 = vld [vmem:[#allocation7 + $0x110] sm:$0xff]
    %v533 = vld [vmem:[#allocation7 + $0x118] sm:$0xff]
    %v534 = vld [vmem:[#allocation7 + $0x120] sm:$0xff]
    %v535 = vld [vmem:[#allocation7 + $0x128] sm:$0xff]
    %v536 = vld [vmem:[#allocation7 + $0x130] sm:$0xff]
    %v537 = vld [vmem:[#allocation7 + $0x138] sm:$0xff]
    %v538 = vld [vmem:[#allocation7 + $0x140] sm:$0xff]
    %v539 = vld [vmem:[#allocation7 + $0x148] sm:$0xff]
    %v540 = vld [vmem:[#allocation7 + $0x150] sm:$0xff]
    %v541 = vld [vmem:[#allocation7 + $0x158] sm:$0xff]
    %v542 = vld [vmem:[#allocation7 + $0x160] sm:$0xff]
    %v543 = vld [vmem:[#allocation7 + $0x168] sm:$0xff]
    %v544 = vld [vmem:[#allocation7 + $0x170] sm:$0xff]
    %v545 = vld [vmem:[#allocation7 + $0x178] sm:$0xff]
    %v546 = vld [vmem:[#allocation7 + $0x180] sm:$0xff]
    %v547 = vld [vmem:[#allocation7 + $0x188] sm:$0xff]
    %v548 = vld [vmem:[#allocation7 + $0x190] sm:$0xff]
    %v549 = vld [vmem:[#allocation7 + $0x198] sm:$0xff]
    %v550 = vld [vmem:[#allocation7 + $0x1a0] sm:$0xff]
    %v551 = vld [vmem:[#allocation7 + $0x1a8] sm:$0xff]
    %v552 = vld [vmem:[#allocation7 + $0x1b0] sm:$0xff]
    %v553 = vld [vmem:[#allocation7 + $0x1b8] sm:$0xff]
    %v554 = vld [vmem:[#allocation7 + $0x1c0] sm:$0xff]
    %v555 = vld [vmem:[#allocation7 + $0x1c8] sm:$0xff]
    %v556 = vld [vmem:[#allocation7 + $0x1d0] sm:$0xff]
    %v557 = vld [vmem:[#allocation7 + $0x1d8] sm:$0xff]
    %v558 = vld [vmem:[#allocation7 + $0x1e0] sm:$0xff]
    %v559 = vld [vmem:[#allocation7 + $0x1e8] sm:$0xff]
    %v560 = vld [vmem:[#allocation7 + $0x1f0] sm:$0xff]
    %v561 = vld [vmem:[#allocation7 + $0x1f8] sm:$0xff]
    %v562 = vld [vmem:[%s14] sm:$0xf]
    %v564 = vperm.slane %v562, 0
    %v565 = vperm.slane %v562, 1
    %v566 = vperm.slane %v562, 2
    %v567 = vperm.slane %v562, 3
    %v636 = vunpack.c.l.b16 %v498
    %v637 = vunpack.c.h.b16 %v498
    %v638 = vunpack.c.l.b16 %v499
    %v639 = vunpack.c.h.b16 %v499
    %v640 = vunpack.c.l.b16 %v500
    %v641 = vunpack.c.h.b16 %v500
    %v642 = vunpack.c.l.b16 %v501
    %v643 = vunpack.c.h.b16 %v501
    %v644 = vunpack.c.l.b16 %v502
    %v645 = vunpack.c.h.b16 %v502
    %v646 = vunpack.c.l.b16 %v503
    %v647 = vunpack.c.h.b16 %v503
    %v648 = vunpack.c.l.b16 %v504
    %v649 = vunpack.c.h.b16 %v504
    %v650 = vunpack.c.l.b16 %v505
    %v651 = vunpack.c.h.b16 %v505
    %v652 = vunpack.c.l.b16 %v506
    %v653 = vunpack.c.h.b16 %v506
    %v654 = vunpack.c.l.b16 %v507
    %v655 = vunpack.c.h.b16 %v507
    %v656 = vunpack.c.l.b16 %v508
    %v657 = vunpack.c.h.b16 %v508
    %v658 = vunpack.c.l.b16 %v509
    %v659 = vunpack.c.h.b16 %v509
    %v660 = vunpack.c.l.b16 %v510
    %v661 = vunpack.c.h.b16 %v510
    %v662 = vunpack.c.l.b16 %v511
    %v663 = vunpack.c.h.b16 %v511
    %v664 = vunpack.c.l.b16 %v512
    %v665 = vunpack.c.h.b16 %v512
    %v666 = vunpack.c.l.b16 %v513
    %v667 = vunpack.c.h.b16 %v513
    %v668 = vunpack.c.l.b16 %v514
    %v669 = vunpack.c.h.b16 %v514
    %v670 = vunpack.c.l.b16 %v515
    %v671 = vunpack.c.h.b16 %v515
    %v672 = vunpack.c.l.b16 %v516
    %v673 = vunpack.c.h.b16 %v516
    %v674 = vunpack.c.l.b16 %v517
    %v675 = vunpack.c.h.b16 %v517
    %v676 = vunpack.c.l.b16 %v518
    %v677 = vunpack.c.h.b16 %v518
    %v678 = vunpack.c.l.b16 %v519
    %v679 = vunpack.c.h.b16 %v519
    %v680 = vunpack.c.l.b16 %v520
    %v681 = vunpack.c.h.b16 %v520
    %v682 = vunpack.c.l.b16 %v521
    %v683 = vunpack.c.h.b16 %v521
    %v684 = vunpack.c.l.b16 %v522
    %v685 = vunpack.c.h.b16 %v522
    %v686 = vunpack.c.l.b16 %v523
    %v687 = vunpack.c.h.b16 %v523
    %v688 = vunpack.c.l.b16 %v524
    %v689 = vunpack.c.h.b16 %v524
    %v690 = vunpack.c.l.b16 %v525
    %v691 = vunpack.c.h.b16 %v525
    %v692 = vunpack.c.l.b16 %v526
    %v693 = vunpack.c.h.b16 %v526
    %v694 = vunpack.c.l.b16 %v527
    %v695 = vunpack.c.h.b16 %v527
    %v696 = vunpack.c.l.b16 %v528
    %v697 = vunpack.c.h.b16 %v528
    %v698 = vunpack.c.l.b16 %v529
    %v699 = vunpack.c.h.b16 %v529
    %v700 = vunpack.c.l.b16 %v530
    %v701 = vunpack.c.h.b16 %v530
    %v702 = vunpack.c.l.b16 %v531
    %v703 = vunpack.c.h.b16 %v531
    %v704 = vunpack.c.l.b16 %v532
    %v705 = vunpack.c.h.b16 %v532
    %v706 = vunpack.c.l.b16 %v533
    %v707 = vunpack.c.h.b16 %v533
    %v708 = vunpack.c.l.b16 %v534
    %v709 = vunpack.c.h.b16 %v534
    %v710 = vunpack.c.l.b16 %v535
    %v711 = vunpack.c.h.b16 %v535
    %v712 = vunpack.c.l.b16 %v536
    %v713 = vunpack.c.h.b16 %v536
    %v714 = vunpack.c.l.b16 %v537
    %v715 = vunpack.c.h.b16 %v537
    %v716 = vunpack.c.l.b16 %v538
    %v717 = vunpack.c.h.b16 %v538
    %v718 = vunpack.c.l.b16 %v539
    %v719 = vunpack.c.h.b16 %v539
    %v720 = vunpack.c.l.b16 %v540
    %v721 = vunpack.c.h.b16 %v540
    %v722 = vunpack.c.l.b16 %v541
    %v723 = vunpack.c.h.b16 %v541
    %v724 = vunpack.c.l.b16 %v542
    %v725 = vunpack.c.h.b16 %v542
    %v726 = vunpack.c.l.b16 %v543
    %v727 = vunpack.c.h.b16 %v543
    %v728 = vunpack.c.l.b16 %v544
    %v729 = vunpack.c.h.b16 %v544
    %v730 = vunpack.c.l.b16 %v545
    %v731 = vunpack.c.h.b16 %v545
    %v732 = vunpack.c.l.b16 %v546
    %v733 = vunpack.c.h.b16 %v546
    %v734 = vunpack.c.l.b16 %v547
    %v735 = vunpack.c.h.b16 %v547
    %v736 = vunpack.c.l.b16 %v548
    %v737 = vunpack.c.h.b16 %v548
    %v738 = vunpack.c.l.b16 %v549
    %v739 = vunpack.c.h.b16 %v549
    %v740 = vunpack.c.l.b16 %v550
    %v741 = vunpack.c.h.b16 %v550
    %v742 = vunpack.c.l.b16 %v551
    %v743 = vunpack.c.h.b16 %v551
    %v744 = vunpack.c.l.b16 %v552
    %v745 = vunpack.c.h.b16 %v552
    %v746 = vunpack.c.l.b16 %v553
    %v747 = vunpack.c.h.b16 %v553
    %v748 = vunpack.c.l.b16 %v554
    %v749 = vunpack.c.h.b16 %v554
    %v750 = vunpack.c.l.b16 %v555
    %v751 = vunpack.c.h.b16 %v555
    %v752 = vunpack.c.l.b16 %v556
    %v753 = vunpack.c.h.b16 %v556
    %v754 = vunpack.c.l.b16 %v557
    %v755 = vunpack.c.h.b16 %v557
    %v756 = vunpack.c.l.b16 %v558
    %v757 = vunpack.c.h.b16 %v558
    %v758 = vunpack.c.l.b16 %v559
    %v759 = vunpack.c.h.b16 %v559
    %v760 = vunpack.c.l.b16 %v560
    %v761 = vunpack.c.h.b16 %v560
    %v762 = vunpack.c.l.b16 %v561
    %v763 = vunpack.c.h.b16 %v561
    %v764 = vpack.c.b16 %v640, %v636
    %v765 = vpack.c.b16 %v641, %v637
    %v766 = vpack.c.b16 %v642, %v638
    %v767 = vpack.c.b16 %v643, %v639
    %v768 = vpack.c.b16 %v648, %v644
    %v769 = vpack.c.b16 %v649, %v645
    %v770 = vpack.c.b16 %v650, %v646
    %v771 = vpack.c.b16 %v651, %v647
    %v772 = vpack.c.b16 %v656, %v652
    %v773 = vpack.c.b16 %v657, %v653
    %v774 = vpack.c.b16 %v658, %v654
    %v775 = vpack.c.b16 %v659, %v655
    %v776 = vpack.c.b16 %v664, %v660
    %v777 = vpack.c.b16 %v665, %v661
    %v778 = vpack.c.b16 %v666, %v662
    %v779 = vpack.c.b16 %v667, %v663
    %v780 = vpack.c.b16 %v672, %v668
    %v781 = vpack.c.b16 %v673, %v669
    %v782 = vpack.c.b16 %v674, %v670
    %v783 = vpack.c.b16 %v675, %v671
    %v784 = vpack.c.b16 %v680, %v676
    %v785 = vpack.c.b16 %v681, %v677
    %v786 = vpack.c.b16 %v682, %v678
    %v787 = vpack.c.b16 %v683, %v679
    %v788 = vpack.c.b16 %v688, %v684
    %v789 = vpack.c.b16 %v689, %v685
    %v790 = vpack.c.b16 %v690, %v686
    %v791 = vpack.c.b16 %v691, %v687
    %v792 = vpack.c.b16 %v696, %v692
    %v793 = vpack.c.b16 %v697, %v693
    %v794 = vpack.c.b16 %v698, %v694
    %v795 = vpack.c.b16 %v699, %v695
    %v796 = vpack.c.b16 %v704, %v700
    %v797 = vpack.c.b16 %v705, %v701
    %v798 = vpack.c.b16 %v706, %v702
    %v799 = vpack.c.b16 %v707, %v703
    %v800 = vpack.c.b16 %v712, %v708
    %v801 = vpack.c.b16 %v713, %v709
    %v802 = vpack.c.b16 %v714, %v710
    %v803 = vpack.c.b16 %v715, %v711
    %v804 = vpack.c.b16 %v720, %v716
    %v805 = vpack.c.b16 %v721, %v717
    %v806 = vpack.c.b16 %v722, %v718
    %v807 = vpack.c.b16 %v723, %v719
    %v808 = vpack.c.b16 %v728, %v724
    %v809 = vpack.c.b16 %v729, %v725
    %v810 = vpack.c.b16 %v730, %v726
    %v811 = vpack.c.b16 %v731, %v727
    %v812 = vpack.c.b16 %v736, %v732
    %v813 = vpack.c.b16 %v737, %v733
    %v814 = vpack.c.b16 %v738, %v734
    %v815 = vpack.c.b16 %v739, %v735
    %v816 = vpack.c.b16 %v744, %v740
    %v817 = vpack.c.b16 %v745, %v741
    %v818 = vpack.c.b16 %v746, %v742
    %v819 = vpack.c.b16 %v747, %v743
    %v820 = vpack.c.b16 %v752, %v748
    %v821 = vpack.c.b16 %v753, %v749
    %v822 = vpack.c.b16 %v754, %v750
    %v823 = vpack.c.b16 %v755, %v751
    %v824 = vpack.c.b16 %v760, %v756
    %v825 = vpack.c.b16 %v761, %v757
    %v826 = vpack.c.b16 %v762, %v758
    %v827 = vpack.c.b16 %v763, %v759
    %892 = vmatpush.bf16.msra.mxu0 %v792
    %893 = vmatpush.bf16.msra.mxu0 %v788
    %894 = vmatpush.bf16.msra.mxu0 %v784
    %895 = vmatpush.bf16.msra.mxu0 %v780
    %896 = vmatpush.bf16.msra.mxu0 %v776
    %897 = vmatpush.bf16.msra.mxu0 %v772
    %898 = vmatpush.bf16.msra.mxu0 %v768
    %899 = vmatpush.bf16.msra.mxu0 %v764
    %900 = vmatmul.bf16.gmra.mxu0 %v496
    %v901 = vpop.f32.mrf.mxu0
    %v902 = vadd.f32 %v564, %v901
    %v903 = vpop.f32.mrf.mxu0
    %v904 = vadd.f32 %v564, %v903
    %905 = vdwg.mxu0
    %906 = vmatpush.bf16.msra.mxu0 %v824
    %907 = vmatpush.bf16.msra.mxu0 %v820
    %908 = vmatpush.bf16.msra.mxu0 %v816
    %909 = vmatpush.bf16.msra.mxu0 %v812
    %910 = vmatpush.bf16.msra.mxu0 %v808
    %911 = vmatpush.bf16.msra.mxu0 %v804
    %912 = vmatpush.bf16.msra.mxu0 %v800
    %913 = vmatpush.bf16.msra.mxu0 %v796
    %914 = vmatmul.bf16.gmra.mxu0 %v497
    %v915 = vpop.f32.mrf.mxu0
    %v916 = vadd.f32 %v902, %v915
    %v917 = vpop.f32.mrf.mxu0
    %v918 = vadd.f32 %v904, %v917
    %919 = vdwg.mxu0
    %920 = vmatpush.bf16.msra.mxu0 %v793
    %921 = vmatpush.bf16.msra.mxu0 %v789
    %922 = vmatpush.bf16.msra.mxu0 %v785
    %923 = vmatpush.bf16.msra.mxu0 %v781
    %924 = vmatpush.bf16.msra.mxu0 %v777
    %925 = vmatpush.bf16.msra.mxu0 %v773
    %926 = vmatpush.bf16.msra.mxu0 %v769
    %927 = vmatpush.bf16.msra.mxu0 %v765
    %928 = vmatmul.bf16.gmra.mxu0 %v496
    %v929 = vpop.f32.mrf.mxu0
    %v930 = vadd.f32 %v565, %v929
    %v931 = vpop.f32.mrf.mxu0
    %v932 = vadd.f32 %v565, %v931
    %933 = vdwg.mxu0
    %934 = vmatpush.bf16.msra.mxu0 %v825
    %935 = vmatpush.bf16.msra.mxu0 %v821
    %936 = vmatpush.bf16.msra.mxu0 %v817
    %937 = vmatpush.bf16.msra.mxu0 %v813
    %938 = vmatpush.bf16.msra.mxu0 %v809
    %939 = vmatpush.bf16.msra.mxu0 %v805
    %940 = vmatpush.bf16.msra.mxu0 %v801
    %941 = vmatpush.bf16.msra.mxu0 %v797
    %942 = vmatmul.bf16.gmra.mxu0 %v497
    %v943 = vpop.f32.mrf.mxu0
    %v944 = vadd.f32 %v930, %v943
    %v945 = vpop.f32.mrf.mxu0
    %v946 = vadd.f32 %v932, %v945
    %947 = vdwg.mxu0
    %948 = vmatpush.bf16.msra.mxu0 %v794
    %949 = vmatpush.bf16.msra.mxu0 %v790
    %950 = vmatpush.bf16.msra.mxu0 %v786
    %951 = vmatpush.bf16.msra.mxu0 %v782
    %952 = vmatpush.bf16.msra.mxu0 %v778
    %953 = vmatpush.bf16.msra.mxu0 %v774
    %954 = vmatpush.bf16.msra.mxu0 %v770
    %955 = vmatpush.bf16.msra.mxu0 %v766
    %956 = vmatmul.bf16.gmra.mxu0 %v496
    %v957 = vpop.f32.mrf.mxu0
    %v958 = vadd.f32 %v566, %v957
    %v959 = vpop.f32.mrf.mxu0
    %v960 = vadd.f32 %v566, %v959
    %961 = vdwg.mxu0
    %962 = vmatpush.bf16.msra.mxu0 %v826
    %963 = vmatpush.bf16.msra.mxu0 %v822
    %964 = vmatpush.bf16.msra.mxu0 %v818
    %965 = vmatpush.bf16.msra.mxu0 %v814
    %966 = vmatpush.bf16.msra.mxu0 %v810
    %967 = vmatpush.bf16.msra.mxu0 %v806
    %968 = vmatpush.bf16.msra.mxu0 %v802
    %969 = vmatpush.bf16.msra.mxu0 %v798
    %970 = vmatmul.bf16.gmra.mxu0 %v497
    %v971 = vpop.f32.mrf.mxu0
    %v972 = vadd.f32 %v958, %v971
    %v973 = vpop.f32.mrf.mxu0
    %v974 = vadd.f32 %v960, %v973
    %975 = vdwg.mxu0
    %976 = vmatpush.bf16.msra.mxu0 %v795
    %977 = vmatpush.bf16.msra.mxu0 %v791
    %978 = vmatpush.bf16.msra.mxu0 %v787
    %979 = vmatpush.bf16.msra.mxu0 %v783
    %980 = vmatpush.bf16.msra.mxu0 %v779
    %981 = vmatpush.bf16.msra.mxu0 %v775
    %982 = vmatpush.bf16.msra.mxu0 %v771
    %983 = vmatpush.bf16.msra.mxu0 %v767
    %984 = vmatmul.bf16.gmra.mxu0 %v496
    %v985 = vpop.f32.mrf.mxu0
    %v986 = vadd.f32 %v567, %v985
    %v987 = vpop.f32.mrf.mxu0
    %v988 = vadd.f32 %v567, %v987
    %989 = vdwg.mxu0
    %990 = vmatpush.bf16.msra.mxu0 %v827
    %991 = vmatpush.bf16.msra.mxu0 %v823
    %992 = vmatpush.bf16.msra.mxu0 %v819
    %993 = vmatpush.bf16.msra.mxu0 %v815
    %994 = vmatpush.bf16.msra.mxu0 %v811
    %995 = vmatpush.bf16.msra.mxu0 %v807
    %996 = vmatpush.bf16.msra.mxu0 %v803
    %997 = vmatpush.bf16.msra.mxu0 %v799
    %998 = vmatmul.bf16.gmra.mxu0 %v497
    %v999 = vpop.f32.mrf.mxu0
    %v1000 = vadd.f32 %v986, %v999
    %v1001 = vpop.f32.mrf.mxu0
    %v1002 = vadd.f32 %v988, %v1001
    %1003 = vdwg.mxu0
    %v1004 = vmax.f32 %v916, 0.0
    %v1005 = vmax.f32 %v944, 0.0
    %v1006 = vmax.f32 %v972, 0.0
    %v1007 = vmax.f32 %v1000, 0.0
    %v1008 = vmax.f32 %v918, 0.0
    %v1009 = vmax.f32 %v946, 0.0
    %v1010 = vmax.f32 %v974, 0.0
    %v1011 = vmax.f32 %v1002, 0.0
    %v1012 = vpack.c.bf16 %v1008, %v1004
    %v1013 = vpack.c.bf16 %v1009, %v1005
    %v1014 = vpack.c.bf16 %v1010, %v1006
    %v1015 = vpack.c.bf16 %v1011, %v1007
    %v1016 = vld [vmem:[#allocation9] sm:$0xff]
    %v1017 = vld [vmem:[#allocation9 + $0x8] sm:$0xff]
    %v1018 = vld [vmem:[#allocation9 + $0x10] sm:$0xff]
    %v1019 = vld [vmem:[#allocation9 + $0x18] sm:$0xff]
    %v1020 = vld [vmem:[#allocation9 + $0x20] sm:$0xff]
    %v1021 = vld [vmem:[#allocation9 + $0x28] sm:$0xff]
    %v1022 = vld [vmem:[#allocation9 + $0x30] sm:$0xff]
    %v1023 = vld [vmem:[#allocation9 + $0x38] sm:$0xff]
    %v1024 = vld [vmem:[#allocation9 + $0x40] sm:$0xff]
    %v1025 = vld [vmem:[#allocation9 + $0x48] sm:$0xff]
    %v1026 = vld [vmem:[#allocation9 + $0x50] sm:$0xff]
    %v1027 = vld [vmem:[#allocation9 + $0x58] sm:$0xff]
    %v1028 = vld [vmem:[#allocation9 + $0x60] sm:$0xff]
    %v1029 = vld [vmem:[#allocation9 + $0x68] sm:$0xff]
    %v1030 = vld [vmem:[#allocation9 + $0x70] sm:$0xff]
    %v1031 = vld [vmem:[#allocation9 + $0x78] sm:$0xff]
    %v1032 = vld [vmem:[#allocation9 + $0x80] sm:$0xff]
    %v1033 = vld [vmem:[#allocation9 + $0x88] sm:$0xff]
    %v1034 = vld [vmem:[#allocation9 + $0x90] sm:$0xff]
    %v1035 = vld [vmem:[#allocation9 + $0x98] sm:$0xff]
    %v1036 = vld [vmem:[#allocation9 + $0xa0] sm:$0xff]
    %v1037 = vld [vmem:[#allocation9 + $0xa8] sm:$0xff]
    %v1038 = vld [vmem:[#allocation9 + $0xb0] sm:$0xff]
    %v1039 = vld [vmem:[#allocation9 + $0xb8] sm:$0xff]
    %v1040 = vld [vmem:[#allocation9 + $0xc0] sm:$0xff]
    %v1041 = vld [vmem:[#allocation9 + $0xc8] sm:$0xff]
    %v1042 = vld [vmem:[#allocation9 + $0xd0] sm:$0xff]
    %v1043 = vld [vmem:[#allocation9 + $0xd8] sm:$0xff]
    %v1044 = vld [vmem:[#allocation9 + $0xe0] sm:$0xff]
    %v1045 = vld [vmem:[#allocation9 + $0xe8] sm:$0xff]
    %v1046 = vld [vmem:[#allocation9 + $0xf0] sm:$0xff]
    %v1047 = vld [vmem:[#allocation9 + $0xf8] sm:$0xff]
    %v1048 = vld [vmem:[#allocation9 + $0x100] sm:$0xff]
    %v1049 = vld [vmem:[#allocation9 + $0x108] sm:$0xff]
    %v1050 = vld [vmem:[#allocation9 + $0x110] sm:$0xff]
    %v1051 = vld [vmem:[#allocation9 + $0x118] sm:$0xff]
    %v1052 = vld [vmem:[#allocation9 + $0x120] sm:$0xff]
    %v1053 = vld [vmem:[#allocation9 + $0x128] sm:$0xff]
    %v1054 = vld [vmem:[#allocation9 + $0x130] sm:$0xff]
    %v1055 = vld [vmem:[#allocation9 + $0x138] sm:$0xff]
    %v1056 = vld [vmem:[#allocation9 + $0x140] sm:$0xff]
    %v1057 = vld [vmem:[#allocation9 + $0x148] sm:$0xff]
    %v1058 = vld [vmem:[#allocation9 + $0x150] sm:$0xff]
    %v1059 = vld [vmem:[#allocation9 + $0x158] sm:$0xff]
    %v1060 = vld [vmem:[#allocation9 + $0x160] sm:$0xff]
    %v1061 = vld [vmem:[#allocation9 + $0x168] sm:$0xff]
    %v1062 = vld [vmem:[#allocation9 + $0x170] sm:$0xff]
    %v1063 = vld [vmem:[#allocation9 + $0x178] sm:$0xff]
    %v1064 = vld [vmem:[#allocation9 + $0x180] sm:$0xff]
    %v1065 = vld [vmem:[#allocation9 + $0x188] sm:$0xff]
    %v1066 = vld [vmem:[#allocation9 + $0x190] sm:$0xff]
    %v1067 = vld [vmem:[#allocation9 + $0x198] sm:$0xff]
    %v1068 = vld [vmem:[#allocation9 + $0x1a0] sm:$0xff]
    %v1069 = vld [vmem:[#allocation9 + $0x1a8] sm:$0xff]
    %v1070 = vld [vmem:[#allocation9 + $0x1b0] sm:$0xff]
    %v1071 = vld [vmem:[#allocation9 + $0x1b8] sm:$0xff]
    %v1072 = vld [vmem:[#allocation9 + $0x1c0] sm:$0xff]
    %v1073 = vld [vmem:[#allocation9 + $0x1c8] sm:$0xff]
    %v1074 = vld [vmem:[#allocation9 + $0x1d0] sm:$0xff]
    %v1075 = vld [vmem:[#allocation9 + $0x1d8] sm:$0xff]
    %v1076 = vld [vmem:[#allocation9 + $0x1e0] sm:$0xff]
    %v1077 = vld [vmem:[#allocation9 + $0x1e8] sm:$0xff]
    %v1078 = vld [vmem:[#allocation9 + $0x1f0] sm:$0xff]
    %v1079 = vld [vmem:[#allocation9 + $0x1f8] sm:$0xff]
    %v1080 = vld [vmem:[#allocation9 + $0x200] sm:$0xff]
    %v1081 = vld [vmem:[#allocation9 + $0x208] sm:$0xff]
    %v1082 = vld [vmem:[#allocation9 + $0x210] sm:$0xff]
    %v1083 = vld [vmem:[#allocation9 + $0x218] sm:$0xff]
    %v1084 = vld [vmem:[#allocation9 + $0x220] sm:$0xff]
    %v1085 = vld [vmem:[#allocation9 + $0x228] sm:$0xff]
    %v1086 = vld [vmem:[#allocation9 + $0x230] sm:$0xff]
    %v1087 = vld [vmem:[#allocation9 + $0x238] sm:$0xff]
    %v1088 = vld [vmem:[#allocation9 + $0x240] sm:$0xff]
    %v1089 = vld [vmem:[#allocation9 + $0x248] sm:$0xff]
    %v1090 = vld [vmem:[#allocation9 + $0x250] sm:$0xff]
    %v1091 = vld [vmem:[#allocation9 + $0x258] sm:$0xff]
    %v1092 = vld [vmem:[#allocation9 + $0x260] sm:$0xff]
    %v1093 = vld [vmem:[#allocation9 + $0x268] sm:$0xff]
    %v1094 = vld [vmem:[#allocation9 + $0x270] sm:$0xff]
    %v1095 = vld [vmem:[#allocation9 + $0x278] sm:$0xff]
    %v1096 = vld [vmem:[#allocation9 + $0x280] sm:$0xff]
    %v1097 = vld [vmem:[#allocation9 + $0x288] sm:$0xff]
    %v1098 = vld [vmem:[#allocation9 + $0x290] sm:$0xff]
    %v1099 = vld [vmem:[#allocation9 + $0x298] sm:$0xff]
    %v1100 = vld [vmem:[#allocation9 + $0x2a0] sm:$0xff]
    %v1101 = vld [vmem:[#allocation9 + $0x2a8] sm:$0xff]
    %v1102 = vld [vmem:[#allocation9 + $0x2b0] sm:$0xff]
    %v1103 = vld [vmem:[#allocation9 + $0x2b8] sm:$0xff]
    %v1104 = vld [vmem:[#allocation9 + $0x2c0] sm:$0xff]
    %v1105 = vld [vmem:[#allocation9 + $0x2c8] sm:$0xff]
    %v1106 = vld [vmem:[#allocation9 + $0x2d0] sm:$0xff]
    %v1107 = vld [vmem:[#allocation9 + $0x2d8] sm:$0xff]
    %v1108 = vld [vmem:[#allocation9 + $0x2e0] sm:$0xff]
    %v1109 = vld [vmem:[#allocation9 + $0x2e8] sm:$0xff]
    %v1110 = vld [vmem:[#allocation9 + $0x2f0] sm:$0xff]
    %v1111 = vld [vmem:[#allocation9 + $0x2f8] sm:$0xff]
    %v1112 = vld [vmem:[#allocation9 + $0x300] sm:$0xff]
    %v1113 = vld [vmem:[#allocation9 + $0x308] sm:$0xff]
    %v1114 = vld [vmem:[#allocation9 + $0x310] sm:$0xff]
    %v1115 = vld [vmem:[#allocation9 + $0x318] sm:$0xff]
    %v1116 = vld [vmem:[#allocation9 + $0x320] sm:$0xff]
    %v1117 = vld [vmem:[#allocation9 + $0x328] sm:$0xff]
    %v1118 = vld [vmem:[#allocation9 + $0x330] sm:$0xff]
    %v1119 = vld [vmem:[#allocation9 + $0x338] sm:$0xff]
    %v1120 = vld [vmem:[#allocation9 + $0x340] sm:$0xff]
    %v1121 = vld [vmem:[#allocation9 + $0x348] sm:$0xff]
    %v1122 = vld [vmem:[#allocation9 + $0x350] sm:$0xff]
    %v1123 = vld [vmem:[#allocation9 + $0x358] sm:$0xff]
    %v1124 = vld [vmem:[#allocation9 + $0x360] sm:$0xff]
    %v1125 = vld [vmem:[#allocation9 + $0x368] sm:$0xff]
    %v1126 = vld [vmem:[#allocation9 + $0x370] sm:$0xff]
    %v1127 = vld [vmem:[#allocation9 + $0x378] sm:$0xff]
    %v1128 = vld [vmem:[#allocation9 + $0x380] sm:$0xff]
    %v1129 = vld [vmem:[#allocation9 + $0x388] sm:$0xff]
    %v1130 = vld [vmem:[#allocation9 + $0x390] sm:$0xff]
    %v1131 = vld [vmem:[#allocation9 + $0x398] sm:$0xff]
    %v1132 = vld [vmem:[#allocation9 + $0x3a0] sm:$0xff]
    %v1133 = vld [vmem:[#allocation9 + $0x3a8] sm:$0xff]
    %v1134 = vld [vmem:[#allocation9 + $0x3b0] sm:$0xff]
    %v1135 = vld [vmem:[#allocation9 + $0x3b8] sm:$0xff]
    %v1136 = vld [vmem:[#allocation9 + $0x3c0] sm:$0xff]
    %v1137 = vld [vmem:[#allocation9 + $0x3c8] sm:$0xff]
    %v1138 = vld [vmem:[#allocation9 + $0x3d0] sm:$0xff]
    %v1139 = vld [vmem:[#allocation9 + $0x3d8] sm:$0xff]
    %v1140 = vld [vmem:[#allocation9 + $0x3e0] sm:$0xff]
    %v1141 = vld [vmem:[#allocation9 + $0x3e8] sm:$0xff]
    %v1142 = vld [vmem:[#allocation9 + $0x3f0] sm:$0xff]
    %v1143 = vld [vmem:[#allocation9 + $0x3f8] sm:$0xff]
    %v1144 = vld [vmem:[#allocation9 + $0x400] sm:$0xff]
    %v1145 = vld [vmem:[#allocation9 + $0x408] sm:$0xff]
    %v1146 = vld [vmem:[#allocation9 + $0x410] sm:$0xff]
    %v1147 = vld [vmem:[#allocation9 + $0x418] sm:$0xff]
    %v1148 = vld [vmem:[#allocation9 + $0x420] sm:$0xff]
    %v1149 = vld [vmem:[#allocation9 + $0x428] sm:$0xff]
    %v1150 = vld [vmem:[#allocation9 + $0x430] sm:$0xff]
    %v1151 = vld [vmem:[#allocation9 + $0x438] sm:$0xff]
    %v1152 = vld [vmem:[#allocation9 + $0x440] sm:$0xff]
    %v1153 = vld [vmem:[#allocation9 + $0x448] sm:$0xff]
    %v1154 = vld [vmem:[#allocation9 + $0x450] sm:$0xff]
    %v1155 = vld [vmem:[#allocation9 + $0x458] sm:$0xff]
    %v1156 = vld [vmem:[#allocation9 + $0x460] sm:$0xff]
    %v1157 = vld [vmem:[#allocation9 + $0x468] sm:$0xff]
    %v1158 = vld [vmem:[#allocation9 + $0x470] sm:$0xff]
    %v1159 = vld [vmem:[#allocation9 + $0x478] sm:$0xff]
    %v1160 = vld [vmem:[#allocation9 + $0x480] sm:$0xff]
    %v1161 = vld [vmem:[#allocation9 + $0x488] sm:$0xff]
    %v1162 = vld [vmem:[#allocation9 + $0x490] sm:$0xff]
    %v1163 = vld [vmem:[#allocation9 + $0x498] sm:$0xff]
    %v1164 = vld [vmem:[#allocation9 + $0x4a0] sm:$0xff]
    %v1165 = vld [vmem:[#allocation9 + $0x4a8] sm:$0xff]
    %v1166 = vld [vmem:[#allocation9 + $0x4b0] sm:$0xff]
    %v1167 = vld [vmem:[#allocation9 + $0x4b8] sm:$0xff]
    %v1168 = vld [vmem:[#allocation9 + $0x4c0] sm:$0xff]
    %v1169 = vld [vmem:[#allocation9 + $0x4c8] sm:$0xff]
    %v1170 = vld [vmem:[#allocation9 + $0x4d0] sm:$0xff]
    %v1171 = vld [vmem:[#allocation9 + $0x4d8] sm:$0xff]
    %v1172 = vld [vmem:[#allocation9 + $0x4e0] sm:$0xff]
    %v1173 = vld [vmem:[#allocation9 + $0x4e8] sm:$0xff]
    %v1174 = vld [vmem:[#allocation9 + $0x4f0] sm:$0xff]
    %v1175 = vld [vmem:[#allocation9 + $0x4f8] sm:$0xff]
    %v1176 = vld [vmem:[#allocation9 + $0x500] sm:$0xff]
    %v1177 = vld [vmem:[#allocation9 + $0x508] sm:$0xff]
    %v1178 = vld [vmem:[#allocation9 + $0x510] sm:$0xff]
    %v1179 = vld [vmem:[#allocation9 + $0x518] sm:$0xff]
    %v1180 = vld [vmem:[#allocation9 + $0x520] sm:$0xff]
    %v1181 = vld [vmem:[#allocation9 + $0x528] sm:$0xff]
    %v1182 = vld [vmem:[#allocation9 + $0x530] sm:$0xff]
    %v1183 = vld [vmem:[#allocation9 + $0x538] sm:$0xff]
    %v1184 = vld [vmem:[#allocation9 + $0x540] sm:$0xff]
    %v1185 = vld [vmem:[#allocation9 + $0x548] sm:$0xff]
    %v1186 = vld [vmem:[#allocation9 + $0x550] sm:$0xff]
    %v1187 = vld [vmem:[#allocation9 + $0x558] sm:$0xff]
    %v1188 = vld [vmem:[#allocation9 + $0x560] sm:$0xff]
    %v1189 = vld [vmem:[#allocation9 + $0x568] sm:$0xff]
    %v1190 = vld [vmem:[#allocation9 + $0x570] sm:$0xff]
    %v1191 = vld [vmem:[#allocation9 + $0x578] sm:$0xff]
    %v1192 = vld [vmem:[#allocation9 + $0x580] sm:$0xff]
    %v1193 = vld [vmem:[#allocation9 + $0x588] sm:$0xff]
    %v1194 = vld [vmem:[#allocation9 + $0x590] sm:$0xff]
    %v1195 = vld [vmem:[#allocation9 + $0x598] sm:$0xff]
    %v1196 = vld [vmem:[#allocation9 + $0x5a0] sm:$0xff]
    %v1197 = vld [vmem:[#allocation9 + $0x5a8] sm:$0xff]
    %v1198 = vld [vmem:[#allocation9 + $0x5b0] sm:$0xff]
    %v1199 = vld [vmem:[#allocation9 + $0x5b8] sm:$0xff]
    %v1200 = vld [vmem:[#allocation9 + $0x5c0] sm:$0xff]
    %v1201 = vld [vmem:[#allocation9 + $0x5c8] sm:$0xff]
    %v1202 = vld [vmem:[#allocation9 + $0x5d0] sm:$0xff]
    %v1203 = vld [vmem:[#allocation9 + $0x5d8] sm:$0xff]
    %v1204 = vld [vmem:[#allocation9 + $0x5e0] sm:$0xff]
    %v1205 = vld [vmem:[#allocation9 + $0x5e8] sm:$0xff]
    %v1206 = vld [vmem:[#allocation9 + $0x5f0] sm:$0xff]
    %v1207 = vld [vmem:[#allocation9 + $0x5f8] sm:$0xff]
    %v1208 = vld [vmem:[#allocation9 + $0x600] sm:$0xff]
    %v1209 = vld [vmem:[#allocation9 + $0x608] sm:$0xff]
    %v1210 = vld [vmem:[#allocation9 + $0x610] sm:$0xff]
    %v1211 = vld [vmem:[#allocation9 + $0x618] sm:$0xff]
    %v1212 = vld [vmem:[#allocation9 + $0x620] sm:$0xff]
    %v1213 = vld [vmem:[#allocation9 + $0x628] sm:$0xff]
    %v1214 = vld [vmem:[#allocation9 + $0x630] sm:$0xff]
    %v1215 = vld [vmem:[#allocation9 + $0x638] sm:$0xff]
    %v1216 = vld [vmem:[#allocation9 + $0x640] sm:$0xff]
    %v1217 = vld [vmem:[#allocation9 + $0x648] sm:$0xff]
    %v1218 = vld [vmem:[#allocation9 + $0x650] sm:$0xff]
    %v1219 = vld [vmem:[#allocation9 + $0x658] sm:$0xff]
    %v1220 = vld [vmem:[#allocation9 + $0x660] sm:$0xff]
    %v1221 = vld [vmem:[#allocation9 + $0x668] sm:$0xff]
    %v1222 = vld [vmem:[#allocation9 + $0x670] sm:$0xff]
    %v1223 = vld [vmem:[#allocation9 + $0x678] sm:$0xff]
    %v1224 = vld [vmem:[#allocation9 + $0x680] sm:$0xff]
    %v1225 = vld [vmem:[#allocation9 + $0x688] sm:$0xff]
    %v1226 = vld [vmem:[#allocation9 + $0x690] sm:$0xff]
    %v1227 = vld [vmem:[#allocation9 + $0x698] sm:$0xff]
    %v1228 = vld [vmem:[#allocation9 + $0x6a0] sm:$0xff]
    %v1229 = vld [vmem:[#allocation9 + $0x6a8] sm:$0xff]
    %v1230 = vld [vmem:[#allocation9 + $0x6b0] sm:$0xff]
    %v1231 = vld [vmem:[#allocation9 + $0x6b8] sm:$0xff]
    %v1232 = vld [vmem:[#allocation9 + $0x6c0] sm:$0xff]
    %v1233 = vld [vmem:[#allocation9 + $0x6c8] sm:$0xff]
    %v1234 = vld [vmem:[#allocation9 + $0x6d0] sm:$0xff]
    %v1235 = vld [vmem:[#allocation9 + $0x6d8] sm:$0xff]
    %v1236 = vld [vmem:[#allocation9 + $0x6e0] sm:$0xff]
    %v1237 = vld [vmem:[#allocation9 + $0x6e8] sm:$0xff]
    %v1238 = vld [vmem:[#allocation9 + $0x6f0] sm:$0xff]
    %v1239 = vld [vmem:[#allocation9 + $0x6f8] sm:$0xff]
    %v1240 = vld [vmem:[#allocation9 + $0x700] sm:$0xff]
    %v1241 = vld [vmem:[#allocation9 + $0x708] sm:$0xff]
    %v1242 = vld [vmem:[#allocation9 + $0x710] sm:$0xff]
    %v1243 = vld [vmem:[#allocation9 + $0x718] sm:$0xff]
    %v1244 = vld [vmem:[#allocation9 + $0x720] sm:$0xff]
    %v1245 = vld [vmem:[#allocation9 + $0x728] sm:$0xff]
    %v1246 = vld [vmem:[#allocation9 + $0x730] sm:$0xff]
    %v1247 = vld [vmem:[#allocation9 + $0x738] sm:$0xff]
    %v1248 = vld [vmem:[#allocation9 + $0x740] sm:$0xff]
    %v1249 = vld [vmem:[#allocation9 + $0x748] sm:$0xff]
    %v1250 = vld [vmem:[#allocation9 + $0x750] sm:$0xff]
    %v1251 = vld [vmem:[#allocation9 + $0x758] sm:$0xff]
    %v1252 = vld [vmem:[#allocation9 + $0x760] sm:$0xff]
    %v1253 = vld [vmem:[#allocation9 + $0x768] sm:$0xff]
    %v1254 = vld [vmem:[#allocation9 + $0x770] sm:$0xff]
    %v1255 = vld [vmem:[#allocation9 + $0x778] sm:$0xff]
    %v1256 = vld [vmem:[#allocation9 + $0x780] sm:$0xff]
    %v1257 = vld [vmem:[#allocation9 + $0x788] sm:$0xff]
    %v1258 = vld [vmem:[#allocation9 + $0x790] sm:$0xff]
    %v1259 = vld [vmem:[#allocation9 + $0x798] sm:$0xff]
    %v1260 = vld [vmem:[#allocation9 + $0x7a0] sm:$0xff]
    %v1261 = vld [vmem:[#allocation9 + $0x7a8] sm:$0xff]
    %v1262 = vld [vmem:[#allocation9 + $0x7b0] sm:$0xff]
    %v1263 = vld [vmem:[#allocation9 + $0x7b8] sm:$0xff]
    %v1264 = vld [vmem:[#allocation9 + $0x7c0] sm:$0xff]
    %v1265 = vld [vmem:[#allocation9 + $0x7c8] sm:$0xff]
    %v1266 = vld [vmem:[#allocation9 + $0x7d0] sm:$0xff]
    %v1267 = vld [vmem:[#allocation9 + $0x7d8] sm:$0xff]
    %v1268 = vld [vmem:[#allocation9 + $0x7e0] sm:$0xff]
    %v1269 = vld [vmem:[#allocation9 + $0x7e8] sm:$0xff]
    %v1270 = vld [vmem:[#allocation9 + $0x7f0] sm:$0xff]
    %v1271 = vld [vmem:[#allocation9 + $0x7f8] sm:$0xff]
    %v1272 = vld [vmem:[#allocation19] sm:$0xff]
    %v1274 = vperm.slane %v1272, 0
    %v1275 = vperm.slane %v1272, 1
    %v1276 = vperm.slane %v1272, 2
    %v1277 = vperm.slane %v1272, 3
    %v1278 = vperm.slane %v1272, 4
    %v1279 = vperm.slane %v1272, 5
    %v1280 = vperm.slane %v1272, 6
    %v1281 = vperm.slane %v1272, 7
    %v1546 = vunpack.c.l.b16 %v1016
    %v1547 = vunpack.c.h.b16 %v1016
    %v1548 = vunpack.c.l.b16 %v1017
    %v1549 = vunpack.c.h.b16 %v1017
    %v1550 = vunpack.c.l.b16 %v1018
    %v1551 = vunpack.c.h.b16 %v1018
    %v1552 = vunpack.c.l.b16 %v1019
    %v1553 = vunpack.c.h.b16 %v1019
    %v1554 = vunpack.c.l.b16 %v1020
    %v1555 = vunpack.c.h.b16 %v1020
    %v1556 = vunpack.c.l.b16 %v1021
    %v1557 = vunpack.c.h.b16 %v1021
    %v1558 = vunpack.c.l.b16 %v1022
    %v1559 = vunpack.c.h.b16 %v1022
    %v1560 = vunpack.c.l.b16 %v1023
    %v1561 = vunpack.c.h.b16 %v1023
    %v1562 = vunpack.c.l.b16 %v1024
    %v1563 = vunpack.c.h.b16 %v1024
    %v1564 = vunpack.c.l.b16 %v1025
    %v1565 = vunpack.c.h.b16 %v1025
    %v1566 = vunpack.c.l.b16 %v1026
    %v1567 = vunpack.c.h.b16 %v1026
    %v1568 = vunpack.c.l.b16 %v1027
    %v1569 = vunpack.c.h.b16 %v1027
    %v1570 = vunpack.c.l.b16 %v1028
    %v1571 = vunpack.c.h.b16 %v1028
    %v1572 = vunpack.c.l.b16 %v1029
    %v1573 = vunpack.c.h.b16 %v1029
    %v1574 = vunpack.c.l.b16 %v1030
    %v1575 = vunpack.c.h.b16 %v1030
    %v1576 = vunpack.c.l.b16 %v1031
    %v1577 = vunpack.c.h.b16 %v1031
    %v1578 = vunpack.c.l.b16 %v1032
    %v1579 = vunpack.c.h.b16 %v1032
    %v1580 = vunpack.c.l.b16 %v1033
    %v1581 = vunpack.c.h.b16 %v1033
    %v1582 = vunpack.c.l.b16 %v1034
    %v1583 = vunpack.c.h.b16 %v1034
    %v1584 = vunpack.c.l.b16 %v1035
    %v1585 = vunpack.c.h.b16 %v1035
    %v1586 = vunpack.c.l.b16 %v1036
    %v1587 = vunpack.c.h.b16 %v1036
    %v1588 = vunpack.c.l.b16 %v1037
    %v1589 = vunpack.c.h.b16 %v1037
    %v1590 = vunpack.c.l.b16 %v1038
    %v1591 = vunpack.c.h.b16 %v1038
    %v1592 = vunpack.c.l.b16 %v1039
    %v1593 = vunpack.c.h.b16 %v1039
    %v1594 = vunpack.c.l.b16 %v1040
    %v1595 = vunpack.c.h.b16 %v1040
    %v1596 = vunpack.c.l.b16 %v1041
    %v1597 = vunpack.c.h.b16 %v1041
    %v1598 = vunpack.c.l.b16 %v1042
    %v1599 = vunpack.c.h.b16 %v1042
    %v1600 = vunpack.c.l.b16 %v1043
    %v1601 = vunpack.c.h.b16 %v1043
    %v1602 = vunpack.c.l.b16 %v1044
    %v1603 = vunpack.c.h.b16 %v1044
    %v1604 = vunpack.c.l.b16 %v1045
    %v1605 = vunpack.c.h.b16 %v1045
    %v1606 = vunpack.c.l.b16 %v1046
    %v1607 = vunpack.c.h.b16 %v1046
    %v1608 = vunpack.c.l.b16 %v1047
    %v1609 = vunpack.c.h.b16 %v1047
    %v1610 = vunpack.c.l.b16 %v1048
    %v1611 = vunpack.c.h.b16 %v1048
    %v1612 = vunpack.c.l.b16 %v1049
    %v1613 = vunpack.c.h.b16 %v1049
    %v1614 = vunpack.c.l.b16 %v1050
    %v1615 = vunpack.c.h.b16 %v1050
    %v1616 = vunpack.c.l.b16 %v1051
    %v1617 = vunpack.c.h.b16 %v1051
    %v1618 = vunpack.c.l.b16 %v1052
    %v1619 = vunpack.c.h.b16 %v1052
    %v1620 = vunpack.c.l.b16 %v1053
    %v1621 = vunpack.c.h.b16 %v1053
    %v1622 = vunpack.c.l.b16 %v1054
    %v1623 = vunpack.c.h.b16 %v1054
    %v1624 = vunpack.c.l.b16 %v1055
    %v1625 = vunpack.c.h.b16 %v1055
    %v1626 = vunpack.c.l.b16 %v1056
    %v1627 = vunpack.c.h.b16 %v1056
    %v1628 = vunpack.c.l.b16 %v1057
    %v1629 = vunpack.c.h.b16 %v1057
    %v1630 = vunpack.c.l.b16 %v1058
    %v1631 = vunpack.c.h.b16 %v1058
    %v1632 = vunpack.c.l.b16 %v1059
    %v1633 = vunpack.c.h.b16 %v1059
    %v1634 = vunpack.c.l.b16 %v1060
    %v1635 = vunpack.c.h.b16 %v1060
    %v1636 = vunpack.c.l.b16 %v1061
    %v1637 = vunpack.c.h.b16 %v1061
    %v1638 = vunpack.c.l.b16 %v1062
    %v1639 = vunpack.c.h.b16 %v1062
    %v1640 = vunpack.c.l.b16 %v1063
    %v1641 = vunpack.c.h.b16 %v1063
    %v1642 = vunpack.c.l.b16 %v1064
    %v1643 = vunpack.c.h.b16 %v1064
    %v1644 = vunpack.c.l.b16 %v1065
    %v1645 = vunpack.c.h.b16 %v1065
    %v1646 = vunpack.c.l.b16 %v1066
    %v1647 = vunpack.c.h.b16 %v1066
    %v1648 = vunpack.c.l.b16 %v1067
    %v1649 = vunpack.c.h.b16 %v1067
    %v1650 = vunpack.c.l.b16 %v1068
    %v1651 = vunpack.c.h.b16 %v1068
    %v1652 = vunpack.c.l.b16 %v1069
    %v1653 = vunpack.c.h.b16 %v1069
    %v1654 = vunpack.c.l.b16 %v1070
    %v1655 = vunpack.c.h.b16 %v1070
    %v1656 = vunpack.c.l.b16 %v1071
    %v1657 = vunpack.c.h.b16 %v1071
    %v1658 = vunpack.c.l.b16 %v1072
    %v1659 = vunpack.c.h.b16 %v1072
    %v1660 = vunpack.c.l.b16 %v1073
    %v1661 = vunpack.c.h.b16 %v1073
    %v1662 = vunpack.c.l.b16 %v1074
    %v1663 = vunpack.c.h.b16 %v1074
    %v1664 = vunpack.c.l.b16 %v1075
    %v1665 = vunpack.c.h.b16 %v1075
    %v1666 = vunpack.c.l.b16 %v1076
    %v1667 = vunpack.c.h.b16 %v1076
    %v1668 = vunpack.c.l.b16 %v1077
    %v1669 = vunpack.c.h.b16 %v1077
    %v1670 = vunpack.c.l.b16 %v1078
    %v1671 = vunpack.c.h.b16 %v1078
    %v1672 = vunpack.c.l.b16 %v1079
    %v1673 = vunpack.c.h.b16 %v1079
    %v1674 = vunpack.c.l.b16 %v1080
    %v1675 = vunpack.c.h.b16 %v1080
    %v1676 = vunpack.c.l.b16 %v1081
    %v1677 = vunpack.c.h.b16 %v1081
    %v1678 = vunpack.c.l.b16 %v1082
    %v1679 = vunpack.c.h.b16 %v1082
    %v1680 = vunpack.c.l.b16 %v1083
    %v1681 = vunpack.c.h.b16 %v1083
    %v1682 = vunpack.c.l.b16 %v1084
    %v1683 = vunpack.c.h.b16 %v1084
    %v1684 = vunpack.c.l.b16 %v1085
    %v1685 = vunpack.c.h.b16 %v1085
    %v1686 = vunpack.c.l.b16 %v1086
    %v1687 = vunpack.c.h.b16 %v1086
    %v1688 = vunpack.c.l.b16 %v1087
    %v1689 = vunpack.c.h.b16 %v1087
    %v1690 = vunpack.c.l.b16 %v1088
    %v1691 = vunpack.c.h.b16 %v1088
    %v1692 = vunpack.c.l.b16 %v1089
    %v1693 = vunpack.c.h.b16 %v1089
    %v1694 = vunpack.c.l.b16 %v1090
    %v1695 = vunpack.c.h.b16 %v1090
    %v1696 = vunpack.c.l.b16 %v1091
    %v1697 = vunpack.c.h.b16 %v1091
    %v1698 = vunpack.c.l.b16 %v1092
    %v1699 = vunpack.c.h.b16 %v1092
    %v1700 = vunpack.c.l.b16 %v1093
    %v1701 = vunpack.c.h.b16 %v1093
    %v1702 = vunpack.c.l.b16 %v1094
    %v1703 = vunpack.c.h.b16 %v1094
    %v1704 = vunpack.c.l.b16 %v1095
    %v1705 = vunpack.c.h.b16 %v1095
    %v1706 = vunpack.c.l.b16 %v1096
    %v1707 = vunpack.c.h.b16 %v1096
    %v1708 = vunpack.c.l.b16 %v1097
    %v1709 = vunpack.c.h.b16 %v1097
    %v1710 = vunpack.c.l.b16 %v1098
    %v1711 = vunpack.c.h.b16 %v1098
    %v1712 = vunpack.c.l.b16 %v1099
    %v1713 = vunpack.c.h.b16 %v1099
    %v1714 = vunpack.c.l.b16 %v1100
    %v1715 = vunpack.c.h.b16 %v1100
    %v1716 = vunpack.c.l.b16 %v1101
    %v1717 = vunpack.c.h.b16 %v1101
    %v1718 = vunpack.c.l.b16 %v1102
    %v1719 = vunpack.c.h.b16 %v1102
    %v1720 = vunpack.c.l.b16 %v1103
    %v1721 = vunpack.c.h.b16 %v1103
    %v1722 = vunpack.c.l.b16 %v1104
    %v1723 = vunpack.c.h.b16 %v1104
    %v1724 = vunpack.c.l.b16 %v1105
    %v1725 = vunpack.c.h.b16 %v1105
    %v1726 = vunpack.c.l.b16 %v1106
    %v1727 = vunpack.c.h.b16 %v1106
    %v1728 = vunpack.c.l.b16 %v1107
    %v1729 = vunpack.c.h.b16 %v1107
    %v1730 = vunpack.c.l.b16 %v1108
    %v1731 = vunpack.c.h.b16 %v1108
    %v1732 = vunpack.c.l.b16 %v1109
    %v1733 = vunpack.c.h.b16 %v1109
    %v1734 = vunpack.c.l.b16 %v1110
    %v1735 = vunpack.c.h.b16 %v1110
    %v1736 = vunpack.c.l.b16 %v1111
    %v1737 = vunpack.c.h.b16 %v1111
    %v1738 = vunpack.c.l.b16 %v1112
    %v1739 = vunpack.c.h.b16 %v1112
    %v1740 = vunpack.c.l.b16 %v1113
    %v1741 = vunpack.c.h.b16 %v1113
    %v1742 = vunpack.c.l.b16 %v1114
    %v1743 = vunpack.c.h.b16 %v1114
    %v1744 = vunpack.c.l.b16 %v1115
    %v1745 = vunpack.c.h.b16 %v1115
    %v1746 = vunpack.c.l.b16 %v1116
    %v1747 = vunpack.c.h.b16 %v1116
    %v1748 = vunpack.c.l.b16 %v1117
    %v1749 = vunpack.c.h.b16 %v1117
    %v1750 = vunpack.c.l.b16 %v1118
    %v1751 = vunpack.c.h.b16 %v1118
    %v1752 = vunpack.c.l.b16 %v1119
    %v1753 = vunpack.c.h.b16 %v1119
    %v1754 = vunpack.c.l.b16 %v1120
    %v1755 = vunpack.c.h.b16 %v1120
    %v1756 = vunpack.c.l.b16 %v1121
    %v1757 = vunpack.c.h.b16 %v1121
    %v1758 = vunpack.c.l.b16 %v1122
    %v1759 = vunpack.c.h.b16 %v1122
    %v1760 = vunpack.c.l.b16 %v1123
    %v1761 = vunpack.c.h.b16 %v1123
    %v1762 = vunpack.c.l.b16 %v1124
    %v1763 = vunpack.c.h.b16 %v1124
    %v1764 = vunpack.c.l.b16 %v1125
    %v1765 = vunpack.c.h.b16 %v1125
    %v1766 = vunpack.c.l.b16 %v1126
    %v1767 = vunpack.c.h.b16 %v1126
    %v1768 = vunpack.c.l.b16 %v1127
    %v1769 = vunpack.c.h.b16 %v1127
    %v1770 = vunpack.c.l.b16 %v1128
    %v1771 = vunpack.c.h.b16 %v1128
    %v1772 = vunpack.c.l.b16 %v1129
    %v1773 = vunpack.c.h.b16 %v1129
    %v1774 = vunpack.c.l.b16 %v1130
    %v1775 = vunpack.c.h.b16 %v1130
    %v1776 = vunpack.c.l.b16 %v1131
    %v1777 = vunpack.c.h.b16 %v1131
    %v1778 = vunpack.c.l.b16 %v1132
    %v1779 = vunpack.c.h.b16 %v1132
    %v1780 = vunpack.c.l.b16 %v1133
    %v1781 = vunpack.c.h.b16 %v1133
    %v1782 = vunpack.c.l.b16 %v1134
    %v1783 = vunpack.c.h.b16 %v1134
    %v1784 = vunpack.c.l.b16 %v1135
    %v1785 = vunpack.c.h.b16 %v1135
    %v1786 = vunpack.c.l.b16 %v1136
    %v1787 = vunpack.c.h.b16 %v1136
    %v1788 = vunpack.c.l.b16 %v1137
    %v1789 = vunpack.c.h.b16 %v1137
    %v1790 = vunpack.c.l.b16 %v1138
    %v1791 = vunpack.c.h.b16 %v1138
    %v1792 = vunpack.c.l.b16 %v1139
    %v1793 = vunpack.c.h.b16 %v1139
    %v1794 = vunpack.c.l.b16 %v1140
    %v1795 = vunpack.c.h.b16 %v1140
    %v1796 = vunpack.c.l.b16 %v1141
    %v1797 = vunpack.c.h.b16 %v1141
    %v1798 = vunpack.c.l.b16 %v1142
    %v1799 = vunpack.c.h.b16 %v1142
    %v1800 = vunpack.c.l.b16 %v1143
    %v1801 = vunpack.c.h.b16 %v1143
    %v1802 = vunpack.c.l.b16 %v1144
    %v1803 = vunpack.c.h.b16 %v1144
    %v1804 = vunpack.c.l.b16 %v1145
    %v1805 = vunpack.c.h.b16 %v1145
    %v1806 = vunpack.c.l.b16 %v1146
    %v1807 = vunpack.c.h.b16 %v1146
    %v1808 = vunpack.c.l.b16 %v1147
    %v1809 = vunpack.c.h.b16 %v1147
    %v1810 = vunpack.c.l.b16 %v1148
    %v1811 = vunpack.c.h.b16 %v1148
    %v1812 = vunpack.c.l.b16 %v1149
    %v1813 = vunpack.c.h.b16 %v1149
    %v1814 = vunpack.c.l.b16 %v1150
    %v1815 = vunpack.c.h.b16 %v1150
    %v1816 = vunpack.c.l.b16 %v1151
    %v1817 = vunpack.c.h.b16 %v1151
    %v1818 = vunpack.c.l.b16 %v1152
    %v1819 = vunpack.c.h.b16 %v1152
    %v1820 = vunpack.c.l.b16 %v1153
    %v1821 = vunpack.c.h.b16 %v1153
    %v1822 = vunpack.c.l.b16 %v1154
    %v1823 = vunpack.c.h.b16 %v1154
    %v1824 = vunpack.c.l.b16 %v1155
    %v1825 = vunpack.c.h.b16 %v1155
    %v1826 = vunpack.c.l.b16 %v1156
    %v1827 = vunpack.c.h.b16 %v1156
    %v1828 = vunpack.c.l.b16 %v1157
    %v1829 = vunpack.c.h.b16 %v1157
    %v1830 = vunpack.c.l.b16 %v1158
    %v1831 = vunpack.c.h.b16 %v1158
    %v1832 = vunpack.c.l.b16 %v1159
    %v1833 = vunpack.c.h.b16 %v1159
    %v1834 = vunpack.c.l.b16 %v1160
    %v1835 = vunpack.c.h.b16 %v1160
    %v1836 = vunpack.c.l.b16 %v1161
    %v1837 = vunpack.c.h.b16 %v1161
    %v1838 = vunpack.c.l.b16 %v1162
    %v1839 = vunpack.c.h.b16 %v1162
    %v1840 = vunpack.c.l.b16 %v1163
    %v1841 = vunpack.c.h.b16 %v1163
    %v1842 = vunpack.c.l.b16 %v1164
    %v1843 = vunpack.c.h.b16 %v1164
    %v1844 = vunpack.c.l.b16 %v1165
    %v1845 = vunpack.c.h.b16 %v1165
    %v1846 = vunpack.c.l.b16 %v1166
    %v1847 = vunpack.c.h.b16 %v1166
    %v1848 = vunpack.c.l.b16 %v1167
    %v1849 = vunpack.c.h.b16 %v1167
    %v1850 = vunpack.c.l.b16 %v1168
    %v1851 = vunpack.c.h.b16 %v1168
    %v1852 = vunpack.c.l.b16 %v1169
    %v1853 = vunpack.c.h.b16 %v1169
    %v1854 = vunpack.c.l.b16 %v1170
    %v1855 = vunpack.c.h.b16 %v1170
    %v1856 = vunpack.c.l.b16 %v1171
    %v1857 = vunpack.c.h.b16 %v1171
    %v1858 = vunpack.c.l.b16 %v1172
    %v1859 = vunpack.c.h.b16 %v1172
    %v1860 = vunpack.c.l.b16 %v1173
    %v1861 = vunpack.c.h.b16 %v1173
    %v1862 = vunpack.c.l.b16 %v1174
    %v1863 = vunpack.c.h.b16 %v1174
    %v1864 = vunpack.c.l.b16 %v1175
    %v1865 = vunpack.c.h.b16 %v1175
    %v1866 = vunpack.c.l.b16 %v1176
    %v1867 = vunpack.c.h.b16 %v1176
    %v1868 = vunpack.c.l.b16 %v1177
    %v1869 = vunpack.c.h.b16 %v1177
    %v1870 = vunpack.c.l.b16 %v1178
    %v1871 = vunpack.c.h.b16 %v1178
    %v1872 = vunpack.c.l.b16 %v1179
    %v1873 = vunpack.c.h.b16 %v1179
    %v1874 = vunpack.c.l.b16 %v1180
    %v1875 = vunpack.c.h.b16 %v1180
    %v1876 = vunpack.c.l.b16 %v1181
    %v1877 = vunpack.c.h.b16 %v1181
    %v1878 = vunpack.c.l.b16 %v1182
    %v1879 = vunpack.c.h.b16 %v1182
    %v1880 = vunpack.c.l.b16 %v1183
    %v1881 = vunpack.c.h.b16 %v1183
    %v1882 = vunpack.c.l.b16 %v1184
    %v1883 = vunpack.c.h.b16 %v1184
    %v1884 = vunpack.c.l.b16 %v1185
    %v1885 = vunpack.c.h.b16 %v1185
    %v1886 = vunpack.c.l.b16 %v1186
    %v1887 = vunpack.c.h.b16 %v1186
    %v1888 = vunpack.c.l.b16 %v1187
    %v1889 = vunpack.c.h.b16 %v1187
    %v1890 = vunpack.c.l.b16 %v1188
    %v1891 = vunpack.c.h.b16 %v1188
    %v1892 = vunpack.c.l.b16 %v1189
    %v1893 = vunpack.c.h.b16 %v1189
    %v1894 = vunpack.c.l.b16 %v1190
    %v1895 = vunpack.c.h.b16 %v1190
    %v1896 = vunpack.c.l.b16 %v1191
    %v1897 = vunpack.c.h.b16 %v1191
    %v1898 = vunpack.c.l.b16 %v1192
    %v1899 = vunpack.c.h.b16 %v1192
    %v1900 = vunpack.c.l.b16 %v1193
    %v1901 = vunpack.c.h.b16 %v1193
    %v1902 = vunpack.c.l.b16 %v1194
    %v1903 = vunpack.c.h.b16 %v1194
    %v1904 = vunpack.c.l.b16 %v1195
    %v1905 = vunpack.c.h.b16 %v1195
    %v1906 = vunpack.c.l.b16 %v1196
    %v1907 = vunpack.c.h.b16 %v1196
    %v1908 = vunpack.c.l.b16 %v1197
    %v1909 = vunpack.c.h.b16 %v1197
    %v1910 = vunpack.c.l.b16 %v1198
    %v1911 = vunpack.c.h.b16 %v1198
    %v1912 = vunpack.c.l.b16 %v1199
    %v1913 = vunpack.c.h.b16 %v1199
    %v1914 = vunpack.c.l.b16 %v1200
    %v1915 = vunpack.c.h.b16 %v1200
    %v1916 = vunpack.c.l.b16 %v1201
    %v1917 = vunpack.c.h.b16 %v1201
    %v1918 = vunpack.c.l.b16 %v1202
    %v1919 = vunpack.c.h.b16 %v1202
    %v1920 = vunpack.c.l.b16 %v1203
    %v1921 = vunpack.c.h.b16 %v1203
    %v1922 = vunpack.c.l.b16 %v1204
    %v1923 = vunpack.c.h.b16 %v1204
    %v1924 = vunpack.c.l.b16 %v1205
    %v1925 = vunpack.c.h.b16 %v1205
    %v1926 = vunpack.c.l.b16 %v1206
    %v1927 = vunpack.c.h.b16 %v1206
    %v1928 = vunpack.c.l.b16 %v1207
    %v1929 = vunpack.c.h.b16 %v1207
    %v1930 = vunpack.c.l.b16 %v1208
    %v1931 = vunpack.c.h.b16 %v1208
    %v1932 = vunpack.c.l.b16 %v1209
    %v1933 = vunpack.c.h.b16 %v1209
    %v1934 = vunpack.c.l.b16 %v1210
    %v1935 = vunpack.c.h.b16 %v1210
    %v1936 = vunpack.c.l.b16 %v1211
    %v1937 = vunpack.c.h.b16 %v1211
    %v1938 = vunpack.c.l.b16 %v1212
    %v1939 = vunpack.c.h.b16 %v1212
    %v1940 = vunpack.c.l.b16 %v1213
    %v1941 = vunpack.c.h.b16 %v1213
    %v1942 = vunpack.c.l.b16 %v1214
    %v1943 = vunpack.c.h.b16 %v1214
    %v1944 = vunpack.c.l.b16 %v1215
    %v1945 = vunpack.c.h.b16 %v1215
    %v1946 = vunpack.c.l.b16 %v1216
    %v1947 = vunpack.c.h.b16 %v1216
    %v1948 = vunpack.c.l.b16 %v1217
    %v1949 = vunpack.c.h.b16 %v1217
    %v1950 = vunpack.c.l.b16 %v1218
    %v1951 = vunpack.c.h.b16 %v1218
    %v1952 = vunpack.c.l.b16 %v1219
    %v1953 = vunpack.c.h.b16 %v1219
    %v1954 = vunpack.c.l.b16 %v1220
    %v1955 = vunpack.c.h.b16 %v1220
    %v1956 = vunpack.c.l.b16 %v1221
    %v1957 = vunpack.c.h.b16 %v1221
    %v1958 = vunpack.c.l.b16 %v1222
    %v1959 = vunpack.c.h.b16 %v1222
    %v1960 = vunpack.c.l.b16 %v1223
    %v1961 = vunpack.c.h.b16 %v1223
    %v1962 = vunpack.c.l.b16 %v1224
    %v1963 = vunpack.c.h.b16 %v1224
    %v1964 = vunpack.c.l.b16 %v1225
    %v1965 = vunpack.c.h.b16 %v1225
    %v1966 = vunpack.c.l.b16 %v1226
    %v1967 = vunpack.c.h.b16 %v1226
    %v1968 = vunpack.c.l.b16 %v1227
    %v1969 = vunpack.c.h.b16 %v1227
    %v1970 = vunpack.c.l.b16 %v1228
    %v1971 = vunpack.c.h.b16 %v1228
    %v1972 = vunpack.c.l.b16 %v1229
    %v1973 = vunpack.c.h.b16 %v1229
    %v1974 = vunpack.c.l.b16 %v1230
    %v1975 = vunpack.c.h.b16 %v1230
    %v1976 = vunpack.c.l.b16 %v1231
    %v1977 = vunpack.c.h.b16 %v1231
    %v1978 = vunpack.c.l.b16 %v1232
    %v1979 = vunpack.c.h.b16 %v1232
    %v1980 = vunpack.c.l.b16 %v1233
    %v1981 = vunpack.c.h.b16 %v1233
    %v1982 = vunpack.c.l.b16 %v1234
    %v1983 = vunpack.c.h.b16 %v1234
    %v1984 = vunpack.c.l.b16 %v1235
    %v1985 = vunpack.c.h.b16 %v1235
    %v1986 = vunpack.c.l.b16 %v1236
    %v1987 = vunpack.c.h.b16 %v1236
    %v1988 = vunpack.c.l.b16 %v1237
    %v1989 = vunpack.c.h.b16 %v1237
    %v1990 = vunpack.c.l.b16 %v1238
    %v1991 = vunpack.c.h.b16 %v1238
    %v1992 = vunpack.c.l.b16 %v1239
    %v1993 = vunpack.c.h.b16 %v1239
    %v1994 = vunpack.c.l.b16 %v1240
    %v1995 = vunpack.c.h.b16 %v1240
    %v1996 = vunpack.c.l.b16 %v1241
    %v1997 = vunpack.c.h.b16 %v1241
    %v1998 = vunpack.c.l.b16 %v1242
    %v1999 = vunpack.c.h.b16 %v1242
    %v2000 = vunpack.c.l.b16 %v1243
    %v2001 = vunpack.c.h.b16 %v1243
    %v2002 = vunpack.c.l.b16 %v1244
    %v2003 = vunpack.c.h.b16 %v1244
    %v2004 = vunpack.c.l.b16 %v1245
    %v2005 = vunpack.c.h.b16 %v1245
    %v2006 = vunpack.c.l.b16 %v1246
    %v2007 = vunpack.c.h.b16 %v1246
    %v2008 = vunpack.c.l.b16 %v1247
    %v2009 = vunpack.c.h.b16 %v1247
    %v2010 = vunpack.c.l.b16 %v1248
    %v2011 = vunpack.c.h.b16 %v1248
    %v2012 = vunpack.c.l.b16 %v1249
    %v2013 = vunpack.c.h.b16 %v1249
    %v2014 = vunpack.c.l.b16 %v1250
    %v2015 = vunpack.c.h.b16 %v1250
    %v2016 = vunpack.c.l.b16 %v1251
    %v2017 = vunpack.c.h.b16 %v1251
    %v2018 = vunpack.c.l.b16 %v1252
    %v2019 = vunpack.c.h.b16 %v1252
    %v2020 = vunpack.c.l.b16 %v1253
    %v2021 = vunpack.c.h.b16 %v1253
    %v2022 = vunpack.c.l.b16 %v1254
    %v2023 = vunpack.c.h.b16 %v1254
    %v2024 = vunpack.c.l.b16 %v1255
    %v2025 = vunpack.c.h.b16 %v1255
    %v2026 = vunpack.c.l.b16 %v1256
    %v2027 = vunpack.c.h.b16 %v1256
    %v2028 = vunpack.c.l.b16 %v1257
    %v2029 = vunpack.c.h.b16 %v1257
    %v2030 = vunpack.c.l.b16 %v1258
    %v2031 = vunpack.c.h.b16 %v1258
    %v2032 = vunpack.c.l.b16 %v1259
    %v2033 = vunpack.c.h.b16 %v1259
    %v2034 = vunpack.c.l.b16 %v1260
    %v2035 = vunpack.c.h.b16 %v1260
    %v2036 = vunpack.c.l.b16 %v1261
    %v2037 = vunpack.c.h.b16 %v1261
    %v2038 = vunpack.c.l.b16 %v1262
    %v2039 = vunpack.c.h.b16 %v1262
    %v2040 = vunpack.c.l.b16 %v1263
    %v2041 = vunpack.c.h.b16 %v1263
    %v2042 = vunpack.c.l.b16 %v1264
    %v2043 = vunpack.c.h.b16 %v1264
    %v2044 = vunpack.c.l.b16 %v1265
    %v2045 = vunpack.c.h.b16 %v1265
    %v2046 = vunpack.c.l.b16 %v1266
    %v2047 = vunpack.c.h.b16 %v1266
    %v2048 = vunpack.c.l.b16 %v1267
    %v2049 = vunpack.c.h.b16 %v1267
    %v2050 = vunpack.c.l.b16 %v1268
    %v2051 = vunpack.c.h.b16 %v1268
    %v2052 = vunpack.c.l.b16 %v1269
    %v2053 = vunpack.c.h.b16 %v1269
    %v2054 = vunpack.c.l.b16 %v1270
    %v2055 = vunpack.c.h.b16 %v1270
    %v2056 = vunpack.c.l.b16 %v1271
    %v2057 = vunpack.c.h.b16 %v1271
    %v2058 = vpack.c.b16 %v1554, %v1546
    %v2059 = vpack.c.b16 %v1555, %v1547
    %v2060 = vpack.c.b16 %v1556, %v1548
    %v2061 = vpack.c.b16 %v1557, %v1549
    %v2062 = vpack.c.b16 %v1558, %v1550
    %v2063 = vpack.c.b16 %v1559, %v1551
    %v2064 = vpack.c.b16 %v1560, %v1552
    %v2065 = vpack.c.b16 %v1561, %v1553
    %v2066 = vpack.c.b16 %v1570, %v1562
    %v2067 = vpack.c.b16 %v1571, %v1563
    %v2068 = vpack.c.b16 %v1572, %v1564
    %v2069 = vpack.c.b16 %v1573, %v1565
    %v2070 = vpack.c.b16 %v1574, %v1566
    %v2071 = vpack.c.b16 %v1575, %v1567
    %v2072 = vpack.c.b16 %v1576, %v1568
    %v2073 = vpack.c.b16 %v1577, %v1569
    %v2074 = vpack.c.b16 %v1586, %v1578
    %v2075 = vpack.c.b16 %v1587, %v1579
    %v2076 = vpack.c.b16 %v1588, %v1580
    %v2077 = vpack.c.b16 %v1589, %v1581
    %v2078 = vpack.c.b16 %v1590, %v1582
    %v2079 = vpack.c.b16 %v1591, %v1583
    %v2080 = vpack.c.b16 %v1592, %v1584
    %v2081 = vpack.c.b16 %v1593, %v1585
    %v2082 = vpack.c.b16 %v1602, %v1594
    %v2083 = vpack.c.b16 %v1603, %v1595
    %v2084 = vpack.c.b16 %v1604, %v1596
    %v2085 = vpack.c.b16 %v1605, %v1597
    %v2086 = vpack.c.b16 %v1606, %v1598
    %v2087 = vpack.c.b16 %v1607, %v1599
    %v2088 = vpack.c.b16 %v1608, %v1600
    %v2089 = vpack.c.b16 %v1609, %v1601
    %v2090 = vpack.c.b16 %v1618, %v1610
    %v2091 = vpack.c.b16 %v1619, %v1611
    %v2092 = vpack.c.b16 %v1620, %v1612
    %v2093 = vpack.c.b16 %v1621, %v1613
    %v2094 = vpack.c.b16 %v1622, %v1614
    %v2095 = vpack.c.b16 %v1623, %v1615
    %v2096 = vpack.c.b16 %v1624, %v1616
    %v2097 = vpack.c.b16 %v1625, %v1617
    %v2098 = vpack.c.b16 %v1634, %v1626
    %v2099 = vpack.c.b16 %v1635, %v1627
    %v2100 = vpack.c.b16 %v1636, %v1628
    %v2101 = vpack.c.b16 %v1637, %v1629
    %v2102 = vpack.c.b16 %v1638, %v1630
    %v2103 = vpack.c.b16 %v1639, %v1631
    %v2104 = vpack.c.b16 %v1640, %v1632
    %v2105 = vpack.c.b16 %v1641, %v1633
    %v2106 = vpack.c.b16 %v1650, %v1642
    %v2107 = vpack.c.b16 %v1651, %v1643
    %v2108 = vpack.c.b16 %v1652, %v1644
    %v2109 = vpack.c.b16 %v1653, %v1645
    %v2110 = vpack.c.b16 %v1654, %v1646
    %v2111 = vpack.c.b16 %v1655, %v1647
    %v2112 = vpack.c.b16 %v1656, %v1648
    %v2113 = vpack.c.b16 %v1657, %v1649
    %v2114 = vpack.c.b16 %v1666, %v1658
    %v2115 = vpack.c.b16 %v1667, %v1659
    %v2116 = vpack.c.b16 %v1668, %v1660
    %v2117 = vpack.c.b16 %v1669, %v1661
    %v2118 = vpack.c.b16 %v1670, %v1662
    %v2119 = vpack.c.b16 %v1671, %v1663
    %v2120 = vpack.c.b16 %v1672, %v1664
    %v2121 = vpack.c.b16 %v1673, %v1665
    %v2122 = vpack.c.b16 %v1682, %v1674
    %v2123 = vpack.c.b16 %v1683, %v1675
    %v2124 = vpack.c.b16 %v1684, %v1676
    %v2125 = vpack.c.b16 %v1685, %v1677
    %v2126 = vpack.c.b16 %v1686, %v1678
    %v2127 = vpack.c.b16 %v1687, %v1679
    %v2128 = vpack.c.b16 %v1688, %v1680
    %v2129 = vpack.c.b16 %v1689, %v1681
    %v2130 = vpack.c.b16 %v1698, %v1690
    %v2131 = vpack.c.b16 %v1699, %v1691
    %v2132 = vpack.c.b16 %v1700, %v1692
    %v2133 = vpack.c.b16 %v1701, %v1693
    %v2134 = vpack.c.b16 %v1702, %v1694
    %v2135 = vpack.c.b16 %v1703, %v1695
    %v2136 = vpack.c.b16 %v1704, %v1696
    %v2137 = vpack.c.b16 %v1705, %v1697
    %v2138 = vpack.c.b16 %v1714, %v1706
    %v2139 = vpack.c.b16 %v1715, %v1707
    %v2140 = vpack.c.b16 %v1716, %v1708
    %v2141 = vpack.c.b16 %v1717, %v1709
    %v2142 = vpack.c.b16 %v1718, %v1710
    %v2143 = vpack.c.b16 %v1719, %v1711
    %v2144 = vpack.c.b16 %v1720, %v1712
    %v2145 = vpack.c.b16 %v1721, %v1713
    %v2146 = vpack.c.b16 %v1730, %v1722
    %v2147 = vpack.c.b16 %v1731, %v1723
    %v2148 = vpack.c.b16 %v1732, %v1724
    %v2149 = vpack.c.b16 %v1733, %v1725
    %v2150 = vpack.c.b16 %v1734, %v1726
    %v2151 = vpack.c.b16 %v1735, %v1727
    %v2152 = vpack.c.b16 %v1736, %v1728
    %v2153 = vpack.c.b16 %v1737, %v1729
    %v2154 = vpack.c.b16 %v1746, %v1738
    %v2155 = vpack.c.b16 %v1747, %v1739
    %v2156 = vpack.c.b16 %v1748, %v1740
    %v2157 = vpack.c.b16 %v1749, %v1741
    %v2158 = vpack.c.b16 %v1750, %v1742
    %v2159 = vpack.c.b16 %v1751, %v1743
    %v2160 = vpack.c.b16 %v1752, %v1744
    %v2161 = vpack.c.b16 %v1753, %v1745
    %v2162 = vpack.c.b16 %v1762, %v1754
    %v2163 = vpack.c.b16 %v1763, %v1755
    %v2164 = vpack.c.b16 %v1764, %v1756
    %v2165 = vpack.c.b16 %v1765, %v1757
    %v2166 = vpack.c.b16 %v1766, %v1758
    %v2167 = vpack.c.b16 %v1767, %v1759
    %v2168 = vpack.c.b16 %v1768, %v1760
    %v2169 = vpack.c.b16 %v1769, %v1761
    %v2170 = vpack.c.b16 %v1778, %v1770
    %v2171 = vpack.c.b16 %v1779, %v1771
    %v2172 = vpack.c.b16 %v1780, %v1772
    %v2173 = vpack.c.b16 %v1781, %v1773
    %v2174 = vpack.c.b16 %v1782, %v1774
    %v2175 = vpack.c.b16 %v1783, %v1775
    %v2176 = vpack.c.b16 %v1784, %v1776
    %v2177 = vpack.c.b16 %v1785, %v1777
    %v2178 = vpack.c.b16 %v1794, %v1786
    %v2179 = vpack.c.b16 %v1795, %v1787
    %v2180 = vpack.c.b16 %v1796, %v1788
    %v2181 = vpack.c.b16 %v1797, %v1789
    %v2182 = vpack.c.b16 %v1798, %v1790
    %v2183 = vpack.c.b16 %v1799, %v1791
    %v2184 = vpack.c.b16 %v1800, %v1792
    %v2185 = vpack.c.b16 %v1801, %v1793
    %v2186 = vpack.c.b16 %v1810, %v1802
    %v2187 = vpack.c.b16 %v1811, %v1803
    %v2188 = vpack.c.b16 %v1812, %v1804
    %v2189 = vpack.c.b16 %v1813, %v1805
    %v2190 = vpack.c.b16 %v1814, %v1806
    %v2191 = vpack.c.b16 %v1815, %v1807
    %v2192 = vpack.c.b16 %v1816, %v1808
    %v2193 = vpack.c.b16 %v1817, %v1809
    %v2194 = vpack.c.b16 %v1826, %v1818
    %v2195 = vpack.c.b16 %v1827, %v1819
    %v2196 = vpack.c.b16 %v1828, %v1820
    %v2197 = vpack.c.b16 %v1829, %v1821
    %v2198 = vpack.c.b16 %v1830, %v1822
    %v2199 = vpack.c.b16 %v1831, %v1823
    %v2200 = vpack.c.b16 %v1832, %v1824
    %v2201 = vpack.c.b16 %v1833, %v1825
    %v2202 = vpack.c.b16 %v1842, %v1834
    %v2203 = vpack.c.b16 %v1843, %v1835
    %v2204 = vpack.c.b16 %v1844, %v1836
    %v2205 = vpack.c.b16 %v1845, %v1837
    %v2206 = vpack.c.b16 %v1846, %v1838
    %v2207 = vpack.c.b16 %v1847, %v1839
    %v2208 = vpack.c.b16 %v1848, %v1840
    %v2209 = vpack.c.b16 %v1849, %v1841
    %v2210 = vpack.c.b16 %v1858, %v1850
    %v2211 = vpack.c.b16 %v1859, %v1851
    %v2212 = vpack.c.b16 %v1860, %v1852
    %v2213 = vpack.c.b16 %v1861, %v1853
    %v2214 = vpack.c.b16 %v1862, %v1854
    %v2215 = vpack.c.b16 %v1863, %v1855
    %v2216 = vpack.c.b16 %v1864, %v1856
    %v2217 = vpack.c.b16 %v1865, %v1857
    %v2218 = vpack.c.b16 %v1874, %v1866
    %v2219 = vpack.c.b16 %v1875, %v1867
    %v2220 = vpack.c.b16 %v1876, %v1868
    %v2221 = vpack.c.b16 %v1877, %v1869
    %v2222 = vpack.c.b16 %v1878, %v1870
    %v2223 = vpack.c.b16 %v1879, %v1871
    %v2224 = vpack.c.b16 %v1880, %v1872
    %v2225 = vpack.c.b16 %v1881, %v1873
    %v2226 = vpack.c.b16 %v1890, %v1882
    %v2227 = vpack.c.b16 %v1891, %v1883
    %v2228 = vpack.c.b16 %v1892, %v1884
    %v2229 = vpack.c.b16 %v1893, %v1885
    %v2230 = vpack.c.b16 %v1894, %v1886
    %v2231 = vpack.c.b16 %v1895, %v1887
    %v2232 = vpack.c.b16 %v1896, %v1888
    %v2233 = vpack.c.b16 %v1897, %v1889
    %v2234 = vpack.c.b16 %v1906, %v1898
    %v2235 = vpack.c.b16 %v1907, %v1899
    %v2236 = vpack.c.b16 %v1908, %v1900
    %v2237 = vpack.c.b16 %v1909, %v1901
    %v2238 = vpack.c.b16 %v1910, %v1902
    %v2239 = vpack.c.b16 %v1911, %v1903
    %v2240 = vpack.c.b16 %v1912, %v1904
    %v2241 = vpack.c.b16 %v1913, %v1905
    %v2242 = vpack.c.b16 %v1922, %v1914
    %v2243 = vpack.c.b16 %v1923, %v1915
    %v2244 = vpack.c.b16 %v1924, %v1916
    %v2245 = vpack.c.b16 %v1925, %v1917
    %v2246 = vpack.c.b16 %v1926, %v1918
    %v2247 = vpack.c.b16 %v1927, %v1919
    %v2248 = vpack.c.b16 %v1928, %v1920
    %v2249 = vpack.c.b16 %v1929, %v1921
    %v2250 = vpack.c.b16 %v1938, %v1930
    %v2251 = vpack.c.b16 %v1939, %v1931
    %v2252 = vpack.c.b16 %v1940, %v1932
    %v2253 = vpack.c.b16 %v1941, %v1933
    %v2254 = vpack.c.b16 %v1942, %v1934
    %v2255 = vpack.c.b16 %v1943, %v1935
    %v2256 = vpack.c.b16 %v1944, %v1936
    %v2257 = vpack.c.b16 %v1945, %v1937
    %v2258 = vpack.c.b16 %v1954, %v1946
    %v2259 = vpack.c.b16 %v1955, %v1947
    %v2260 = vpack.c.b16 %v1956, %v1948
    %v2261 = vpack.c.b16 %v1957, %v1949
    %v2262 = vpack.c.b16 %v1958, %v1950
    %v2263 = vpack.c.b16 %v1959, %v1951
    %v2264 = vpack.c.b16 %v1960, %v1952
    %v2265 = vpack.c.b16 %v1961, %v1953
    %v2266 = vpack.c.b16 %v1970, %v1962
    %v2267 = vpack.c.b16 %v1971, %v1963
    %v2268 = vpack.c.b16 %v1972, %v1964
    %v2269 = vpack.c.b16 %v1973, %v1965
    %v2270 = vpack.c.b16 %v1974, %v1966
    %v2271 = vpack.c.b16 %v1975, %v1967
    %v2272 = vpack.c.b16 %v1976, %v1968
    %v2273 = vpack.c.b16 %v1977, %v1969
    %v2274 = vpack.c.b16 %v1986, %v1978
    %v2275 = vpack.c.b16 %v1987, %v1979
    %v2276 = vpack.c.b16 %v1988, %v1980
    %v2277 = vpack.c.b16 %v1989, %v1981
    %v2278 = vpack.c.b16 %v1990, %v1982
    %v2279 = vpack.c.b16 %v1991, %v1983
    %v2280 = vpack.c.b16 %v1992, %v1984
    %v2281 = vpack.c.b16 %v1993, %v1985
    %v2282 = vpack.c.b16 %v2002, %v1994
    %v2283 = vpack.c.b16 %v2003, %v1995
    %v2284 = vpack.c.b16 %v2004, %v1996
    %v2285 = vpack.c.b16 %v2005, %v1997
    %v2286 = vpack.c.b16 %v2006, %v1998
    %v2287 = vpack.c.b16 %v2007, %v1999
    %v2288 = vpack.c.b16 %v2008, %v2000
    %v2289 = vpack.c.b16 %v2009, %v2001
    %v2290 = vpack.c.b16 %v2018, %v2010
    %v2291 = vpack.c.b16 %v2019, %v2011
    %v2292 = vpack.c.b16 %v2020, %v2012
    %v2293 = vpack.c.b16 %v2021, %v2013
    %v2294 = vpack.c.b16 %v2022, %v2014
    %v2295 = vpack.c.b16 %v2023, %v2015
    %v2296 = vpack.c.b16 %v2024, %v2016
    %v2297 = vpack.c.b16 %v2025, %v2017
    %v2298 = vpack.c.b16 %v2034, %v2026
    %v2299 = vpack.c.b16 %v2035, %v2027
    %v2300 = vpack.c.b16 %v2036, %v2028
    %v2301 = vpack.c.b16 %v2037, %v2029
    %v2302 = vpack.c.b16 %v2038, %v2030
    %v2303 = vpack.c.b16 %v2039, %v2031
    %v2304 = vpack.c.b16 %v2040, %v2032
    %v2305 = vpack.c.b16 %v2041, %v2033
    %v2306 = vpack.c.b16 %v2050, %v2042
    %v2307 = vpack.c.b16 %v2051, %v2043
    %v2308 = vpack.c.b16 %v2052, %v2044
    %v2309 = vpack.c.b16 %v2053, %v2045
    %v2310 = vpack.c.b16 %v2054, %v2046
    %v2311 = vpack.c.b16 %v2055, %v2047
    %v2312 = vpack.c.b16 %v2056, %v2048
    %v2313 = vpack.c.b16 %v2057, %v2049
    %2570 = vmatpush.bf16.msra.mxu0 %v2114
    %2571 = vmatpush.bf16.msra.mxu0 %v2106
    %2572 = vmatpush.bf16.msra.mxu0 %v2098
    %2573 = vmatpush.bf16.msra.mxu0 %v2090
    %2574 = vmatpush.bf16.msra.mxu0 %v2082
    %2575 = vmatpush.bf16.msra.mxu0 %v2074
    %2576 = vmatpush.bf16.msra.mxu0 %v2066
    %2577 = vmatpush.bf16.msra.mxu0 %v2058
    %2578 = vmatmul.bf16.gmra.mxu0 %v1012
    %v2579 = vpop.f32.mrf.mxu0
    %v2580 = vadd.f32 %v1274, %v2579
    %v2581 = vpop.f32.mrf.mxu0
    %v2582 = vadd.f32 %v1274, %v2581
    %2583 = vdwg.mxu0
    %2584 = vmatpush.bf16.msra.mxu0 %v2178
    %2585 = vmatpush.bf16.msra.mxu0 %v2170
    %2586 = vmatpush.bf16.msra.mxu0 %v2162
    %2587 = vmatpush.bf16.msra.mxu0 %v2154
    %2588 = vmatpush.bf16.msra.mxu0 %v2146
    %2589 = vmatpush.bf16.msra.mxu0 %v2138
    %2590 = vmatpush.bf16.msra.mxu0 %v2130
    %2591 = vmatpush.bf16.msra.mxu0 %v2122
    %2592 = vmatmul.bf16.gmra.mxu0 %v1013
    %v2593 = vpop.f32.mrf.mxu0
    %v2594 = vadd.f32 %v2580, %v2593
    %v2595 = vpop.f32.mrf.mxu0
    %v2596 = vadd.f32 %v2582, %v2595
    %2597 = vdwg.mxu0
    %2598 = vmatpush.bf16.msra.mxu0 %v2242
    %2599 = vmatpush.bf16.msra.mxu0 %v2234
    %2600 = vmatpush.bf16.msra.mxu0 %v2226
    %2601 = vmatpush.bf16.msra.mxu0 %v2218
    %2602 = vmatpush.bf16.msra.mxu0 %v2210
    %2603 = vmatpush.bf16.msra.mxu0 %v2202
    %2604 = vmatpush.bf16.msra.mxu0 %v2194
    %2605 = vmatpush.bf16.msra.mxu0 %v2186
    %2606 = vmatmul.bf16.gmra.mxu0 %v1014
    %v2607 = vpop.f32.mrf.mxu0
    %v2608 = vadd.f32 %v2594, %v2607
    %v2609 = vpop.f32.mrf.mxu0
    %v2610 = vadd.f32 %v2596, %v2609
    %2611 = vdwg.mxu0
    %2612 = vmatpush.bf16.msra.mxu0 %v2306
    %2613 = vmatpush.bf16.msra.mxu0 %v2298
    %2614 = vmatpush.bf16.msra.mxu0 %v2290
    %2615 = vmatpush.bf16.msra.mxu0 %v2282
    %2616 = vmatpush.bf16.msra.mxu0 %v2274
    %2617 = vmatpush.bf16.msra.mxu0 %v2266
    %2618 = vmatpush.bf16.msra.mxu0 %v2258
    %2619 = vmatpush.bf16.msra.mxu0 %v2250
    %2620 = vmatmul.bf16.gmra.mxu0 %v1015
    %v2621 = vpop.f32.mrf.mxu0
    %v2622 = vadd.f32 %v2608, %v2621
    %v2623 = vpop.f32.mrf.mxu0
    %v2624 = vadd.f32 %v2610, %v2623
    %2625 = vdwg.mxu0
    %2626 = vmatpush.bf16.msra.mxu0 %v2115
    %2627 = vmatpush.bf16.msra.mxu0 %v2107
    %2628 = vmatpush.bf16.msra.mxu0 %v2099
    %2629 = vmatpush.bf16.msra.mxu0 %v2091
    %2630 = vmatpush.bf16.msra.mxu0 %v2083
    %2631 = vmatpush.bf16.msra.mxu0 %v2075
    %2632 = vmatpush.bf16.msra.mxu0 %v2067
    %2633 = vmatpush.bf16.msra.mxu0 %v2059
    %2634 = vmatmul.bf16.gmra.mxu0 %v1012
    %v2635 = vpop.f32.mrf.mxu0
    %v2636 = vadd.f32 %v1275, %v2635
    %v2637 = vpop.f32.mrf.mxu0
    %v2638 = vadd.f32 %v1275, %v2637
    %2639 = vdwg.mxu0
    %2640 = vmatpush.bf16.msra.mxu0 %v2179
    %2641 = vmatpush.bf16.msra.mxu0 %v2171
    %2642 = vmatpush.bf16.msra.mxu0 %v2163
    %2643 = vmatpush.bf16.msra.mxu0 %v2155
    %2644 = vmatpush.bf16.msra.mxu0 %v2147
    %2645 = vmatpush.bf16.msra.mxu0 %v2139
    %2646 = vmatpush.bf16.msra.mxu0 %v2131
    %2647 = vmatpush.bf16.msra.mxu0 %v2123
    %2648 = vmatmul.bf16.gmra.mxu0 %v1013
    %v2649 = vpop.f32.mrf.mxu0
    %v2650 = vadd.f32 %v2636, %v2649
    %v2651 = vpop.f32.mrf.mxu0
    %v2652 = vadd.f32 %v2638, %v2651
    %2653 = vdwg.mxu0
    %2654 = vmatpush.bf16.msra.mxu0 %v2243
    %2655 = vmatpush.bf16.msra.mxu0 %v2235
    %2656 = vmatpush.bf16.msra.mxu0 %v2227
    %2657 = vmatpush.bf16.msra.mxu0 %v2219
    %2658 = vmatpush.bf16.msra.mxu0 %v2211
    %2659 = vmatpush.bf16.msra.mxu0 %v2203
    %2660 = vmatpush.bf16.msra.mxu0 %v2195
    %2661 = vmatpush.bf16.msra.mxu0 %v2187
    %2662 = vmatmul.bf16.gmra.mxu0 %v1014
    %v2663 = vpop.f32.mrf.mxu0
    %v2664 = vadd.f32 %v2650, %v2663
    %v2665 = vpop.f32.mrf.mxu0
    %v2666 = vadd.f32 %v2652, %v2665
    %2667 = vdwg.mxu0
    %2668 = vmatpush.bf16.msra.mxu0 %v2307
    %2669 = vmatpush.bf16.msra.mxu0 %v2299
    %2670 = vmatpush.bf16.msra.mxu0 %v2291
    %2671 = vmatpush.bf16.msra.mxu0 %v2283
    %2672 = vmatpush.bf16.msra.mxu0 %v2275
    %2673 = vmatpush.bf16.msra.mxu0 %v2267
    %2674 = vmatpush.bf16.msra.mxu0 %v2259
    %2675 = vmatpush.bf16.msra.mxu0 %v2251
    %2676 = vmatmul.bf16.gmra.mxu0 %v1015
    %v2677 = vpop.f32.mrf.mxu0
    %v2678 = vadd.f32 %v2664, %v2677
    %v2679 = vpop.f32.mrf.mxu0
    %v2680 = vadd.f32 %v2666, %v2679
    %2681 = vdwg.mxu0
    %2682 = vmatpush.bf16.msra.mxu0 %v2116
    %2683 = vmatpush.bf16.msra.mxu0 %v2108
    %2684 = vmatpush.bf16.msra.mxu0 %v2100
    %2685 = vmatpush.bf16.msra.mxu0 %v2092
    %2686 = vmatpush.bf16.msra.mxu0 %v2084
    %2687 = vmatpush.bf16.msra.mxu0 %v2076
    %2688 = vmatpush.bf16.msra.mxu0 %v2068
    %2689 = vmatpush.bf16.msra.mxu0 %v2060
    %2690 = vmatmul.bf16.gmra.mxu0 %v1012
    %v2691 = vpop.f32.mrf.mxu0
    %v2692 = vadd.f32 %v1276, %v2691
    %v2693 = vpop.f32.mrf.mxu0
    %v2694 = vadd.f32 %v1276, %v2693
    %2695 = vdwg.mxu0
    %2696 = vmatpush.bf16.msra.mxu0 %v2180
    %2697 = vmatpush.bf16.msra.mxu0 %v2172
    %2698 = vmatpush.bf16.msra.mxu0 %v2164
    %2699 = vmatpush.bf16.msra.mxu0 %v2156
    %2700 = vmatpush.bf16.msra.mxu0 %v2148
    %2701 = vmatpush.bf16.msra.mxu0 %v2140
    %2702 = vmatpush.bf16.msra.mxu0 %v2132
    %2703 = vmatpush.bf16.msra.mxu0 %v2124
    %2704 = vmatmul.bf16.gmra.mxu0 %v1013
    %v2705 = vpop.f32.mrf.mxu0
    %v2706 = vadd.f32 %v2692, %v2705
    %v2707 = vpop.f32.mrf.mxu0
    %v2708 = vadd.f32 %v2694, %v2707
    %2709 = vdwg.mxu0
    %2710 = vmatpush.bf16.msra.mxu0 %v2244
    %2711 = vmatpush.bf16.msra.mxu0 %v2236
    %2712 = vmatpush.bf16.msra.mxu0 %v2228
    %2713 = vmatpush.bf16.msra.mxu0 %v2220
    %2714 = vmatpush.bf16.msra.mxu0 %v2212
    %2715 = vmatpush.bf16.msra.mxu0 %v2204
    %2716 = vmatpush.bf16.msra.mxu0 %v2196
    %2717 = vmatpush.bf16.msra.mxu0 %v2188
    %2718 = vmatmul.bf16.gmra.mxu0 %v1014
    %v2719 = vpop.f32.mrf.mxu0
    %v2720 = vadd.f32 %v2706, %v2719
    %v2721 = vpop.f32.mrf.mxu0
    %v2722 = vadd.f32 %v2708, %v2721
    %2723 = vdwg.mxu0
    %2724 = vmatpush.bf16.msra.mxu0 %v2308
    %2725 = vmatpush.bf16.msra.mxu0 %v2300
    %2726 = vmatpush.bf16.msra.mxu0 %v2292
    %2727 = vmatpush.bf16.msra.mxu0 %v2284
    %2728 = vmatpush.bf16.msra.mxu0 %v2276
    %2729 = vmatpush.bf16.msra.mxu0 %v2268
    %2730 = vmatpush.bf16.msra.mxu0 %v2260
    %2731 = vmatpush.bf16.msra.mxu0 %v2252
    %2732 = vmatmul.bf16.gmra.mxu0 %v1015
    %v2733 = vpop.f32.mrf.mxu0
    %v2734 = vadd.f32 %v2720, %v2733
    %v2735 = vpop.f32.mrf.mxu0
    %v2736 = vadd.f32 %v2722, %v2735
    %2737 = vdwg.mxu0
    %2738 = vmatpush.bf16.msra.mxu0 %v2117
    %2739 = vmatpush.bf16.msra.mxu0 %v2109
    %2740 = vmatpush.bf16.msra.mxu0 %v2101
    %2741 = vmatpush.bf16.msra.mxu0 %v2093
    %2742 = vmatpush.bf16.msra.mxu0 %v2085
    %2743 = vmatpush.bf16.msra.mxu0 %v2077
    %2744 = vmatpush.bf16.msra.mxu0 %v2069
    %2745 = vmatpush.bf16.msra.mxu0 %v2061
    %2746 = vmatmul.bf16.gmra.mxu0 %v1012
    %v2747 = vpop.f32.mrf.mxu0
    %v2748 = vadd.f32 %v1277, %v2747
    %v2749 = vpop.f32.mrf.mxu0
    %v2750 = vadd.f32 %v1277, %v2749
    %2751 = vdwg.mxu0
    %2752 = vmatpush.bf16.msra.mxu0 %v2181
    %2753 = vmatpush.bf16.msra.mxu0 %v2173
    %2754 = vmatpush.bf16.msra.mxu0 %v2165
    %2755 = vmatpush.bf16.msra.mxu0 %v2157
    %2756 = vmatpush.bf16.msra.mxu0 %v2149
    %2757 = vmatpush.bf16.msra.mxu0 %v2141
    %2758 = vmatpush.bf16.msra.mxu0 %v2133
    %2759 = vmatpush.bf16.msra.mxu0 %v2125
    %2760 = vmatmul.bf16.gmra.mxu0 %v1013
    %v2761 = vpop.f32.mrf.mxu0
    %v2762 = vadd.f32 %v2748, %v2761
    %v2763 = vpop.f32.mrf.mxu0
    %v2764 = vadd.f32 %v2750, %v2763
    %2765 = vdwg.mxu0
    %2766 = vmatpush.bf16.msra.mxu0 %v2245
    %2767 = vmatpush.bf16.msra.mxu0 %v2237
    %2768 = vmatpush.bf16.msra.mxu0 %v2229
    %2769 = vmatpush.bf16.msra.mxu0 %v2221
    %2770 = vmatpush.bf16.msra.mxu0 %v2213
    %2771 = vmatpush.bf16.msra.mxu0 %v2205
    %2772 = vmatpush.bf16.msra.mxu0 %v2197
    %2773 = vmatpush.bf16.msra.mxu0 %v2189
    %2774 = vmatmul.bf16.gmra.mxu0 %v1014
    %v2775 = vpop.f32.mrf.mxu0
    %v2776 = vadd.f32 %v2762, %v2775
    %v2777 = vpop.f32.mrf.mxu0
    %v2778 = vadd.f32 %v2764, %v2777
    %2779 = vdwg.mxu0
    %2780 = vmatpush.bf16.msra.mxu0 %v2309
    %2781 = vmatpush.bf16.msra.mxu0 %v2301
    %2782 = vmatpush.bf16.msra.mxu0 %v2293
    %2783 = vmatpush.bf16.msra.mxu0 %v2285
    %2784 = vmatpush.bf16.msra.mxu0 %v2277
    %2785 = vmatpush.bf16.msra.mxu0 %v2269
    %2786 = vmatpush.bf16.msra.mxu0 %v2261
    %2787 = vmatpush.bf16.msra.mxu0 %v2253
    %2788 = vmatmul.bf16.gmra.mxu0 %v1015
    %v2789 = vpop.f32.mrf.mxu0
    %v2790 = vadd.f32 %v2776, %v2789
    %v2791 = vpop.f32.mrf.mxu0
    %v2792 = vadd.f32 %v2778, %v2791
    %2793 = vdwg.mxu0
    %2794 = vmatpush.bf16.msra.mxu0 %v2118
    %2795 = vmatpush.bf16.msra.mxu0 %v2110
    %2796 = vmatpush.bf16.msra.mxu0 %v2102
    %2797 = vmatpush.bf16.msra.mxu0 %v2094
    %2798 = vmatpush.bf16.msra.mxu0 %v2086
    %2799 = vmatpush.bf16.msra.mxu0 %v2078
    %2800 = vmatpush.bf16.msra.mxu0 %v2070
    %2801 = vmatpush.bf16.msra.mxu0 %v2062
    %2802 = vmatmul.bf16.gmra.mxu0 %v1012
    %v2803 = vpop.f32.mrf.mxu0
    %v2804 = vadd.f32 %v1278, %v2803
    %v2805 = vpop.f32.mrf.mxu0
    %v2806 = vadd.f32 %v1278, %v2805
    %2807 = vdwg.mxu0
    %2808 = vmatpush.bf16.msra.mxu0 %v2182
    %2809 = vmatpush.bf16.msra.mxu0 %v2174
    %2810 = vmatpush.bf16.msra.mxu0 %v2166
    %2811 = vmatpush.bf16.msra.mxu0 %v2158
    %2812 = vmatpush.bf16.msra.mxu0 %v2150
    %2813 = vmatpush.bf16.msra.mxu0 %v2142
    %2814 = vmatpush.bf16.msra.mxu0 %v2134
    %2815 = vmatpush.bf16.msra.mxu0 %v2126
    %2816 = vmatmul.bf16.gmra.mxu0 %v1013
    %v2817 = vpop.f32.mrf.mxu0
    %v2818 = vadd.f32 %v2804, %v2817
    %v2819 = vpop.f32.mrf.mxu0
    %v2820 = vadd.f32 %v2806, %v2819
    %2821 = vdwg.mxu0
    %2822 = vmatpush.bf16.msra.mxu0 %v2246
    %2823 = vmatpush.bf16.msra.mxu0 %v2238
    %2824 = vmatpush.bf16.msra.mxu0 %v2230
    %2825 = vmatpush.bf16.msra.mxu0 %v2222
    %2826 = vmatpush.bf16.msra.mxu0 %v2214
    %2827 = vmatpush.bf16.msra.mxu0 %v2206
    %2828 = vmatpush.bf16.msra.mxu0 %v2198
    %2829 = vmatpush.bf16.msra.mxu0 %v2190
    %2830 = vmatmul.bf16.gmra.mxu0 %v1014
    %v2831 = vpop.f32.mrf.mxu0
    %v2832 = vadd.f32 %v2818, %v2831
    %v2833 = vpop.f32.mrf.mxu0
    %v2834 = vadd.f32 %v2820, %v2833
    %2835 = vdwg.mxu0
    %2836 = vmatpush.bf16.msra.mxu0 %v2310
    %2837 = vmatpush.bf16.msra.mxu0 %v2302
    %2838 = vmatpush.bf16.msra.mxu0 %v2294
    %2839 = vmatpush.bf16.msra.mxu0 %v2286
    %2840 = vmatpush.bf16.msra.mxu0 %v2278
    %2841 = vmatpush.bf16.msra.mxu0 %v2270
    %2842 = vmatpush.bf16.msra.mxu0 %v2262
    %2843 = vmatpush.bf16.msra.mxu0 %v2254
    %2844 = vmatmul.bf16.gmra.mxu0 %v1015
    %v2845 = vpop.f32.mrf.mxu0
    %v2846 = vadd.f32 %v2832, %v2845
    %v2847 = vpop.f32.mrf.mxu0
    %v2848 = vadd.f32 %v2834, %v2847
    %2849 = vdwg.mxu0
    %2850 = vmatpush.bf16.msra.mxu0 %v2119
    %2851 = vmatpush.bf16.msra.mxu0 %v2111
    %2852 = vmatpush.bf16.msra.mxu0 %v2103
    %2853 = vmatpush.bf16.msra.mxu0 %v2095
    %2854 = vmatpush.bf16.msra.mxu0 %v2087
    %2855 = vmatpush.bf16.msra.mxu0 %v2079
    %2856 = vmatpush.bf16.msra.mxu0 %v2071
    %2857 = vmatpush.bf16.msra.mxu0 %v2063
    %2858 = vmatmul.bf16.gmra.mxu0 %v1012
    %v2859 = vpop.f32.mrf.mxu0
    %v2860 = vadd.f32 %v1279, %v2859
    %v2861 = vpop.f32.mrf.mxu0
    %v2862 = vadd.f32 %v1279, %v2861
    %2863 = vdwg.mxu0
    %2864 = vmatpush.bf16.msra.mxu0 %v2183
    %2865 = vmatpush.bf16.msra.mxu0 %v2175
    %2866 = vmatpush.bf16.msra.mxu0 %v2167
    %2867 = vmatpush.bf16.msra.mxu0 %v2159
    %2868 = vmatpush.bf16.msra.mxu0 %v2151
    %2869 = vmatpush.bf16.msra.mxu0 %v2143
    %2870 = vmatpush.bf16.msra.mxu0 %v2135
    %2871 = vmatpush.bf16.msra.mxu0 %v2127
    %2872 = vmatmul.bf16.gmra.mxu0 %v1013
    %v2873 = vpop.f32.mrf.mxu0
    %v2874 = vadd.f32 %v2860, %v2873
    %v2875 = vpop.f32.mrf.mxu0
    %v2876 = vadd.f32 %v2862, %v2875
    %2877 = vdwg.mxu0
    %2878 = vmatpush.bf16.msra.mxu0 %v2247
    %2879 = vmatpush.bf16.msra.mxu0 %v2239
    %2880 = vmatpush.bf16.msra.mxu0 %v2231
    %2881 = vmatpush.bf16.msra.mxu0 %v2223
    %2882 = vmatpush.bf16.msra.mxu0 %v2215
    %2883 = vmatpush.bf16.msra.mxu0 %v2207
    %2884 = vmatpush.bf16.msra.mxu0 %v2199
    %2885 = vmatpush.bf16.msra.mxu0 %v2191
    %2886 = vmatmul.bf16.gmra.mxu0 %v1014
    %v2887 = vpop.f32.mrf.mxu0
    %v2888 = vadd.f32 %v2874, %v2887
    %v2889 = vpop.f32.mrf.mxu0
    %v2890 = vadd.f32 %v2876, %v2889
    %2891 = vdwg.mxu0
    %2892 = vmatpush.bf16.msra.mxu0 %v2311
    %2893 = vmatpush.bf16.msra.mxu0 %v2303
    %2894 = vmatpush.bf16.msra.mxu0 %v2295
    %2895 = vmatpush.bf16.msra.mxu0 %v2287
    %2896 = vmatpush.bf16.msra.mxu0 %v2279
    %2897 = vmatpush.bf16.msra.mxu0 %v2271
    %2898 = vmatpush.bf16.msra.mxu0 %v2263
    %2899 = vmatpush.bf16.msra.mxu0 %v2255
    %2900 = vmatmul.bf16.gmra.mxu0 %v1015
    %v2901 = vpop.f32.mrf.mxu0
    %v2902 = vadd.f32 %v2888, %v2901
    %v2903 = vpop.f32.mrf.mxu0
    %v2904 = vadd.f32 %v2890, %v2903
    %2905 = vdwg.mxu0
    %2906 = vmatpush.bf16.msra.mxu0 %v2120
    %2907 = vmatpush.bf16.msra.mxu0 %v2112
    %2908 = vmatpush.bf16.msra.mxu0 %v2104
    %2909 = vmatpush.bf16.msra.mxu0 %v2096
    %2910 = vmatpush.bf16.msra.mxu0 %v2088
    %2911 = vmatpush.bf16.msra.mxu0 %v2080
    %2912 = vmatpush.bf16.msra.mxu0 %v2072
    %2913 = vmatpush.bf16.msra.mxu0 %v2064
    %2914 = vmatmul.bf16.gmra.mxu0 %v1012
    %v2915 = vpop.f32.mrf.mxu0
    %v2916 = vadd.f32 %v1280, %v2915
    %v2917 = vpop.f32.mrf.mxu0
    %v2918 = vadd.f32 %v1280, %v2917
    %2919 = vdwg.mxu0
    %2920 = vmatpush.bf16.msra.mxu0 %v2184
    %2921 = vmatpush.bf16.msra.mxu0 %v2176
    %2922 = vmatpush.bf16.msra.mxu0 %v2168
    %2923 = vmatpush.bf16.msra.mxu0 %v2160
    %2924 = vmatpush.bf16.msra.mxu0 %v2152
    %2925 = vmatpush.bf16.msra.mxu0 %v2144
    %2926 = vmatpush.bf16.msra.mxu0 %v2136
    %2927 = vmatpush.bf16.msra.mxu0 %v2128
    %2928 = vmatmul.bf16.gmra.mxu0 %v1013
    %v2929 = vpop.f32.mrf.mxu0
    %v2930 = vadd.f32 %v2916, %v2929
    %v2931 = vpop.f32.mrf.mxu0
    %v2932 = vadd.f32 %v2918, %v2931
    %2933 = vdwg.mxu0
    %2934 = vmatpush.bf16.msra.mxu0 %v2248
    %2935 = vmatpush.bf16.msra.mxu0 %v2240
    %2936 = vmatpush.bf16.msra.mxu0 %v2232
    %2937 = vmatpush.bf16.msra.mxu0 %v2224
    %2938 = vmatpush.bf16.msra.mxu0 %v2216
    %2939 = vmatpush.bf16.msra.mxu0 %v2208
    %2940 = vmatpush.bf16.msra.mxu0 %v2200
    %2941 = vmatpush.bf16.msra.mxu0 %v2192
    %2942 = vmatmul.bf16.gmra.mxu0 %v1014
    %v2943 = vpop.f32.mrf.mxu0
    %v2944 = vadd.f32 %v2930, %v2943
    %v2945 = vpop.f32.mrf.mxu0
    %v2946 = vadd.f32 %v2932, %v2945
    %2947 = vdwg.mxu0
    %2948 = vmatpush.bf16.msra.mxu0 %v2312
    %2949 = vmatpush.bf16.msra.mxu0 %v2304
    %2950 = vmatpush.bf16.msra.mxu0 %v2296
    %2951 = vmatpush.bf16.msra.mxu0 %v2288
    %2952 = vmatpush.bf16.msra.mxu0 %v2280
    %2953 = vmatpush.bf16.msra.mxu0 %v2272
    %2954 = vmatpush.bf16.msra.mxu0 %v2264
    %2955 = vmatpush.bf16.msra.mxu0 %v2256
    %2956 = vmatmul.bf16.gmra.mxu0 %v1015
    %v2957 = vpop.f32.mrf.mxu0
    %v2958 = vadd.f32 %v2944, %v2957
    %v2959 = vpop.f32.mrf.mxu0
    %v2960 = vadd.f32 %v2946, %v2959
    %2961 = vdwg.mxu0
    %2962 = vmatpush.bf16.msra.mxu0 %v2121
    %2963 = vmatpush.bf16.msra.mxu0 %v2113
    %2964 = vmatpush.bf16.msra.mxu0 %v2105
    %2965 = vmatpush.bf16.msra.mxu0 %v2097
    %2966 = vmatpush.bf16.msra.mxu0 %v2089
    %2967 = vmatpush.bf16.msra.mxu0 %v2081
    %2968 = vmatpush.bf16.msra.mxu0 %v2073
    %2969 = vmatpush.bf16.msra.mxu0 %v2065
    %2970 = vmatmul.bf16.gmra.mxu0 %v1012
    %v2971 = vpop.f32.mrf.mxu0
    %v2972 = vadd.f32 %v1281, %v2971
    %v2973 = vpop.f32.mrf.mxu0
    %v2974 = vadd.f32 %v1281, %v2973
    %2975 = vdwg.mxu0
    %2976 = vmatpush.bf16.msra.mxu0 %v2185
    %2977 = vmatpush.bf16.msra.mxu0 %v2177
    %2978 = vmatpush.bf16.msra.mxu0 %v2169
    %2979 = vmatpush.bf16.msra.mxu0 %v2161
    %2980 = vmatpush.bf16.msra.mxu0 %v2153
    %2981 = vmatpush.bf16.msra.mxu0 %v2145
    %2982 = vmatpush.bf16.msra.mxu0 %v2137
    %2983 = vmatpush.bf16.msra.mxu0 %v2129
    %2984 = vmatmul.bf16.gmra.mxu0 %v1013
    %v2985 = vpop.f32.mrf.mxu0
    %v2986 = vadd.f32 %v2972, %v2985
    %v2987 = vpop.f32.mrf.mxu0
    %v2988 = vadd.f32 %v2974, %v2987
    %2989 = vdwg.mxu0
    %2990 = vmatpush.bf16.msra.mxu0 %v2249
    %2991 = vmatpush.bf16.msra.mxu0 %v2241
    %2992 = vmatpush.bf16.msra.mxu0 %v2233
    %2993 = vmatpush.bf16.msra.mxu0 %v2225
    %2994 = vmatpush.bf16.msra.mxu0 %v2217
    %2995 = vmatpush.bf16.msra.mxu0 %v2209
    %2996 = vmatpush.bf16.msra.mxu0 %v2201
    %2997 = vmatpush.bf16.msra.mxu0 %v2193
    %2998 = vmatmul.bf16.gmra.mxu0 %v1014
    %v2999 = vpop.f32.mrf.mxu0
    %v3000 = vadd.f32 %v2986, %v2999
    %v3001 = vpop.f32.mrf.mxu0
    %v3002 = vadd.f32 %v2988, %v3001
    %3003 = vdwg.mxu0
    %3004 = vmatpush.bf16.msra.mxu0 %v2313
    %3005 = vmatpush.bf16.msra.mxu0 %v2305
    %3006 = vmatpush.bf16.msra.mxu0 %v2297
    %3007 = vmatpush.bf16.msra.mxu0 %v2289
    %3008 = vmatpush.bf16.msra.mxu0 %v2281
    %3009 = vmatpush.bf16.msra.mxu0 %v2273
    %3010 = vmatpush.bf16.msra.mxu0 %v2265
    %3011 = vmatpush.bf16.msra.mxu0 %v2257
    %3012 = vmatmul.bf16.gmra.mxu0 %v1015
    %v3013 = vpop.f32.mrf.mxu0
    %v3014 = vadd.f32 %v3000, %v3013
    %v3015 = vpop.f32.mrf.mxu0
    %v3016 = vadd.f32 %v3002, %v3015
    %3017 = vdwg.mxu0
    %v3018 = vmax.f32 %v2622, 0.0
    %v3019 = vmax.f32 %v2678, 0.0
    %v3020 = vmax.f32 %v2734, 0.0
    %v3021 = vmax.f32 %v2790, 0.0
    %v3022 = vmax.f32 %v2846, 0.0
    %v3023 = vmax.f32 %v2902, 0.0
    %v3024 = vmax.f32 %v2958, 0.0
    %v3025 = vmax.f32 %v3014, 0.0
    %v3026 = vmax.f32 %v2624, 0.0
    %v3027 = vmax.f32 %v2680, 0.0
    %v3028 = vmax.f32 %v2736, 0.0
    %v3029 = vmax.f32 %v2792, 0.0
    %v3030 = vmax.f32 %v2848, 0.0
    %v3031 = vmax.f32 %v2904, 0.0
    %v3032 = vmax.f32 %v2960, 0.0
    %v3033 = vmax.f32 %v3016, 0.0
    %v3034 = vpack.c.bf16 %v3026, %v3018
    %v3035 = vpack.c.bf16 %v3027, %v3019
    %v3036 = vpack.c.bf16 %v3028, %v3020
    %v3037 = vpack.c.bf16 %v3029, %v3021
    %v3038 = vpack.c.bf16 %v3030, %v3022
    %v3039 = vpack.c.bf16 %v3031, %v3023
    %v3040 = vpack.c.bf16 %v3032, %v3024
    %v3041 = vpack.c.bf16 %v3033, %v3025
    %v3042 = vld [vmem:[#allocation10] sm:$0xff]
    %v3043 = vld [vmem:[#allocation10 + $0x8] sm:$0xff]
    %v3044 = vld [vmem:[#allocation10 + $0x10] sm:$0xff]
    %v3045 = vld [vmem:[#allocation10 + $0x18] sm:$0xff]
    %v3046 = vld [vmem:[#allocation10 + $0x20] sm:$0xff]
    %v3047 = vld [vmem:[#allocation10 + $0x28] sm:$0xff]
    %v3048 = vld [vmem:[#allocation10 + $0x30] sm:$0xff]
    %v3049 = vld [vmem:[#allocation10 + $0x38] sm:$0xff]
    %v3050 = vld [vmem:[#allocation10 + $0x40] sm:$0xff]
    %v3051 = vld [vmem:[#allocation10 + $0x48] sm:$0xff]
    %v3052 = vld [vmem:[#allocation10 + $0x50] sm:$0xff]
    %v3053 = vld [vmem:[#allocation10 + $0x58] sm:$0xff]
    %v3054 = vld [vmem:[#allocation10 + $0x60] sm:$0xff]
    %v3055 = vld [vmem:[#allocation10 + $0x68] sm:$0xff]
    %v3056 = vld [vmem:[#allocation10 + $0x70] sm:$0xff]
    %v3057 = vld [vmem:[#allocation10 + $0x78] sm:$0xff]
    %v3058 = vld [vmem:[#allocation10 + $0x80] sm:$0xff]
    %v3059 = vld [vmem:[#allocation10 + $0x88] sm:$0xff]
    %v3060 = vld [vmem:[#allocation10 + $0x90] sm:$0xff]
    %v3061 = vld [vmem:[#allocation10 + $0x98] sm:$0xff]
    %v3062 = vld [vmem:[#allocation10 + $0xa0] sm:$0xff]
    %v3063 = vld [vmem:[#allocation10 + $0xa8] sm:$0xff]
    %v3064 = vld [vmem:[#allocation10 + $0xb0] sm:$0xff]
    %v3065 = vld [vmem:[#allocation10 + $0xb8] sm:$0xff]
    %v3066 = vld [vmem:[#allocation10 + $0xc0] sm:$0xff]
    %v3067 = vld [vmem:[#allocation10 + $0xc8] sm:$0xff]
    %v3068 = vld [vmem:[#allocation10 + $0xd0] sm:$0xff]
    %v3069 = vld [vmem:[#allocation10 + $0xd8] sm:$0xff]
    %v3070 = vld [vmem:[#allocation10 + $0xe0] sm:$0xff]
    %v3071 = vld [vmem:[#allocation10 + $0xe8] sm:$0xff]
    %v3072 = vld [vmem:[#allocation10 + $0xf0] sm:$0xff]
    %v3073 = vld [vmem:[#allocation10 + $0xf8] sm:$0xff]
    %v3074 = vld [vmem:[#allocation10 + $0x100] sm:$0xff]
    %v3075 = vld [vmem:[#allocation10 + $0x108] sm:$0xff]
    %v3076 = vld [vmem:[#allocation10 + $0x110] sm:$0xff]
    %v3077 = vld [vmem:[#allocation10 + $0x118] sm:$0xff]
    %v3078 = vld [vmem:[#allocation10 + $0x120] sm:$0xff]
    %v3079 = vld [vmem:[#allocation10 + $0x128] sm:$0xff]
    %v3080 = vld [vmem:[#allocation10 + $0x130] sm:$0xff]
    %v3081 = vld [vmem:[#allocation10 + $0x138] sm:$0xff]
    %v3082 = vld [vmem:[#allocation10 + $0x140] sm:$0xff]
    %v3083 = vld [vmem:[#allocation10 + $0x148] sm:$0xff]
    %v3084 = vld [vmem:[#allocation10 + $0x150] sm:$0xff]
    %v3085 = vld [vmem:[#allocation10 + $0x158] sm:$0xff]
    %v3086 = vld [vmem:[#allocation10 + $0x160] sm:$0xff]
    %v3087 = vld [vmem:[#allocation10 + $0x168] sm:$0xff]
    %v3088 = vld [vmem:[#allocation10 + $0x170] sm:$0xff]
    %v3089 = vld [vmem:[#allocation10 + $0x178] sm:$0xff]
    %v3090 = vld [vmem:[#allocation10 + $0x180] sm:$0xff]
    %v3091 = vld [vmem:[#allocation10 + $0x188] sm:$0xff]
    %v3092 = vld [vmem:[#allocation10 + $0x190] sm:$0xff]
    %v3093 = vld [vmem:[#allocation10 + $0x198] sm:$0xff]
    %v3094 = vld [vmem:[#allocation10 + $0x1a0] sm:$0xff]
    %v3095 = vld [vmem:[#allocation10 + $0x1a8] sm:$0xff]
    %v3096 = vld [vmem:[#allocation10 + $0x1b0] sm:$0xff]
    %v3097 = vld [vmem:[#allocation10 + $0x1b8] sm:$0xff]
    %v3098 = vld [vmem:[#allocation10 + $0x1c0] sm:$0xff]
    %v3099 = vld [vmem:[#allocation10 + $0x1c8] sm:$0xff]
    %v3100 = vld [vmem:[#allocation10 + $0x1d0] sm:$0xff]
    %v3101 = vld [vmem:[#allocation10 + $0x1d8] sm:$0xff]
    %v3102 = vld [vmem:[#allocation10 + $0x1e0] sm:$0xff]
    %v3103 = vld [vmem:[#allocation10 + $0x1e8] sm:$0xff]
    %v3104 = vld [vmem:[#allocation10 + $0x1f0] sm:$0xff]
    %v3105 = vld [vmem:[#allocation10 + $0x1f8] sm:$0xff]
    %v3106 = vld [vmem:[#allocation10 + $0x200] sm:$0xff]
    %v3107 = vld [vmem:[#allocation10 + $0x208] sm:$0xff]
    %v3108 = vld [vmem:[#allocation10 + $0x210] sm:$0xff]
    %v3109 = vld [vmem:[#allocation10 + $0x218] sm:$0xff]
    %v3110 = vld [vmem:[#allocation10 + $0x220] sm:$0xff]
    %v3111 = vld [vmem:[#allocation10 + $0x228] sm:$0xff]
    %v3112 = vld [vmem:[#allocation10 + $0x230] sm:$0xff]
    %v3113 = vld [vmem:[#allocation10 + $0x238] sm:$0xff]
    %v3114 = vld [vmem:[#allocation10 + $0x240] sm:$0xff]
    %v3115 = vld [vmem:[#allocation10 + $0x248] sm:$0xff]
    %v3116 = vld [vmem:[#allocation10 + $0x250] sm:$0xff]
    %v3117 = vld [vmem:[#allocation10 + $0x258] sm:$0xff]
    %v3118 = vld [vmem:[#allocation10 + $0x260] sm:$0xff]
    %v3119 = vld [vmem:[#allocation10 + $0x268] sm:$0xff]
    %v3120 = vld [vmem:[#allocation10 + $0x270] sm:$0xff]
    %v3121 = vld [vmem:[#allocation10 + $0x278] sm:$0xff]
    %v3122 = vld [vmem:[#allocation10 + $0x280] sm:$0xff]
    %v3123 = vld [vmem:[#allocation10 + $0x288] sm:$0xff]
    %v3124 = vld [vmem:[#allocation10 + $0x290] sm:$0xff]
    %v3125 = vld [vmem:[#allocation10 + $0x298] sm:$0xff]
    %v3126 = vld [vmem:[#allocation10 + $0x2a0] sm:$0xff]
    %v3127 = vld [vmem:[#allocation10 + $0x2a8] sm:$0xff]
    %v3128 = vld [vmem:[#allocation10 + $0x2b0] sm:$0xff]
    %v3129 = vld [vmem:[#allocation10 + $0x2b8] sm:$0xff]
    %v3130 = vld [vmem:[#allocation10 + $0x2c0] sm:$0xff]
    %v3131 = vld [vmem:[#allocation10 + $0x2c8] sm:$0xff]
    %v3132 = vld [vmem:[#allocation10 + $0x2d0] sm:$0xff]
    %v3133 = vld [vmem:[#allocation10 + $0x2d8] sm:$0xff]
    %v3134 = vld [vmem:[#allocation10 + $0x2e0] sm:$0xff]
    %v3135 = vld [vmem:[#allocation10 + $0x2e8] sm:$0xff]
    %v3136 = vld [vmem:[#allocation10 + $0x2f0] sm:$0xff]
    %v3137 = vld [vmem:[#allocation10 + $0x2f8] sm:$0xff]
    %v3138 = vld [vmem:[#allocation10 + $0x300] sm:$0xff]
    %v3139 = vld [vmem:[#allocation10 + $0x308] sm:$0xff]
    %v3140 = vld [vmem:[#allocation10 + $0x310] sm:$0xff]
    %v3141 = vld [vmem:[#allocation10 + $0x318] sm:$0xff]
    %v3142 = vld [vmem:[#allocation10 + $0x320] sm:$0xff]
    %v3143 = vld [vmem:[#allocation10 + $0x328] sm:$0xff]
    %v3144 = vld [vmem:[#allocation10 + $0x330] sm:$0xff]
    %v3145 = vld [vmem:[#allocation10 + $0x338] sm:$0xff]
    %v3146 = vld [vmem:[#allocation10 + $0x340] sm:$0xff]
    %v3147 = vld [vmem:[#allocation10 + $0x348] sm:$0xff]
    %v3148 = vld [vmem:[#allocation10 + $0x350] sm:$0xff]
    %v3149 = vld [vmem:[#allocation10 + $0x358] sm:$0xff]
    %v3150 = vld [vmem:[#allocation10 + $0x360] sm:$0xff]
    %v3151 = vld [vmem:[#allocation10 + $0x368] sm:$0xff]
    %v3152 = vld [vmem:[#allocation10 + $0x370] sm:$0xff]
    %v3153 = vld [vmem:[#allocation10 + $0x378] sm:$0xff]
    %v3154 = vld [vmem:[#allocation10 + $0x380] sm:$0xff]
    %v3155 = vld [vmem:[#allocation10 + $0x388] sm:$0xff]
    %v3156 = vld [vmem:[#allocation10 + $0x390] sm:$0xff]
    %v3157 = vld [vmem:[#allocation10 + $0x398] sm:$0xff]
    %v3158 = vld [vmem:[#allocation10 + $0x3a0] sm:$0xff]
    %v3159 = vld [vmem:[#allocation10 + $0x3a8] sm:$0xff]
    %v3160 = vld [vmem:[#allocation10 + $0x3b0] sm:$0xff]
    %v3161 = vld [vmem:[#allocation10 + $0x3b8] sm:$0xff]
    %v3162 = vld [vmem:[#allocation10 + $0x3c0] sm:$0xff]
    %v3163 = vld [vmem:[#allocation10 + $0x3c8] sm:$0xff]
    %v3164 = vld [vmem:[#allocation10 + $0x3d0] sm:$0xff]
    %v3165 = vld [vmem:[#allocation10 + $0x3d8] sm:$0xff]
    %v3166 = vld [vmem:[#allocation10 + $0x3e0] sm:$0xff]
    %v3167 = vld [vmem:[#allocation10 + $0x3e8] sm:$0xff]
    %v3168 = vld [vmem:[#allocation10 + $0x3f0] sm:$0xff]
    %v3169 = vld [vmem:[#allocation10 + $0x3f8] sm:$0xff]
    %v3170 = vld [vmem:[#allocation10 + $0x400] sm:$0xff]
    %v3171 = vld [vmem:[#allocation10 + $0x408] sm:$0xff]
    %v3172 = vld [vmem:[#allocation10 + $0x410] sm:$0xff]
    %v3173 = vld [vmem:[#allocation10 + $0x418] sm:$0xff]
    %v3174 = vld [vmem:[#allocation10 + $0x420] sm:$0xff]
    %v3175 = vld [vmem:[#allocation10 + $0x428] sm:$0xff]
    %v3176 = vld [vmem:[#allocation10 + $0x430] sm:$0xff]
    %v3177 = vld [vmem:[#allocation10 + $0x438] sm:$0xff]
    %v3178 = vld [vmem:[#allocation10 + $0x440] sm:$0xff]
    %v3179 = vld [vmem:[#allocation10 + $0x448] sm:$0xff]
    %v3180 = vld [vmem:[#allocation10 + $0x450] sm:$0xff]
    %v3181 = vld [vmem:[#allocation10 + $0x458] sm:$0xff]
    %v3182 = vld [vmem:[#allocation10 + $0x460] sm:$0xff]
    %v3183 = vld [vmem:[#allocation10 + $0x468] sm:$0xff]
    %v3184 = vld [vmem:[#allocation10 + $0x470] sm:$0xff]
    %v3185 = vld [vmem:[#allocation10 + $0x478] sm:$0xff]
    %v3186 = vld [vmem:[#allocation10 + $0x480] sm:$0xff]
    %v3187 = vld [vmem:[#allocation10 + $0x488] sm:$0xff]
    %v3188 = vld [vmem:[#allocation10 + $0x490] sm:$0xff]
    %v3189 = vld [vmem:[#allocation10 + $0x498] sm:$0xff]
    %v3190 = vld [vmem:[#allocation10 + $0x4a0] sm:$0xff]
    %v3191 = vld [vmem:[#allocation10 + $0x4a8] sm:$0xff]
    %v3192 = vld [vmem:[#allocation10 + $0x4b0] sm:$0xff]
    %v3193 = vld [vmem:[#allocation10 + $0x4b8] sm:$0xff]
    %v3194 = vld [vmem:[#allocation10 + $0x4c0] sm:$0xff]
    %v3195 = vld [vmem:[#allocation10 + $0x4c8] sm:$0xff]
    %v3196 = vld [vmem:[#allocation10 + $0x4d0] sm:$0xff]
    %v3197 = vld [vmem:[#allocation10 + $0x4d8] sm:$0xff]
    %v3198 = vld [vmem:[#allocation10 + $0x4e0] sm:$0xff]
    %v3199 = vld [vmem:[#allocation10 + $0x4e8] sm:$0xff]
    %v3200 = vld [vmem:[#allocation10 + $0x4f0] sm:$0xff]
    %v3201 = vld [vmem:[#allocation10 + $0x4f8] sm:$0xff]
    %v3202 = vld [vmem:[#allocation10 + $0x500] sm:$0xff]
    %v3203 = vld [vmem:[#allocation10 + $0x508] sm:$0xff]
    %v3204 = vld [vmem:[#allocation10 + $0x510] sm:$0xff]
    %v3205 = vld [vmem:[#allocation10 + $0x518] sm:$0xff]
    %v3206 = vld [vmem:[#allocation10 + $0x520] sm:$0xff]
    %v3207 = vld [vmem:[#allocation10 + $0x528] sm:$0xff]
    %v3208 = vld [vmem:[#allocation10 + $0x530] sm:$0xff]
    %v3209 = vld [vmem:[#allocation10 + $0x538] sm:$0xff]
    %v3210 = vld [vmem:[#allocation10 + $0x540] sm:$0xff]
    %v3211 = vld [vmem:[#allocation10 + $0x548] sm:$0xff]
    %v3212 = vld [vmem:[#allocation10 + $0x550] sm:$0xff]
    %v3213 = vld [vmem:[#allocation10 + $0x558] sm:$0xff]
    %v3214 = vld [vmem:[#allocation10 + $0x560] sm:$0xff]
    %v3215 = vld [vmem:[#allocation10 + $0x568] sm:$0xff]
    %v3216 = vld [vmem:[#allocation10 + $0x570] sm:$0xff]
    %v3217 = vld [vmem:[#allocation10 + $0x578] sm:$0xff]
    %v3218 = vld [vmem:[#allocation10 + $0x580] sm:$0xff]
    %v3219 = vld [vmem:[#allocation10 + $0x588] sm:$0xff]
    %v3220 = vld [vmem:[#allocation10 + $0x590] sm:$0xff]
    %v3221 = vld [vmem:[#allocation10 + $0x598] sm:$0xff]
    %v3222 = vld [vmem:[#allocation10 + $0x5a0] sm:$0xff]
    %v3223 = vld [vmem:[#allocation10 + $0x5a8] sm:$0xff]
    %v3224 = vld [vmem:[#allocation10 + $0x5b0] sm:$0xff]
    %v3225 = vld [vmem:[#allocation10 + $0x5b8] sm:$0xff]
    %v3226 = vld [vmem:[#allocation10 + $0x5c0] sm:$0xff]
    %v3227 = vld [vmem:[#allocation10 + $0x5c8] sm:$0xff]
    %v3228 = vld [vmem:[#allocation10 + $0x5d0] sm:$0xff]
    %v3229 = vld [vmem:[#allocation10 + $0x5d8] sm:$0xff]
    %v3230 = vld [vmem:[#allocation10 + $0x5e0] sm:$0xff]
    %v3231 = vld [vmem:[#allocation10 + $0x5e8] sm:$0xff]
    %v3232 = vld [vmem:[#allocation10 + $0x5f0] sm:$0xff]
    %v3233 = vld [vmem:[#allocation10 + $0x5f8] sm:$0xff]
    %v3234 = vld [vmem:[#allocation10 + $0x600] sm:$0xff]
    %v3235 = vld [vmem:[#allocation10 + $0x608] sm:$0xff]
    %v3236 = vld [vmem:[#allocation10 + $0x610] sm:$0xff]
    %v3237 = vld [vmem:[#allocation10 + $0x618] sm:$0xff]
    %v3238 = vld [vmem:[#allocation10 + $0x620] sm:$0xff]
    %v3239 = vld [vmem:[#allocation10 + $0x628] sm:$0xff]
    %v3240 = vld [vmem:[#allocation10 + $0x630] sm:$0xff]
    %v3241 = vld [vmem:[#allocation10 + $0x638] sm:$0xff]
    %v3242 = vld [vmem:[#allocation10 + $0x640] sm:$0xff]
    %v3243 = vld [vmem:[#allocation10 + $0x648] sm:$0xff]
    %v3244 = vld [vmem:[#allocation10 + $0x650] sm:$0xff]
    %v3245 = vld [vmem:[#allocation10 + $0x658] sm:$0xff]
    %v3246 = vld [vmem:[#allocation10 + $0x660] sm:$0xff]
    %v3247 = vld [vmem:[#allocation10 + $0x668] sm:$0xff]
    %v3248 = vld [vmem:[#allocation10 + $0x670] sm:$0xff]
    %v3249 = vld [vmem:[#allocation10 + $0x678] sm:$0xff]
    %v3250 = vld [vmem:[#allocation10 + $0x680] sm:$0xff]
    %v3251 = vld [vmem:[#allocation10 + $0x688] sm:$0xff]
    %v3252 = vld [vmem:[#allocation10 + $0x690] sm:$0xff]
    %v3253 = vld [vmem:[#allocation10 + $0x698] sm:$0xff]
    %v3254 = vld [vmem:[#allocation10 + $0x6a0] sm:$0xff]
    %v3255 = vld [vmem:[#allocation10 + $0x6a8] sm:$0xff]
    %v3256 = vld [vmem:[#allocation10 + $0x6b0] sm:$0xff]
    %v3257 = vld [vmem:[#allocation10 + $0x6b8] sm:$0xff]
    %v3258 = vld [vmem:[#allocation10 + $0x6c0] sm:$0xff]
    %v3259 = vld [vmem:[#allocation10 + $0x6c8] sm:$0xff]
    %v3260 = vld [vmem:[#allocation10 + $0x6d0] sm:$0xff]
    %v3261 = vld [vmem:[#allocation10 + $0x6d8] sm:$0xff]
    %v3262 = vld [vmem:[#allocation10 + $0x6e0] sm:$0xff]
    %v3263 = vld [vmem:[#allocation10 + $0x6e8] sm:$0xff]
    %v3264 = vld [vmem:[#allocation10 + $0x6f0] sm:$0xff]
    %v3265 = vld [vmem:[#allocation10 + $0x6f8] sm:$0xff]
    %v3266 = vld [vmem:[#allocation10 + $0x700] sm:$0xff]
    %v3267 = vld [vmem:[#allocation10 + $0x708] sm:$0xff]
    %v3268 = vld [vmem:[#allocation10 + $0x710] sm:$0xff]
    %v3269 = vld [vmem:[#allocation10 + $0x718] sm:$0xff]
    %v3270 = vld [vmem:[#allocation10 + $0x720] sm:$0xff]
    %v3271 = vld [vmem:[#allocation10 + $0x728] sm:$0xff]
    %v3272 = vld [vmem:[#allocation10 + $0x730] sm:$0xff]
    %v3273 = vld [vmem:[#allocation10 + $0x738] sm:$0xff]
    %v3274 = vld [vmem:[#allocation10 + $0x740] sm:$0xff]
    %v3275 = vld [vmem:[#allocation10 + $0x748] sm:$0xff]
    %v3276 = vld [vmem:[#allocation10 + $0x750] sm:$0xff]
    %v3277 = vld [vmem:[#allocation10 + $0x758] sm:$0xff]
    %v3278 = vld [vmem:[#allocation10 + $0x760] sm:$0xff]
    %v3279 = vld [vmem:[#allocation10 + $0x768] sm:$0xff]
    %v3280 = vld [vmem:[#allocation10 + $0x770] sm:$0xff]
    %v3281 = vld [vmem:[#allocation10 + $0x778] sm:$0xff]
    %v3282 = vld [vmem:[#allocation10 + $0x780] sm:$0xff]
    %v3283 = vld [vmem:[#allocation10 + $0x788] sm:$0xff]
    %v3284 = vld [vmem:[#allocation10 + $0x790] sm:$0xff]
    %v3285 = vld [vmem:[#allocation10 + $0x798] sm:$0xff]
    %v3286 = vld [vmem:[#allocation10 + $0x7a0] sm:$0xff]
    %v3287 = vld [vmem:[#allocation10 + $0x7a8] sm:$0xff]
    %v3288 = vld [vmem:[#allocation10 + $0x7b0] sm:$0xff]
    %v3289 = vld [vmem:[#allocation10 + $0x7b8] sm:$0xff]
    %v3290 = vld [vmem:[#allocation10 + $0x7c0] sm:$0xff]
    %v3291 = vld [vmem:[#allocation10 + $0x7c8] sm:$0xff]
    %v3292 = vld [vmem:[#allocation10 + $0x7d0] sm:$0xff]
    %v3293 = vld [vmem:[#allocation10 + $0x7d8] sm:$0xff]
    %v3294 = vld [vmem:[#allocation10 + $0x7e0] sm:$0xff]
    %v3295 = vld [vmem:[#allocation10 + $0x7e8] sm:$0xff]
    %v3296 = vld [vmem:[#allocation10 + $0x7f0] sm:$0xff]
    %v3297 = vld [vmem:[#allocation10 + $0x7f8] sm:$0xff]
    %v3298 = vld [vmem:[%s16] sm:$0xf]
    %v3300 = vperm.slane %v3298, 0
    %v3301 = vperm.slane %v3298, 1
    %v3302 = vperm.slane %v3298, 2
    %v3303 = vperm.slane %v3298, 3
    %v3564 = vunpack.c.l.b16 %v3042
    %v3565 = vunpack.c.h.b16 %v3042
    %v3566 = vunpack.c.l.b16 %v3043
    %v3567 = vunpack.c.h.b16 %v3043
    %v3568 = vunpack.c.l.b16 %v3044
    %v3569 = vunpack.c.h.b16 %v3044
    %v3570 = vunpack.c.l.b16 %v3045
    %v3571 = vunpack.c.h.b16 %v3045
    %v3572 = vunpack.c.l.b16 %v3046
    %v3573 = vunpack.c.h.b16 %v3046
    %v3574 = vunpack.c.l.b16 %v3047
    %v3575 = vunpack.c.h.b16 %v3047
    %v3576 = vunpack.c.l.b16 %v3048
    %v3577 = vunpack.c.h.b16 %v3048
    %v3578 = vunpack.c.l.b16 %v3049
    %v3579 = vunpack.c.h.b16 %v3049
    %v3580 = vunpack.c.l.b16 %v3050
    %v3581 = vunpack.c.h.b16 %v3050
    %v3582 = vunpack.c.l.b16 %v3051
    %v3583 = vunpack.c.h.b16 %v3051
    %v3584 = vunpack.c.l.b16 %v3052
    %v3585 = vunpack.c.h.b16 %v3052
    %v3586 = vunpack.c.l.b16 %v3053
    %v3587 = vunpack.c.h.b16 %v3053
    %v3588 = vunpack.c.l.b16 %v3054
    %v3589 = vunpack.c.h.b16 %v3054
    %v3590 = vunpack.c.l.b16 %v3055
    %v3591 = vunpack.c.h.b16 %v3055
    %v3592 = vunpack.c.l.b16 %v3056
    %v3593 = vunpack.c.h.b16 %v3056
    %v3594 = vunpack.c.l.b16 %v3057
    %v3595 = vunpack.c.h.b16 %v3057
    %v3596 = vunpack.c.l.b16 %v3058
    %v3597 = vunpack.c.h.b16 %v3058
    %v3598 = vunpack.c.l.b16 %v3059
    %v3599 = vunpack.c.h.b16 %v3059
    %v3600 = vunpack.c.l.b16 %v3060
    %v3601 = vunpack.c.h.b16 %v3060
    %v3602 = vunpack.c.l.b16 %v3061
    %v3603 = vunpack.c.h.b16 %v3061
    %v3604 = vunpack.c.l.b16 %v3062
    %v3605 = vunpack.c.h.b16 %v3062
    %v3606 = vunpack.c.l.b16 %v3063
    %v3607 = vunpack.c.h.b16 %v3063
    %v3608 = vunpack.c.l.b16 %v3064
    %v3609 = vunpack.c.h.b16 %v3064
    %v3610 = vunpack.c.l.b16 %v3065
    %v3611 = vunpack.c.h.b16 %v3065
    %v3612 = vunpack.c.l.b16 %v3066
    %v3613 = vunpack.c.h.b16 %v3066
    %v3614 = vunpack.c.l.b16 %v3067
    %v3615 = vunpack.c.h.b16 %v3067
    %v3616 = vunpack.c.l.b16 %v3068
    %v3617 = vunpack.c.h.b16 %v3068
    %v3618 = vunpack.c.l.b16 %v3069
    %v3619 = vunpack.c.h.b16 %v3069
    %v3620 = vunpack.c.l.b16 %v3070
    %v3621 = vunpack.c.h.b16 %v3070
    %v3622 = vunpack.c.l.b16 %v3071
    %v3623 = vunpack.c.h.b16 %v3071
    %v3624 = vunpack.c.l.b16 %v3072
    %v3625 = vunpack.c.h.b16 %v3072
    %v3626 = vunpack.c.l.b16 %v3073
    %v3627 = vunpack.c.h.b16 %v3073
    %v3628 = vunpack.c.l.b16 %v3074
    %v3629 = vunpack.c.h.b16 %v3074
    %v3630 = vunpack.c.l.b16 %v3075
    %v3631 = vunpack.c.h.b16 %v3075
    %v3632 = vunpack.c.l.b16 %v3076
    %v3633 = vunpack.c.h.b16 %v3076
    %v3634 = vunpack.c.l.b16 %v3077
    %v3635 = vunpack.c.h.b16 %v3077
    %v3636 = vunpack.c.l.b16 %v3078
    %v3637 = vunpack.c.h.b16 %v3078
    %v3638 = vunpack.c.l.b16 %v3079
    %v3639 = vunpack.c.h.b16 %v3079
    %v3640 = vunpack.c.l.b16 %v3080
    %v3641 = vunpack.c.h.b16 %v3080
    %v3642 = vunpack.c.l.b16 %v3081
    %v3643 = vunpack.c.h.b16 %v3081
    %v3644 = vunpack.c.l.b16 %v3082
    %v3645 = vunpack.c.h.b16 %v3082
    %v3646 = vunpack.c.l.b16 %v3083
    %v3647 = vunpack.c.h.b16 %v3083
    %v3648 = vunpack.c.l.b16 %v3084
    %v3649 = vunpack.c.h.b16 %v3084
    %v3650 = vunpack.c.l.b16 %v3085
    %v3651 = vunpack.c.h.b16 %v3085
    %v3652 = vunpack.c.l.b16 %v3086
    %v3653 = vunpack.c.h.b16 %v3086
    %v3654 = vunpack.c.l.b16 %v3087
    %v3655 = vunpack.c.h.b16 %v3087
    %v3656 = vunpack.c.l.b16 %v3088
    %v3657 = vunpack.c.h.b16 %v3088
    %v3658 = vunpack.c.l.b16 %v3089
    %v3659 = vunpack.c.h.b16 %v3089
    %v3660 = vunpack.c.l.b16 %v3090
    %v3661 = vunpack.c.h.b16 %v3090
    %v3662 = vunpack.c.l.b16 %v3091
    %v3663 = vunpack.c.h.b16 %v3091
    %v3664 = vunpack.c.l.b16 %v3092
    %v3665 = vunpack.c.h.b16 %v3092
    %v3666 = vunpack.c.l.b16 %v3093
    %v3667 = vunpack.c.h.b16 %v3093
    %v3668 = vunpack.c.l.b16 %v3094
    %v3669 = vunpack.c.h.b16 %v3094
    %v3670 = vunpack.c.l.b16 %v3095
    %v3671 = vunpack.c.h.b16 %v3095
    %v3672 = vunpack.c.l.b16 %v3096
    %v3673 = vunpack.c.h.b16 %v3096
    %v3674 = vunpack.c.l.b16 %v3097
    %v3675 = vunpack.c.h.b16 %v3097
    %v3676 = vunpack.c.l.b16 %v3098
    %v3677 = vunpack.c.h.b16 %v3098
    %v3678 = vunpack.c.l.b16 %v3099
    %v3679 = vunpack.c.h.b16 %v3099
    %v3680 = vunpack.c.l.b16 %v3100
    %v3681 = vunpack.c.h.b16 %v3100
    %v3682 = vunpack.c.l.b16 %v3101
    %v3683 = vunpack.c.h.b16 %v3101
    %v3684 = vunpack.c.l.b16 %v3102
    %v3685 = vunpack.c.h.b16 %v3102
    %v3686 = vunpack.c.l.b16 %v3103
    %v3687 = vunpack.c.h.b16 %v3103
    %v3688 = vunpack.c.l.b16 %v3104
    %v3689 = vunpack.c.h.b16 %v3104
    %v3690 = vunpack.c.l.b16 %v3105
    %v3691 = vunpack.c.h.b16 %v3105
    %v3692 = vunpack.c.l.b16 %v3106
    %v3693 = vunpack.c.h.b16 %v3106
    %v3694 = vunpack.c.l.b16 %v3107
    %v3695 = vunpack.c.h.b16 %v3107
    %v3696 = vunpack.c.l.b16 %v3108
    %v3697 = vunpack.c.h.b16 %v3108
    %v3698 = vunpack.c.l.b16 %v3109
    %v3699 = vunpack.c.h.b16 %v3109
    %v3700 = vunpack.c.l.b16 %v3110
    %v3701 = vunpack.c.h.b16 %v3110
    %v3702 = vunpack.c.l.b16 %v3111
    %v3703 = vunpack.c.h.b16 %v3111
    %v3704 = vunpack.c.l.b16 %v3112
    %v3705 = vunpack.c.h.b16 %v3112
    %v3706 = vunpack.c.l.b16 %v3113
    %v3707 = vunpack.c.h.b16 %v3113
    %v3708 = vunpack.c.l.b16 %v3114
    %v3709 = vunpack.c.h.b16 %v3114
    %v3710 = vunpack.c.l.b16 %v3115
    %v3711 = vunpack.c.h.b16 %v3115
    %v3712 = vunpack.c.l.b16 %v3116
    %v3713 = vunpack.c.h.b16 %v3116
    %v3714 = vunpack.c.l.b16 %v3117
    %v3715 = vunpack.c.h.b16 %v3117
    %v3716 = vunpack.c.l.b16 %v3118
    %v3717 = vunpack.c.h.b16 %v3118
    %v3718 = vunpack.c.l.b16 %v3119
    %v3719 = vunpack.c.h.b16 %v3119
    %v3720 = vunpack.c.l.b16 %v3120
    %v3721 = vunpack.c.h.b16 %v3120
    %v3722 = vunpack.c.l.b16 %v3121
    %v3723 = vunpack.c.h.b16 %v3121
    %v3724 = vunpack.c.l.b16 %v3122
    %v3725 = vunpack.c.h.b16 %v3122
    %v3726 = vunpack.c.l.b16 %v3123
    %v3727 = vunpack.c.h.b16 %v3123
    %v3728 = vunpack.c.l.b16 %v3124
    %v3729 = vunpack.c.h.b16 %v3124
    %v3730 = vunpack.c.l.b16 %v3125
    %v3731 = vunpack.c.h.b16 %v3125
    %v3732 = vunpack.c.l.b16 %v3126
    %v3733 = vunpack.c.h.b16 %v3126
    %v3734 = vunpack.c.l.b16 %v3127
    %v3735 = vunpack.c.h.b16 %v3127
    %v3736 = vunpack.c.l.b16 %v3128
    %v3737 = vunpack.c.h.b16 %v3128
    %v3738 = vunpack.c.l.b16 %v3129
    %v3739 = vunpack.c.h.b16 %v3129
    %v3740 = vunpack.c.l.b16 %v3130
    %v3741 = vunpack.c.h.b16 %v3130
    %v3742 = vunpack.c.l.b16 %v3131
    %v3743 = vunpack.c.h.b16 %v3131
    %v3744 = vunpack.c.l.b16 %v3132
    %v3745 = vunpack.c.h.b16 %v3132
    %v3746 = vunpack.c.l.b16 %v3133
    %v3747 = vunpack.c.h.b16 %v3133
    %v3748 = vunpack.c.l.b16 %v3134
    %v3749 = vunpack.c.h.b16 %v3134
    %v3750 = vunpack.c.l.b16 %v3135
    %v3751 = vunpack.c.h.b16 %v3135
    %v3752 = vunpack.c.l.b16 %v3136
    %v3753 = vunpack.c.h.b16 %v3136
    %v3754 = vunpack.c.l.b16 %v3137
    %v3755 = vunpack.c.h.b16 %v3137
    %v3756 = vunpack.c.l.b16 %v3138
    %v3757 = vunpack.c.h.b16 %v3138
    %v3758 = vunpack.c.l.b16 %v3139
    %v3759 = vunpack.c.h.b16 %v3139
    %v3760 = vunpack.c.l.b16 %v3140
    %v3761 = vunpack.c.h.b16 %v3140
    %v3762 = vunpack.c.l.b16 %v3141
    %v3763 = vunpack.c.h.b16 %v3141
    %v3764 = vunpack.c.l.b16 %v3142
    %v3765 = vunpack.c.h.b16 %v3142
    %v3766 = vunpack.c.l.b16 %v3143
    %v3767 = vunpack.c.h.b16 %v3143
    %v3768 = vunpack.c.l.b16 %v3144
    %v3769 = vunpack.c.h.b16 %v3144
    %v3770 = vunpack.c.l.b16 %v3145
    %v3771 = vunpack.c.h.b16 %v3145
    %v3772 = vunpack.c.l.b16 %v3146
    %v3773 = vunpack.c.h.b16 %v3146
    %v3774 = vunpack.c.l.b16 %v3147
    %v3775 = vunpack.c.h.b16 %v3147
    %v3776 = vunpack.c.l.b16 %v3148
    %v3777 = vunpack.c.h.b16 %v3148
    %v3778 = vunpack.c.l.b16 %v3149
    %v3779 = vunpack.c.h.b16 %v3149
    %v3780 = vunpack.c.l.b16 %v3150
    %v3781 = vunpack.c.h.b16 %v3150
    %v3782 = vunpack.c.l.b16 %v3151
    %v3783 = vunpack.c.h.b16 %v3151
    %v3784 = vunpack.c.l.b16 %v3152
    %v3785 = vunpack.c.h.b16 %v3152
    %v3786 = vunpack.c.l.b16 %v3153
    %v3787 = vunpack.c.h.b16 %v3153
    %v3788 = vunpack.c.l.b16 %v3154
    %v3789 = vunpack.c.h.b16 %v3154
    %v3790 = vunpack.c.l.b16 %v3155
    %v3791 = vunpack.c.h.b16 %v3155
    %v3792 = vunpack.c.l.b16 %v3156
    %v3793 = vunpack.c.h.b16 %v3156
    %v3794 = vunpack.c.l.b16 %v3157
    %v3795 = vunpack.c.h.b16 %v3157
    %v3796 = vunpack.c.l.b16 %v3158
    %v3797 = vunpack.c.h.b16 %v3158
    %v3798 = vunpack.c.l.b16 %v3159
    %v3799 = vunpack.c.h.b16 %v3159
    %v3800 = vunpack.c.l.b16 %v3160
    %v3801 = vunpack.c.h.b16 %v3160
    %v3802 = vunpack.c.l.b16 %v3161
    %v3803 = vunpack.c.h.b16 %v3161
    %v3804 = vunpack.c.l.b16 %v3162
    %v3805 = vunpack.c.h.b16 %v3162
    %v3806 = vunpack.c.l.b16 %v3163
    %v3807 = vunpack.c.h.b16 %v3163
    %v3808 = vunpack.c.l.b16 %v3164
    %v3809 = vunpack.c.h.b16 %v3164
    %v3810 = vunpack.c.l.b16 %v3165
    %v3811 = vunpack.c.h.b16 %v3165
    %v3812 = vunpack.c.l.b16 %v3166
    %v3813 = vunpack.c.h.b16 %v3166
    %v3814 = vunpack.c.l.b16 %v3167
    %v3815 = vunpack.c.h.b16 %v3167
    %v3816 = vunpack.c.l.b16 %v3168
    %v3817 = vunpack.c.h.b16 %v3168
    %v3818 = vunpack.c.l.b16 %v3169
    %v3819 = vunpack.c.h.b16 %v3169
    %v3820 = vunpack.c.l.b16 %v3170
    %v3821 = vunpack.c.h.b16 %v3170
    %v3822 = vunpack.c.l.b16 %v3171
    %v3823 = vunpack.c.h.b16 %v3171
    %v3824 = vunpack.c.l.b16 %v3172
    %v3825 = vunpack.c.h.b16 %v3172
    %v3826 = vunpack.c.l.b16 %v3173
    %v3827 = vunpack.c.h.b16 %v3173
    %v3828 = vunpack.c.l.b16 %v3174
    %v3829 = vunpack.c.h.b16 %v3174
    %v3830 = vunpack.c.l.b16 %v3175
    %v3831 = vunpack.c.h.b16 %v3175
    %v3832 = vunpack.c.l.b16 %v3176
    %v3833 = vunpack.c.h.b16 %v3176
    %v3834 = vunpack.c.l.b16 %v3177
    %v3835 = vunpack.c.h.b16 %v3177
    %v3836 = vunpack.c.l.b16 %v3178
    %v3837 = vunpack.c.h.b16 %v3178
    %v3838 = vunpack.c.l.b16 %v3179
    %v3839 = vunpack.c.h.b16 %v3179
    %v3840 = vunpack.c.l.b16 %v3180
    %v3841 = vunpack.c.h.b16 %v3180
    %v3842 = vunpack.c.l.b16 %v3181
    %v3843 = vunpack.c.h.b16 %v3181
    %v3844 = vunpack.c.l.b16 %v3182
    %v3845 = vunpack.c.h.b16 %v3182
    %v3846 = vunpack.c.l.b16 %v3183
    %v3847 = vunpack.c.h.b16 %v3183
    %v3848 = vunpack.c.l.b16 %v3184
    %v3849 = vunpack.c.h.b16 %v3184
    %v3850 = vunpack.c.l.b16 %v3185
    %v3851 = vunpack.c.h.b16 %v3185
    %v3852 = vunpack.c.l.b16 %v3186
    %v3853 = vunpack.c.h.b16 %v3186
    %v3854 = vunpack.c.l.b16 %v3187
    %v3855 = vunpack.c.h.b16 %v3187
    %v3856 = vunpack.c.l.b16 %v3188
    %v3857 = vunpack.c.h.b16 %v3188
    %v3858 = vunpack.c.l.b16 %v3189
    %v3859 = vunpack.c.h.b16 %v3189
    %v3860 = vunpack.c.l.b16 %v3190
    %v3861 = vunpack.c.h.b16 %v3190
    %v3862 = vunpack.c.l.b16 %v3191
    %v3863 = vunpack.c.h.b16 %v3191
    %v3864 = vunpack.c.l.b16 %v3192
    %v3865 = vunpack.c.h.b16 %v3192
    %v3866 = vunpack.c.l.b16 %v3193
    %v3867 = vunpack.c.h.b16 %v3193
    %v3868 = vunpack.c.l.b16 %v3194
    %v3869 = vunpack.c.h.b16 %v3194
    %v3870 = vunpack.c.l.b16 %v3195
    %v3871 = vunpack.c.h.b16 %v3195
    %v3872 = vunpack.c.l.b16 %v3196
    %v3873 = vunpack.c.h.b16 %v3196
    %v3874 = vunpack.c.l.b16 %v3197
    %v3875 = vunpack.c.h.b16 %v3197
    %v3876 = vunpack.c.l.b16 %v3198
    %v3877 = vunpack.c.h.b16 %v3198
    %v3878 = vunpack.c.l.b16 %v3199
    %v3879 = vunpack.c.h.b16 %v3199
    %v3880 = vunpack.c.l.b16 %v3200
    %v3881 = vunpack.c.h.b16 %v3200
    %v3882 = vunpack.c.l.b16 %v3201
    %v3883 = vunpack.c.h.b16 %v3201
    %v3884 = vunpack.c.l.b16 %v3202
    %v3885 = vunpack.c.h.b16 %v3202
    %v3886 = vunpack.c.l.b16 %v3203
    %v3887 = vunpack.c.h.b16 %v3203
    %v3888 = vunpack.c.l.b16 %v3204
    %v3889 = vunpack.c.h.b16 %v3204
    %v3890 = vunpack.c.l.b16 %v3205
    %v3891 = vunpack.c.h.b16 %v3205
    %v3892 = vunpack.c.l.b16 %v3206
    %v3893 = vunpack.c.h.b16 %v3206
    %v3894 = vunpack.c.l.b16 %v3207
    %v3895 = vunpack.c.h.b16 %v3207
    %v3896 = vunpack.c.l.b16 %v3208
    %v3897 = vunpack.c.h.b16 %v3208
    %v3898 = vunpack.c.l.b16 %v3209
    %v3899 = vunpack.c.h.b16 %v3209
    %v3900 = vunpack.c.l.b16 %v3210
    %v3901 = vunpack.c.h.b16 %v3210
    %v3902 = vunpack.c.l.b16 %v3211
    %v3903 = vunpack.c.h.b16 %v3211
    %v3904 = vunpack.c.l.b16 %v3212
    %v3905 = vunpack.c.h.b16 %v3212
    %v3906 = vunpack.c.l.b16 %v3213
    %v3907 = vunpack.c.h.b16 %v3213
    %v3908 = vunpack.c.l.b16 %v3214
    %v3909 = vunpack.c.h.b16 %v3214
    %v3910 = vunpack.c.l.b16 %v3215
    %v3911 = vunpack.c.h.b16 %v3215
    %v3912 = vunpack.c.l.b16 %v3216
    %v3913 = vunpack.c.h.b16 %v3216
    %v3914 = vunpack.c.l.b16 %v3217
    %v3915 = vunpack.c.h.b16 %v3217
    %v3916 = vunpack.c.l.b16 %v3218
    %v3917 = vunpack.c.h.b16 %v3218
    %v3918 = vunpack.c.l.b16 %v3219
    %v3919 = vunpack.c.h.b16 %v3219
    %v3920 = vunpack.c.l.b16 %v3220
    %v3921 = vunpack.c.h.b16 %v3220
    %v3922 = vunpack.c.l.b16 %v3221
    %v3923 = vunpack.c.h.b16 %v3221
    %v3924 = vunpack.c.l.b16 %v3222
    %v3925 = vunpack.c.h.b16 %v3222
    %v3926 = vunpack.c.l.b16 %v3223
    %v3927 = vunpack.c.h.b16 %v3223
    %v3928 = vunpack.c.l.b16 %v3224
    %v3929 = vunpack.c.h.b16 %v3224
    %v3930 = vunpack.c.l.b16 %v3225
    %v3931 = vunpack.c.h.b16 %v3225
    %v3932 = vunpack.c.l.b16 %v3226
    %v3933 = vunpack.c.h.b16 %v3226
    %v3934 = vunpack.c.l.b16 %v3227
    %v3935 = vunpack.c.h.b16 %v3227
    %v3936 = vunpack.c.l.b16 %v3228
    %v3937 = vunpack.c.h.b16 %v3228
    %v3938 = vunpack.c.l.b16 %v3229
    %v3939 = vunpack.c.h.b16 %v3229
    %v3940 = vunpack.c.l.b16 %v3230
    %v3941 = vunpack.c.h.b16 %v3230
    %v3942 = vunpack.c.l.b16 %v3231
    %v3943 = vunpack.c.h.b16 %v3231
    %v3944 = vunpack.c.l.b16 %v3232
    %v3945 = vunpack.c.h.b16 %v3232
    %v3946 = vunpack.c.l.b16 %v3233
    %v3947 = vunpack.c.h.b16 %v3233
    %v3948 = vunpack.c.l.b16 %v3234
    %v3949 = vunpack.c.h.b16 %v3234
    %v3950 = vunpack.c.l.b16 %v3235
    %v3951 = vunpack.c.h.b16 %v3235
    %v3952 = vunpack.c.l.b16 %v3236
    %v3953 = vunpack.c.h.b16 %v3236
    %v3954 = vunpack.c.l.b16 %v3237
    %v3955 = vunpack.c.h.b16 %v3237
    %v3956 = vunpack.c.l.b16 %v3238
    %v3957 = vunpack.c.h.b16 %v3238
    %v3958 = vunpack.c.l.b16 %v3239
    %v3959 = vunpack.c.h.b16 %v3239
    %v3960 = vunpack.c.l.b16 %v3240
    %v3961 = vunpack.c.h.b16 %v3240
    %v3962 = vunpack.c.l.b16 %v3241
    %v3963 = vunpack.c.h.b16 %v3241
    %v3964 = vunpack.c.l.b16 %v3242
    %v3965 = vunpack.c.h.b16 %v3242
    %v3966 = vunpack.c.l.b16 %v3243
    %v3967 = vunpack.c.h.b16 %v3243
    %v3968 = vunpack.c.l.b16 %v3244
    %v3969 = vunpack.c.h.b16 %v3244
    %v3970 = vunpack.c.l.b16 %v3245
    %v3971 = vunpack.c.h.b16 %v3245
    %v3972 = vunpack.c.l.b16 %v3246
    %v3973 = vunpack.c.h.b16 %v3246
    %v3974 = vunpack.c.l.b16 %v3247
    %v3975 = vunpack.c.h.b16 %v3247
    %v3976 = vunpack.c.l.b16 %v3248
    %v3977 = vunpack.c.h.b16 %v3248
    %v3978 = vunpack.c.l.b16 %v3249
    %v3979 = vunpack.c.h.b16 %v3249
    %v3980 = vunpack.c.l.b16 %v3250
    %v3981 = vunpack.c.h.b16 %v3250
    %v3982 = vunpack.c.l.b16 %v3251
    %v3983 = vunpack.c.h.b16 %v3251
    %v3984 = vunpack.c.l.b16 %v3252
    %v3985 = vunpack.c.h.b16 %v3252
    %v3986 = vunpack.c.l.b16 %v3253
    %v3987 = vunpack.c.h.b16 %v3253
    %v3988 = vunpack.c.l.b16 %v3254
    %v3989 = vunpack.c.h.b16 %v3254
    %v3990 = vunpack.c.l.b16 %v3255
    %v3991 = vunpack.c.h.b16 %v3255
    %v3992 = vunpack.c.l.b16 %v3256
    %v3993 = vunpack.c.h.b16 %v3256
    %v3994 = vunpack.c.l.b16 %v3257
    %v3995 = vunpack.c.h.b16 %v3257
    %v3996 = vunpack.c.l.b16 %v3258
    %v3997 = vunpack.c.h.b16 %v3258
    %v3998 = vunpack.c.l.b16 %v3259
    %v3999 = vunpack.c.h.b16 %v3259
    %v4000 = vunpack.c.l.b16 %v3260
    %v4001 = vunpack.c.h.b16 %v3260
    %v4002 = vunpack.c.l.b16 %v3261
    %v4003 = vunpack.c.h.b16 %v3261
    %v4004 = vunpack.c.l.b16 %v3262
    %v4005 = vunpack.c.h.b16 %v3262
    %v4006 = vunpack.c.l.b16 %v3263
    %v4007 = vunpack.c.h.b16 %v3263
    %v4008 = vunpack.c.l.b16 %v3264
    %v4009 = vunpack.c.h.b16 %v3264
    %v4010 = vunpack.c.l.b16 %v3265
    %v4011 = vunpack.c.h.b16 %v3265
    %v4012 = vunpack.c.l.b16 %v3266
    %v4013 = vunpack.c.h.b16 %v3266
    %v4014 = vunpack.c.l.b16 %v3267
    %v4015 = vunpack.c.h.b16 %v3267
    %v4016 = vunpack.c.l.b16 %v3268
    %v4017 = vunpack.c.h.b16 %v3268
    %v4018 = vunpack.c.l.b16 %v3269
    %v4019 = vunpack.c.h.b16 %v3269
    %v4020 = vunpack.c.l.b16 %v3270
    %v4021 = vunpack.c.h.b16 %v3270
    %v4022 = vunpack.c.l.b16 %v3271
    %v4023 = vunpack.c.h.b16 %v3271
    %v4024 = vunpack.c.l.b16 %v3272
    %v4025 = vunpack.c.h.b16 %v3272
    %v4026 = vunpack.c.l.b16 %v3273
    %v4027 = vunpack.c.h.b16 %v3273
    %v4028 = vunpack.c.l.b16 %v3274
    %v4029 = vunpack.c.h.b16 %v3274
    %v4030 = vunpack.c.l.b16 %v3275
    %v4031 = vunpack.c.h.b16 %v3275
    %v4032 = vunpack.c.l.b16 %v3276
    %v4033 = vunpack.c.h.b16 %v3276
    %v4034 = vunpack.c.l.b16 %v3277
    %v4035 = vunpack.c.h.b16 %v3277
    %v4036 = vunpack.c.l.b16 %v3278
    %v4037 = vunpack.c.h.b16 %v3278
    %v4038 = vunpack.c.l.b16 %v3279
    %v4039 = vunpack.c.h.b16 %v3279
    %v4040 = vunpack.c.l.b16 %v3280
    %v4041 = vunpack.c.h.b16 %v3280
    %v4042 = vunpack.c.l.b16 %v3281
    %v4043 = vunpack.c.h.b16 %v3281
    %v4044 = vunpack.c.l.b16 %v3282
    %v4045 = vunpack.c.h.b16 %v3282
    %v4046 = vunpack.c.l.b16 %v3283
    %v4047 = vunpack.c.h.b16 %v3283
    %v4048 = vunpack.c.l.b16 %v3284
    %v4049 = vunpack.c.h.b16 %v3284
    %v4050 = vunpack.c.l.b16 %v3285
    %v4051 = vunpack.c.h.b16 %v3285
    %v4052 = vunpack.c.l.b16 %v3286
    %v4053 = vunpack.c.h.b16 %v3286
    %v4054 = vunpack.c.l.b16 %v3287
    %v4055 = vunpack.c.h.b16 %v3287
    %v4056 = vunpack.c.l.b16 %v3288
    %v4057 = vunpack.c.h.b16 %v3288
    %v4058 = vunpack.c.l.b16 %v3289
    %v4059 = vunpack.c.h.b16 %v3289
    %v4060 = vunpack.c.l.b16 %v3290
    %v4061 = vunpack.c.h.b16 %v3290
    %v4062 = vunpack.c.l.b16 %v3291
    %v4063 = vunpack.c.h.b16 %v3291
    %v4064 = vunpack.c.l.b16 %v3292
    %v4065 = vunpack.c.h.b16 %v3292
    %v4066 = vunpack.c.l.b16 %v3293
    %v4067 = vunpack.c.h.b16 %v3293
    %v4068 = vunpack.c.l.b16 %v3294
    %v4069 = vunpack.c.h.b16 %v3294
    %v4070 = vunpack.c.l.b16 %v3295
    %v4071 = vunpack.c.h.b16 %v3295
    %v4072 = vunpack.c.l.b16 %v3296
    %v4073 = vunpack.c.h.b16 %v3296
    %v4074 = vunpack.c.l.b16 %v3297
    %v4075 = vunpack.c.h.b16 %v3297
    %v4076 = vpack.c.b16 %v3568, %v3564
    %v4077 = vpack.c.b16 %v3569, %v3565
    %v4078 = vpack.c.b16 %v3570, %v3566
    %v4079 = vpack.c.b16 %v3571, %v3567
    %v4080 = vpack.c.b16 %v3576, %v3572
    %v4081 = vpack.c.b16 %v3577, %v3573
    %v4082 = vpack.c.b16 %v3578, %v3574
    %v4083 = vpack.c.b16 %v3579, %v3575
    %v4084 = vpack.c.b16 %v3584, %v3580
    %v4085 = vpack.c.b16 %v3585, %v3581
    %v4086 = vpack.c.b16 %v3586, %v3582
    %v4087 = vpack.c.b16 %v3587, %v3583
    %v4088 = vpack.c.b16 %v3592, %v3588
    %v4089 = vpack.c.b16 %v3593, %v3589
    %v4090 = vpack.c.b16 %v3594, %v3590
    %v4091 = vpack.c.b16 %v3595, %v3591
    %v4092 = vpack.c.b16 %v3600, %v3596
    %v4093 = vpack.c.b16 %v3601, %v3597
    %v4094 = vpack.c.b16 %v3602, %v3598
    %v4095 = vpack.c.b16 %v3603, %v3599
    %v4096 = vpack.c.b16 %v3608, %v3604
    %v4097 = vpack.c.b16 %v3609, %v3605
    %v4098 = vpack.c.b16 %v3610, %v3606
    %v4099 = vpack.c.b16 %v3611, %v3607
    %v4100 = vpack.c.b16 %v3616, %v3612
    %v4101 = vpack.c.b16 %v3617, %v3613
    %v4102 = vpack.c.b16 %v3618, %v3614
    %v4103 = vpack.c.b16 %v3619, %v3615
    %v4104 = vpack.c.b16 %v3624, %v3620
    %v4105 = vpack.c.b16 %v3625, %v3621
    %v4106 = vpack.c.b16 %v3626, %v3622
    %v4107 = vpack.c.b16 %v3627, %v3623
    %v4108 = vpack.c.b16 %v3632, %v3628
    %v4109 = vpack.c.b16 %v3633, %v3629
    %v4110 = vpack.c.b16 %v3634, %v3630
    %v4111 = vpack.c.b16 %v3635, %v3631
    %v4112 = vpack.c.b16 %v3640, %v3636
    %v4113 = vpack.c.b16 %v3641, %v3637
    %v4114 = vpack.c.b16 %v3642, %v3638
    %v4115 = vpack.c.b16 %v3643, %v3639
    %v4116 = vpack.c.b16 %v3648, %v3644
    %v4117 = vpack.c.b16 %v3649, %v3645
    %v4118 = vpack.c.b16 %v3650, %v3646
    %v4119 = vpack.c.b16 %v3651, %v3647
    %v4120 = vpack.c.b16 %v3656, %v3652
    %v4121 = vpack.c.b16 %v3657, %v3653
    %v4122 = vpack.c.b16 %v3658, %v3654
    %v4123 = vpack.c.b16 %v3659, %v3655
    %v4124 = vpack.c.b16 %v3664, %v3660
    %v4125 = vpack.c.b16 %v3665, %v3661
    %v4126 = vpack.c.b16 %v3666, %v3662
    %v4127 = vpack.c.b16 %v3667, %v3663
    %v4128 = vpack.c.b16 %v3672, %v3668
    %v4129 = vpack.c.b16 %v3673, %v3669
    %v4130 = vpack.c.b16 %v3674, %v3670
    %v4131 = vpack.c.b16 %v3675, %v3671
    %v4132 = vpack.c.b16 %v3680, %v3676
    %v4133 = vpack.c.b16 %v3681, %v3677
    %v4134 = vpack.c.b16 %v3682, %v3678
    %v4135 = vpack.c.b16 %v3683, %v3679
    %v4136 = vpack.c.b16 %v3688, %v3684
    %v4137 = vpack.c.b16 %v3689, %v3685
    %v4138 = vpack.c.b16 %v3690, %v3686
    %v4139 = vpack.c.b16 %v3691, %v3687
    %v4140 = vpack.c.b16 %v3696, %v3692
    %v4141 = vpack.c.b16 %v3697, %v3693
    %v4142 = vpack.c.b16 %v3698, %v3694
    %v4143 = vpack.c.b16 %v3699, %v3695
    %v4144 = vpack.c.b16 %v3704, %v3700
    %v4145 = vpack.c.b16 %v3705, %v3701
    %v4146 = vpack.c.b16 %v3706, %v3702
    %v4147 = vpack.c.b16 %v3707, %v3703
    %v4148 = vpack.c.b16 %v3712, %v3708
    %v4149 = vpack.c.b16 %v3713, %v3709
    %v4150 = vpack.c.b16 %v3714, %v3710
    %v4151 = vpack.c.b16 %v3715, %v3711
    %v4152 = vpack.c.b16 %v3720, %v3716
    %v4153 = vpack.c.b16 %v3721, %v3717
    %v4154 = vpack.c.b16 %v3722, %v3718
    %v4155 = vpack.c.b16 %v3723, %v3719
    %v4156 = vpack.c.b16 %v3728, %v3724
    %v4157 = vpack.c.b16 %v3729, %v3725
    %v4158 = vpack.c.b16 %v3730, %v3726
    %v4159 = vpack.c.b16 %v3731, %v3727
    %v4160 = vpack.c.b16 %v3736, %v3732
    %v4161 = vpack.c.b16 %v3737, %v3733
    %v4162 = vpack.c.b16 %v3738, %v3734
    %v4163 = vpack.c.b16 %v3739, %v3735
    %v4164 = vpack.c.b16 %v3744, %v3740
    %v4165 = vpack.c.b16 %v3745, %v3741
    %v4166 = vpack.c.b16 %v3746, %v3742
    %v4167 = vpack.c.b16 %v3747, %v3743
    %v4168 = vpack.c.b16 %v3752, %v3748
    %v4169 = vpack.c.b16 %v3753, %v3749
    %v4170 = vpack.c.b16 %v3754, %v3750
    %v4171 = vpack.c.b16 %v3755, %v3751
    %v4172 = vpack.c.b16 %v3760, %v3756
    %v4173 = vpack.c.b16 %v3761, %v3757
    %v4174 = vpack.c.b16 %v3762, %v3758
    %v4175 = vpack.c.b16 %v3763, %v3759
    %v4176 = vpack.c.b16 %v3768, %v3764
    %v4177 = vpack.c.b16 %v3769, %v3765
    %v4178 = vpack.c.b16 %v3770, %v3766
    %v4179 = vpack.c.b16 %v3771, %v3767
    %v4180 = vpack.c.b16 %v3776, %v3772
    %v4181 = vpack.c.b16 %v3777, %v3773
    %v4182 = vpack.c.b16 %v3778, %v3774
    %v4183 = vpack.c.b16 %v3779, %v3775
    %v4184 = vpack.c.b16 %v3784, %v3780
    %v4185 = vpack.c.b16 %v3785, %v3781
    %v4186 = vpack.c.b16 %v3786, %v3782
    %v4187 = vpack.c.b16 %v3787, %v3783
    %v4188 = vpack.c.b16 %v3792, %v3788
    %v4189 = vpack.c.b16 %v3793, %v3789
    %v4190 = vpack.c.b16 %v3794, %v3790
    %v4191 = vpack.c.b16 %v3795, %v3791
    %v4192 = vpack.c.b16 %v3800, %v3796
    %v4193 = vpack.c.b16 %v3801, %v3797
    %v4194 = vpack.c.b16 %v3802, %v3798
    %v4195 = vpack.c.b16 %v3803, %v3799
    %v4196 = vpack.c.b16 %v3808, %v3804
    %v4197 = vpack.c.b16 %v3809, %v3805
    %v4198 = vpack.c.b16 %v3810, %v3806
    %v4199 = vpack.c.b16 %v3811, %v3807
    %v4200 = vpack.c.b16 %v3816, %v3812
    %v4201 = vpack.c.b16 %v3817, %v3813
    %v4202 = vpack.c.b16 %v3818, %v3814
    %v4203 = vpack.c.b16 %v3819, %v3815
    %v4204 = vpack.c.b16 %v3824, %v3820
    %v4205 = vpack.c.b16 %v3825, %v3821
    %v4206 = vpack.c.b16 %v3826, %v3822
    %v4207 = vpack.c.b16 %v3827, %v3823
    %v4208 = vpack.c.b16 %v3832, %v3828
    %v4209 = vpack.c.b16 %v3833, %v3829
    %v4210 = vpack.c.b16 %v3834, %v3830
    %v4211 = vpack.c.b16 %v3835, %v3831
    %v4212 = vpack.c.b16 %v3840, %v3836
    %v4213 = vpack.c.b16 %v3841, %v3837
    %v4214 = vpack.c.b16 %v3842, %v3838
    %v4215 = vpack.c.b16 %v3843, %v3839
    %v4216 = vpack.c.b16 %v3848, %v3844
    %v4217 = vpack.c.b16 %v3849, %v3845
    %v4218 = vpack.c.b16 %v3850, %v3846
    %v4219 = vpack.c.b16 %v3851, %v3847
    %v4220 = vpack.c.b16 %v3856, %v3852
    %v4221 = vpack.c.b16 %v3857, %v3853
    %v4222 = vpack.c.b16 %v3858, %v3854
    %v4223 = vpack.c.b16 %v3859, %v3855
    %v4224 = vpack.c.b16 %v3864, %v3860
    %v4225 = vpack.c.b16 %v3865, %v3861
    %v4226 = vpack.c.b16 %v3866, %v3862
    %v4227 = vpack.c.b16 %v3867, %v3863
    %v4228 = vpack.c.b16 %v3872, %v3868
    %v4229 = vpack.c.b16 %v3873, %v3869
    %v4230 = vpack.c.b16 %v3874, %v3870
    %v4231 = vpack.c.b16 %v3875, %v3871
    %v4232 = vpack.c.b16 %v3880, %v3876
    %v4233 = vpack.c.b16 %v3881, %v3877
    %v4234 = vpack.c.b16 %v3882, %v3878
    %v4235 = vpack.c.b16 %v3883, %v3879
    %v4236 = vpack.c.b16 %v3888, %v3884
    %v4237 = vpack.c.b16 %v3889, %v3885
    %v4238 = vpack.c.b16 %v3890, %v3886
    %v4239 = vpack.c.b16 %v3891, %v3887
    %v4240 = vpack.c.b16 %v3896, %v3892
    %v4241 = vpack.c.b16 %v3897, %v3893
    %v4242 = vpack.c.b16 %v3898, %v3894
    %v4243 = vpack.c.b16 %v3899, %v3895
    %v4244 = vpack.c.b16 %v3904, %v3900
    %v4245 = vpack.c.b16 %v3905, %v3901
    %v4246 = vpack.c.b16 %v3906, %v3902
    %v4247 = vpack.c.b16 %v3907, %v3903
    %v4248 = vpack.c.b16 %v3912, %v3908
    %v4249 = vpack.c.b16 %v3913, %v3909
    %v4250 = vpack.c.b16 %v3914, %v3910
    %v4251 = vpack.c.b16 %v3915, %v3911
    %v4252 = vpack.c.b16 %v3920, %v3916
    %v4253 = vpack.c.b16 %v3921, %v3917
    %v4254 = vpack.c.b16 %v3922, %v3918
    %v4255 = vpack.c.b16 %v3923, %v3919
    %v4256 = vpack.c.b16 %v3928, %v3924
    %v4257 = vpack.c.b16 %v3929, %v3925
    %v4258 = vpack.c.b16 %v3930, %v3926
    %v4259 = vpack.c.b16 %v3931, %v3927
    %v4260 = vpack.c.b16 %v3936, %v3932
    %v4261 = vpack.c.b16 %v3937, %v3933
    %v4262 = vpack.c.b16 %v3938, %v3934
    %v4263 = vpack.c.b16 %v3939, %v3935
    %v4264 = vpack.c.b16 %v3944, %v3940
    %v4265 = vpack.c.b16 %v3945, %v3941
    %v4266 = vpack.c.b16 %v3946, %v3942
    %v4267 = vpack.c.b16 %v3947, %v3943
    %v4268 = vpack.c.b16 %v3952, %v3948
    %v4269 = vpack.c.b16 %v3953, %v3949
    %v4270 = vpack.c.b16 %v3954, %v3950
    %v4271 = vpack.c.b16 %v3955, %v3951
    %v4272 = vpack.c.b16 %v3960, %v3956
    %v4273 = vpack.c.b16 %v3961, %v3957
    %v4274 = vpack.c.b16 %v3962, %v3958
    %v4275 = vpack.c.b16 %v3963, %v3959
    %v4276 = vpack.c.b16 %v3968, %v3964
    %v4277 = vpack.c.b16 %v3969, %v3965
    %v4278 = vpack.c.b16 %v3970, %v3966
    %v4279 = vpack.c.b16 %v3971, %v3967
    %v4280 = vpack.c.b16 %v3976, %v3972
    %v4281 = vpack.c.b16 %v3977, %v3973
    %v4282 = vpack.c.b16 %v3978, %v3974
    %v4283 = vpack.c.b16 %v3979, %v3975
    %v4284 = vpack.c.b16 %v3984, %v3980
    %v4285 = vpack.c.b16 %v3985, %v3981
    %v4286 = vpack.c.b16 %v3986, %v3982
    %v4287 = vpack.c.b16 %v3987, %v3983
    %v4288 = vpack.c.b16 %v3992, %v3988
    %v4289 = vpack.c.b16 %v3993, %v3989
    %v4290 = vpack.c.b16 %v3994, %v3990
    %v4291 = vpack.c.b16 %v3995, %v3991
    %v4292 = vpack.c.b16 %v4000, %v3996
    %v4293 = vpack.c.b16 %v4001, %v3997
    %v4294 = vpack.c.b16 %v4002, %v3998
    %v4295 = vpack.c.b16 %v4003, %v3999
    %v4296 = vpack.c.b16 %v4008, %v4004
    %v4297 = vpack.c.b16 %v4009, %v4005
    %v4298 = vpack.c.b16 %v4010, %v4006
    %v4299 = vpack.c.b16 %v4011, %v4007
    %v4300 = vpack.c.b16 %v4016, %v4012
    %v4301 = vpack.c.b16 %v4017, %v4013
    %v4302 = vpack.c.b16 %v4018, %v4014
    %v4303 = vpack.c.b16 %v4019, %v4015
    %v4304 = vpack.c.b16 %v4024, %v4020
    %v4305 = vpack.c.b16 %v4025, %v4021
    %v4306 = vpack.c.b16 %v4026, %v4022
    %v4307 = vpack.c.b16 %v4027, %v4023
    %v4308 = vpack.c.b16 %v4032, %v4028
    %v4309 = vpack.c.b16 %v4033, %v4029
    %v4310 = vpack.c.b16 %v4034, %v4030
    %v4311 = vpack.c.b16 %v4035, %v4031
    %v4312 = vpack.c.b16 %v4040, %v4036
    %v4313 = vpack.c.b16 %v4041, %v4037
    %v4314 = vpack.c.b16 %v4042, %v4038
    %v4315 = vpack.c.b16 %v4043, %v4039
    %v4316 = vpack.c.b16 %v4048, %v4044
    %v4317 = vpack.c.b16 %v4049, %v4045
    %v4318 = vpack.c.b16 %v4050, %v4046
    %v4319 = vpack.c.b16 %v4051, %v4047
    %v4320 = vpack.c.b16 %v4056, %v4052
    %v4321 = vpack.c.b16 %v4057, %v4053
    %v4322 = vpack.c.b16 %v4058, %v4054
    %v4323 = vpack.c.b16 %v4059, %v4055
    %v4324 = vpack.c.b16 %v4064, %v4060
    %v4325 = vpack.c.b16 %v4065, %v4061
    %v4326 = vpack.c.b16 %v4066, %v4062
    %v4327 = vpack.c.b16 %v4067, %v4063
    %v4328 = vpack.c.b16 %v4072, %v4068
    %v4329 = vpack.c.b16 %v4073, %v4069
    %v4330 = vpack.c.b16 %v4074, %v4070
    %v4331 = vpack.c.b16 %v4075, %v4071
    %4588 = vmatpush.bf16.msra.mxu0 %v4104
    %4589 = vmatpush.bf16.msra.mxu0 %v4100
    %4590 = vmatpush.bf16.msra.mxu0 %v4096
    %4591 = vmatpush.bf16.msra.mxu0 %v4092
    %4592 = vmatpush.bf16.msra.mxu0 %v4088
    %4593 = vmatpush.bf16.msra.mxu0 %v4084
    %4594 = vmatpush.bf16.msra.mxu0 %v4080
    %4595 = vmatpush.bf16.msra.mxu0 %v4076
    %4596 = vmatmul.bf16.gmra.mxu0 %v3034
    %v4597 = vpop.f32.mrf.mxu0
    %v4598 = vadd.f32 %v3300, %v4597
    %v4599 = vpop.f32.mrf.mxu0
    %v4600 = vadd.f32 %v3300, %v4599
    %4601 = vdwg.mxu0
    %4602 = vmatpush.bf16.msra.mxu0 %v4136
    %4603 = vmatpush.bf16.msra.mxu0 %v4132
    %4604 = vmatpush.bf16.msra.mxu0 %v4128
    %4605 = vmatpush.bf16.msra.mxu0 %v4124
    %4606 = vmatpush.bf16.msra.mxu0 %v4120
    %4607 = vmatpush.bf16.msra.mxu0 %v4116
    %4608 = vmatpush.bf16.msra.mxu0 %v4112
    %4609 = vmatpush.bf16.msra.mxu0 %v4108
    %4610 = vmatmul.bf16.gmra.mxu0 %v3035
    %v4611 = vpop.f32.mrf.mxu0
    %v4612 = vadd.f32 %v4598, %v4611
    %v4613 = vpop.f32.mrf.mxu0
    %v4614 = vadd.f32 %v4600, %v4613
    %4615 = vdwg.mxu0
    %4616 = vmatpush.bf16.msra.mxu0 %v4168
    %4617 = vmatpush.bf16.msra.mxu0 %v4164
    %4618 = vmatpush.bf16.msra.mxu0 %v4160
    %4619 = vmatpush.bf16.msra.mxu0 %v4156
    %4620 = vmatpush.bf16.msra.mxu0 %v4152
    %4621 = vmatpush.bf16.msra.mxu0 %v4148
    %4622 = vmatpush.bf16.msra.mxu0 %v4144
    %4623 = vmatpush.bf16.msra.mxu0 %v4140
    %4624 = vmatmul.bf16.gmra.mxu0 %v3036
    %v4625 = vpop.f32.mrf.mxu0
    %v4626 = vadd.f32 %v4612, %v4625
    %v4627 = vpop.f32.mrf.mxu0
    %v4628 = vadd.f32 %v4614, %v4627
    %4629 = vdwg.mxu0
    %4630 = vmatpush.bf16.msra.mxu0 %v4200
    %4631 = vmatpush.bf16.msra.mxu0 %v4196
    %4632 = vmatpush.bf16.msra.mxu0 %v4192
    %4633 = vmatpush.bf16.msra.mxu0 %v4188
    %4634 = vmatpush.bf16.msra.mxu0 %v4184
    %4635 = vmatpush.bf16.msra.mxu0 %v4180
    %4636 = vmatpush.bf16.msra.mxu0 %v4176
    %4637 = vmatpush.bf16.msra.mxu0 %v4172
    %4638 = vmatmul.bf16.gmra.mxu0 %v3037
    %v4639 = vpop.f32.mrf.mxu0
    %v4640 = vadd.f32 %v4626, %v4639
    %v4641 = vpop.f32.mrf.mxu0
    %v4642 = vadd.f32 %v4628, %v4641
    %4643 = vdwg.mxu0
    %4644 = vmatpush.bf16.msra.mxu0 %v4232
    %4645 = vmatpush.bf16.msra.mxu0 %v4228
    %4646 = vmatpush.bf16.msra.mxu0 %v4224
    %4647 = vmatpush.bf16.msra.mxu0 %v4220
    %4648 = vmatpush.bf16.msra.mxu0 %v4216
    %4649 = vmatpush.bf16.msra.mxu0 %v4212
    %4650 = vmatpush.bf16.msra.mxu0 %v4208
    %4651 = vmatpush.bf16.msra.mxu0 %v4204
    %4652 = vmatmul.bf16.gmra.mxu0 %v3038
    %v4653 = vpop.f32.mrf.mxu0
    %v4654 = vadd.f32 %v4640, %v4653
    %v4655 = vpop.f32.mrf.mxu0
    %v4656 = vadd.f32 %v4642, %v4655
    %4657 = vdwg.mxu0
    %4658 = vmatpush.bf16.msra.mxu0 %v4264
    %4659 = vmatpush.bf16.msra.mxu0 %v4260
    %4660 = vmatpush.bf16.msra.mxu0 %v4256
    %4661 = vmatpush.bf16.msra.mxu0 %v4252
    %4662 = vmatpush.bf16.msra.mxu0 %v4248
    %4663 = vmatpush.bf16.msra.mxu0 %v4244
    %4664 = vmatpush.bf16.msra.mxu0 %v4240
    %4665 = vmatpush.bf16.msra.mxu0 %v4236
    %4666 = vmatmul.bf16.gmra.mxu0 %v3039
    %v4667 = vpop.f32.mrf.mxu0
    %v4668 = vadd.f32 %v4654, %v4667
    %v4669 = vpop.f32.mrf.mxu0
    %v4670 = vadd.f32 %v4656, %v4669
    %4671 = vdwg.mxu0
    %4672 = vmatpush.bf16.msra.mxu0 %v4296
    %4673 = vmatpush.bf16.msra.mxu0 %v4292
    %4674 = vmatpush.bf16.msra.mxu0 %v4288
    %4675 = vmatpush.bf16.msra.mxu0 %v4284
    %4676 = vmatpush.bf16.msra.mxu0 %v4280
    %4677 = vmatpush.bf16.msra.mxu0 %v4276
    %4678 = vmatpush.bf16.msra.mxu0 %v4272
    %4679 = vmatpush.bf16.msra.mxu0 %v4268
    %4680 = vmatmul.bf16.gmra.mxu0 %v3040
    %v4681 = vpop.f32.mrf.mxu0
    %v4682 = vadd.f32 %v4668, %v4681
    %v4683 = vpop.f32.mrf.mxu0
    %v4684 = vadd.f32 %v4670, %v4683
    %4685 = vdwg.mxu0
    %4686 = vmatpush.bf16.msra.mxu0 %v4328
    %4687 = vmatpush.bf16.msra.mxu0 %v4324
    %4688 = vmatpush.bf16.msra.mxu0 %v4320
    %4689 = vmatpush.bf16.msra.mxu0 %v4316
    %4690 = vmatpush.bf16.msra.mxu0 %v4312
    %4691 = vmatpush.bf16.msra.mxu0 %v4308
    %4692 = vmatpush.bf16.msra.mxu0 %v4304
    %4693 = vmatpush.bf16.msra.mxu0 %v4300
    %4694 = vmatmul.bf16.gmra.mxu0 %v3041
    %v4695 = vpop.f32.mrf.mxu0
    %v4696 = vadd.f32 %v4682, %v4695
    %v4697 = vpop.f32.mrf.mxu0
    %v4698 = vadd.f32 %v4684, %v4697
    %4699 = vdwg.mxu0
    %4700 = vmatpush.bf16.msra.mxu0 %v4105
    %4701 = vmatpush.bf16.msra.mxu0 %v4101
    %4702 = vmatpush.bf16.msra.mxu0 %v4097
    %4703 = vmatpush.bf16.msra.mxu0 %v4093
    %4704 = vmatpush.bf16.msra.mxu0 %v4089
    %4705 = vmatpush.bf16.msra.mxu0 %v4085
    %4706 = vmatpush.bf16.msra.mxu0 %v4081
    %4707 = vmatpush.bf16.msra.mxu0 %v4077
    %4708 = vmatmul.bf16.gmra.mxu0 %v3034
    %v4709 = vpop.f32.mrf.mxu0
    %v4710 = vadd.f32 %v3301, %v4709
    %v4711 = vpop.f32.mrf.mxu0
    %v4712 = vadd.f32 %v3301, %v4711
    %4713 = vdwg.mxu0
    %4714 = vmatpush.bf16.msra.mxu0 %v4137
    %4715 = vmatpush.bf16.msra.mxu0 %v4133
    %4716 = vmatpush.bf16.msra.mxu0 %v4129
    %4717 = vmatpush.bf16.msra.mxu0 %v4125
    %4718 = vmatpush.bf16.msra.mxu0 %v4121
    %4719 = vmatpush.bf16.msra.mxu0 %v4117
    %4720 = vmatpush.bf16.msra.mxu0 %v4113
    %4721 = vmatpush.bf16.msra.mxu0 %v4109
    %4722 = vmatmul.bf16.gmra.mxu0 %v3035
    %v4723 = vpop.f32.mrf.mxu0
    %v4724 = vadd.f32 %v4710, %v4723
    %v4725 = vpop.f32.mrf.mxu0
    %v4726 = vadd.f32 %v4712, %v4725
    %4727 = vdwg.mxu0
    %4728 = vmatpush.bf16.msra.mxu0 %v4169
    %4729 = vmatpush.bf16.msra.mxu0 %v4165
    %4730 = vmatpush.bf16.msra.mxu0 %v4161
    %4731 = vmatpush.bf16.msra.mxu0 %v4157
    %4732 = vmatpush.bf16.msra.mxu0 %v4153
    %4733 = vmatpush.bf16.msra.mxu0 %v4149
    %4734 = vmatpush.bf16.msra.mxu0 %v4145
    %4735 = vmatpush.bf16.msra.mxu0 %v4141
    %4736 = vmatmul.bf16.gmra.mxu0 %v3036
    %v4737 = vpop.f32.mrf.mxu0
    %v4738 = vadd.f32 %v4724, %v4737
    %v4739 = vpop.f32.mrf.mxu0
    %v4740 = vadd.f32 %v4726, %v4739
    %4741 = vdwg.mxu0
    %4742 = vmatpush.bf16.msra.mxu0 %v4201
    %4743 = vmatpush.bf16.msra.mxu0 %v4197
    %4744 = vmatpush.bf16.msra.mxu0 %v4193
    %4745 = vmatpush.bf16.msra.mxu0 %v4189
    %4746 = vmatpush.bf16.msra.mxu0 %v4185
    %4747 = vmatpush.bf16.msra.mxu0 %v4181
    %4748 = vmatpush.bf16.msra.mxu0 %v4177
    %4749 = vmatpush.bf16.msra.mxu0 %v4173
    %4750 = vmatmul.bf16.gmra.mxu0 %v3037
    %v4751 = vpop.f32.mrf.mxu0
    %v4752 = vadd.f32 %v4738, %v4751
    %v4753 = vpop.f32.mrf.mxu0
    %v4754 = vadd.f32 %v4740, %v4753
    %4755 = vdwg.mxu0
    %4756 = vmatpush.bf16.msra.mxu0 %v4233
    %4757 = vmatpush.bf16.msra.mxu0 %v4229
    %4758 = vmatpush.bf16.msra.mxu0 %v4225
    %4759 = vmatpush.bf16.msra.mxu0 %v4221
    %4760 = vmatpush.bf16.msra.mxu0 %v4217
    %4761 = vmatpush.bf16.msra.mxu0 %v4213
    %4762 = vmatpush.bf16.msra.mxu0 %v4209
    %4763 = vmatpush.bf16.msra.mxu0 %v4205
    %4764 = vmatmul.bf16.gmra.mxu0 %v3038
    %v4765 = vpop.f32.mrf.mxu0
    %v4766 = vadd.f32 %v4752, %v4765
    %v4767 = vpop.f32.mrf.mxu0
    %v4768 = vadd.f32 %v4754, %v4767
    %4769 = vdwg.mxu0
    %4770 = vmatpush.bf16.msra.mxu0 %v4265
    %4771 = vmatpush.bf16.msra.mxu0 %v4261
    %4772 = vmatpush.bf16.msra.mxu0 %v4257
    %4773 = vmatpush.bf16.msra.mxu0 %v4253
    %4774 = vmatpush.bf16.msra.mxu0 %v4249
    %4775 = vmatpush.bf16.msra.mxu0 %v4245
    %4776 = vmatpush.bf16.msra.mxu0 %v4241
    %4777 = vmatpush.bf16.msra.mxu0 %v4237
    %4778 = vmatmul.bf16.gmra.mxu0 %v3039
    %v4779 = vpop.f32.mrf.mxu0
    %v4780 = vadd.f32 %v4766, %v4779
    %v4781 = vpop.f32.mrf.mxu0
    %v4782 = vadd.f32 %v4768, %v4781
    %4783 = vdwg.mxu0
    %4784 = vmatpush.bf16.msra.mxu0 %v4297
    %4785 = vmatpush.bf16.msra.mxu0 %v4293
    %4786 = vmatpush.bf16.msra.mxu0 %v4289
    %4787 = vmatpush.bf16.msra.mxu0 %v4285
    %4788 = vmatpush.bf16.msra.mxu0 %v4281
    %4789 = vmatpush.bf16.msra.mxu0 %v4277
    %4790 = vmatpush.bf16.msra.mxu0 %v4273
    %4791 = vmatpush.bf16.msra.mxu0 %v4269
    %4792 = vmatmul.bf16.gmra.mxu0 %v3040
    %v4793 = vpop.f32.mrf.mxu0
    %v4794 = vadd.f32 %v4780, %v4793
    %v4795 = vpop.f32.mrf.mxu0
    %v4796 = vadd.f32 %v4782, %v4795
    %4797 = vdwg.mxu0
    %4798 = vmatpush.bf16.msra.mxu0 %v4329
    %4799 = vmatpush.bf16.msra.mxu0 %v4325
    %4800 = vmatpush.bf16.msra.mxu0 %v4321
    %4801 = vmatpush.bf16.msra.mxu0 %v4317
    %4802 = vmatpush.bf16.msra.mxu0 %v4313
    %4803 = vmatpush.bf16.msra.mxu0 %v4309
    %4804 = vmatpush.bf16.msra.mxu0 %v4305
    %4805 = vmatpush.bf16.msra.mxu0 %v4301
    %4806 = vmatmul.bf16.gmra.mxu0 %v3041
    %v4807 = vpop.f32.mrf.mxu0
    %v4808 = vadd.f32 %v4794, %v4807
    %v4809 = vpop.f32.mrf.mxu0
    %v4810 = vadd.f32 %v4796, %v4809
    %4811 = vdwg.mxu0
    %4812 = vmatpush.bf16.msra.mxu0 %v4106
    %4813 = vmatpush.bf16.msra.mxu0 %v4102
    %4814 = vmatpush.bf16.msra.mxu0 %v4098
    %4815 = vmatpush.bf16.msra.mxu0 %v4094
    %4816 = vmatpush.bf16.msra.mxu0 %v4090
    %4817 = vmatpush.bf16.msra.mxu0 %v4086
    %4818 = vmatpush.bf16.msra.mxu0 %v4082
    %4819 = vmatpush.bf16.msra.mxu0 %v4078
    %4820 = vmatmul.bf16.gmra.mxu0 %v3034
    %v4821 = vpop.f32.mrf.mxu0
    %v4822 = vadd.f32 %v3302, %v4821
    %v4823 = vpop.f32.mrf.mxu0
    %v4824 = vadd.f32 %v3302, %v4823
    %4825 = vdwg.mxu0
    %4826 = vmatpush.bf16.msra.mxu0 %v4138
    %4827 = vmatpush.bf16.msra.mxu0 %v4134
    %4828 = vmatpush.bf16.msra.mxu0 %v4130
    %4829 = vmatpush.bf16.msra.mxu0 %v4126
    %4830 = vmatpush.bf16.msra.mxu0 %v4122
    %4831 = vmatpush.bf16.msra.mxu0 %v4118
    %4832 = vmatpush.bf16.msra.mxu0 %v4114
    %4833 = vmatpush.bf16.msra.mxu0 %v4110
    %4834 = vmatmul.bf16.gmra.mxu0 %v3035
    %v4835 = vpop.f32.mrf.mxu0
    %v4836 = vadd.f32 %v4822, %v4835
    %v4837 = vpop.f32.mrf.mxu0
    %v4838 = vadd.f32 %v4824, %v4837
    %4839 = vdwg.mxu0
    %4840 = vmatpush.bf16.msra.mxu0 %v4170
    %4841 = vmatpush.bf16.msra.mxu0 %v4166
    %4842 = vmatpush.bf16.msra.mxu0 %v4162
    %4843 = vmatpush.bf16.msra.mxu0 %v4158
    %4844 = vmatpush.bf16.msra.mxu0 %v4154
    %4845 = vmatpush.bf16.msra.mxu0 %v4150
    %4846 = vmatpush.bf16.msra.mxu0 %v4146
    %4847 = vmatpush.bf16.msra.mxu0 %v4142
    %4848 = vmatmul.bf16.gmra.mxu0 %v3036
    %v4849 = vpop.f32.mrf.mxu0
    %v4850 = vadd.f32 %v4836, %v4849
    %v4851 = vpop.f32.mrf.mxu0
    %v4852 = vadd.f32 %v4838, %v4851
    %4853 = vdwg.mxu0
    %4854 = vmatpush.bf16.msra.mxu0 %v4202
    %4855 = vmatpush.bf16.msra.mxu0 %v4198
    %4856 = vmatpush.bf16.msra.mxu0 %v4194
    %4857 = vmatpush.bf16.msra.mxu0 %v4190
    %4858 = vmatpush.bf16.msra.mxu0 %v4186
    %4859 = vmatpush.bf16.msra.mxu0 %v4182
    %4860 = vmatpush.bf16.msra.mxu0 %v4178
    %4861 = vmatpush.bf16.msra.mxu0 %v4174
    %4862 = vmatmul.bf16.gmra.mxu0 %v3037
    %v4863 = vpop.f32.mrf.mxu0
    %v4864 = vadd.f32 %v4850, %v4863
    %v4865 = vpop.f32.mrf.mxu0
    %v4866 = vadd.f32 %v4852, %v4865
    %4867 = vdwg.mxu0
    %4868 = vmatpush.bf16.msra.mxu0 %v4234
    %4869 = vmatpush.bf16.msra.mxu0 %v4230
    %4870 = vmatpush.bf16.msra.mxu0 %v4226
    %4871 = vmatpush.bf16.msra.mxu0 %v4222
    %4872 = vmatpush.bf16.msra.mxu0 %v4218
    %4873 = vmatpush.bf16.msra.mxu0 %v4214
    %4874 = vmatpush.bf16.msra.mxu0 %v4210
    %4875 = vmatpush.bf16.msra.mxu0 %v4206
    %4876 = vmatmul.bf16.gmra.mxu0 %v3038
    %v4877 = vpop.f32.mrf.mxu0
    %v4878 = vadd.f32 %v4864, %v4877
    %v4879 = vpop.f32.mrf.mxu0
    %v4880 = vadd.f32 %v4866, %v4879
    %4881 = vdwg.mxu0
    %4882 = vmatpush.bf16.msra.mxu0 %v4266
    %4883 = vmatpush.bf16.msra.mxu0 %v4262
    %4884 = vmatpush.bf16.msra.mxu0 %v4258
    %4885 = vmatpush.bf16.msra.mxu0 %v4254
    %4886 = vmatpush.bf16.msra.mxu0 %v4250
    %4887 = vmatpush.bf16.msra.mxu0 %v4246
    %4888 = vmatpush.bf16.msra.mxu0 %v4242
    %4889 = vmatpush.bf16.msra.mxu0 %v4238
    %4890 = vmatmul.bf16.gmra.mxu0 %v3039
    %v4891 = vpop.f32.mrf.mxu0
    %v4892 = vadd.f32 %v4878, %v4891
    %v4893 = vpop.f32.mrf.mxu0
    %v4894 = vadd.f32 %v4880, %v4893
    %4895 = vdwg.mxu0
    %4896 = vmatpush.bf16.msra.mxu0 %v4298
    %4897 = vmatpush.bf16.msra.mxu0 %v4294
    %4898 = vmatpush.bf16.msra.mxu0 %v4290
    %4899 = vmatpush.bf16.msra.mxu0 %v4286
    %4900 = vmatpush.bf16.msra.mxu0 %v4282
    %4901 = vmatpush.bf16.msra.mxu0 %v4278
    %4902 = vmatpush.bf16.msra.mxu0 %v4274
    %4903 = vmatpush.bf16.msra.mxu0 %v4270
    %4904 = vmatmul.bf16.gmra.mxu0 %v3040
    %v4905 = vpop.f32.mrf.mxu0
    %v4906 = vadd.f32 %v4892, %v4905
    %v4907 = vpop.f32.mrf.mxu0
    %v4908 = vadd.f32 %v4894, %v4907
    %4909 = vdwg.mxu0
    %4910 = vmatpush.bf16.msra.mxu0 %v4330
    %4911 = vmatpush.bf16.msra.mxu0 %v4326
    %4912 = vmatpush.bf16.msra.mxu0 %v4322
    %4913 = vmatpush.bf16.msra.mxu0 %v4318
    %4914 = vmatpush.bf16.msra.mxu0 %v4314
    %4915 = vmatpush.bf16.msra.mxu0 %v4310
    %4916 = vmatpush.bf16.msra.mxu0 %v4306
    %4917 = vmatpush.bf16.msra.mxu0 %v4302
    %4918 = vmatmul.bf16.gmra.mxu0 %v3041
    %v4919 = vpop.f32.mrf.mxu0
    %v4920 = vadd.f32 %v4906, %v4919
    %v4921 = vpop.f32.mrf.mxu0
    %v4922 = vadd.f32 %v4908, %v4921
    %4923 = vdwg.mxu0
    %4924 = vmatpush.bf16.msra.mxu0 %v4107
    %4925 = vmatpush.bf16.msra.mxu0 %v4103
    %4926 = vmatpush.bf16.msra.mxu0 %v4099
    %4927 = vmatpush.bf16.msra.mxu0 %v4095
    %4928 = vmatpush.bf16.msra.mxu0 %v4091
    %4929 = vmatpush.bf16.msra.mxu0 %v4087
    %4930 = vmatpush.bf16.msra.mxu0 %v4083
    %4931 = vmatpush.bf16.msra.mxu0 %v4079
    %4932 = vmatmul.bf16.gmra.mxu0 %v3034
    %v4933 = vpop.f32.mrf.mxu0
    %v4934 = vadd.f32 %v3303, %v4933
    %v4935 = vpop.f32.mrf.mxu0
    %v4936 = vadd.f32 %v3303, %v4935
    %4937 = vdwg.mxu0
    %4938 = vmatpush.bf16.msra.mxu0 %v4139
    %4939 = vmatpush.bf16.msra.mxu0 %v4135
    %4940 = vmatpush.bf16.msra.mxu0 %v4131
    %4941 = vmatpush.bf16.msra.mxu0 %v4127
    %4942 = vmatpush.bf16.msra.mxu0 %v4123
    %4943 = vmatpush.bf16.msra.mxu0 %v4119
    %4944 = vmatpush.bf16.msra.mxu0 %v4115
    %4945 = vmatpush.bf16.msra.mxu0 %v4111
    %4946 = vmatmul.bf16.gmra.mxu0 %v3035
    %v4947 = vpop.f32.mrf.mxu0
    %v4948 = vadd.f32 %v4934, %v4947
    %v4949 = vpop.f32.mrf.mxu0
    %v4950 = vadd.f32 %v4936, %v4949
    %4951 = vdwg.mxu0
    %4952 = vmatpush.bf16.msra.mxu0 %v4171
    %4953 = vmatpush.bf16.msra.mxu0 %v4167
    %4954 = vmatpush.bf16.msra.mxu0 %v4163
    %4955 = vmatpush.bf16.msra.mxu0 %v4159
    %4956 = vmatpush.bf16.msra.mxu0 %v4155
    %4957 = vmatpush.bf16.msra.mxu0 %v4151
    %4958 = vmatpush.bf16.msra.mxu0 %v4147
    %4959 = vmatpush.bf16.msra.mxu0 %v4143
    %4960 = vmatmul.bf16.gmra.mxu0 %v3036
    %v4961 = vpop.f32.mrf.mxu0
    %v4962 = vadd.f32 %v4948, %v4961
    %v4963 = vpop.f32.mrf.mxu0
    %v4964 = vadd.f32 %v4950, %v4963
    %4965 = vdwg.mxu0
    %4966 = vmatpush.bf16.msra.mxu0 %v4203
    %4967 = vmatpush.bf16.msra.mxu0 %v4199
    %4968 = vmatpush.bf16.msra.mxu0 %v4195
    %4969 = vmatpush.bf16.msra.mxu0 %v4191
    %4970 = vmatpush.bf16.msra.mxu0 %v4187
    %4971 = vmatpush.bf16.msra.mxu0 %v4183
    %4972 = vmatpush.bf16.msra.mxu0 %v4179
    %4973 = vmatpush.bf16.msra.mxu0 %v4175
    %4974 = vmatmul.bf16.gmra.mxu0 %v3037
    %v4975 = vpop.f32.mrf.mxu0
    %v4976 = vadd.f32 %v4962, %v4975
    %v4977 = vpop.f32.mrf.mxu0
    %v4978 = vadd.f32 %v4964, %v4977
    %4979 = vdwg.mxu0
    %4980 = vmatpush.bf16.msra.mxu0 %v4235
    %4981 = vmatpush.bf16.msra.mxu0 %v4231
    %4982 = vmatpush.bf16.msra.mxu0 %v4227
    %4983 = vmatpush.bf16.msra.mxu0 %v4223
    %4984 = vmatpush.bf16.msra.mxu0 %v4219
    %4985 = vmatpush.bf16.msra.mxu0 %v4215
    %4986 = vmatpush.bf16.msra.mxu0 %v4211
    %4987 = vmatpush.bf16.msra.mxu0 %v4207
    %4988 = vmatmul.bf16.gmra.mxu0 %v3038
    %v4989 = vpop.f32.mrf.mxu0
    %v4990 = vadd.f32 %v4976, %v4989
    %v4991 = vpop.f32.mrf.mxu0
    %v4992 = vadd.f32 %v4978, %v4991
    %4993 = vdwg.mxu0
    %4994 = vmatpush.bf16.msra.mxu0 %v4267
    %4995 = vmatpush.bf16.msra.mxu0 %v4263
    %4996 = vmatpush.bf16.msra.mxu0 %v4259
    %4997 = vmatpush.bf16.msra.mxu0 %v4255
    %4998 = vmatpush.bf16.msra.mxu0 %v4251
    %4999 = vmatpush.bf16.msra.mxu0 %v4247
    %5000 = vmatpush.bf16.msra.mxu0 %v4243
    %5001 = vmatpush.bf16.msra.mxu0 %v4239
    %5002 = vmatmul.bf16.gmra.mxu0 %v3039
    %v5003 = vpop.f32.mrf.mxu0
    %v5004 = vadd.f32 %v4990, %v5003
    %v5005 = vpop.f32.mrf.mxu0
    %v5006 = vadd.f32 %v4992, %v5005
    %5007 = vdwg.mxu0
    %5008 = vmatpush.bf16.msra.mxu0 %v4299
    %5009 = vmatpush.bf16.msra.mxu0 %v4295
    %5010 = vmatpush.bf16.msra.mxu0 %v4291
    %5011 = vmatpush.bf16.msra.mxu0 %v4287
    %5012 = vmatpush.bf16.msra.mxu0 %v4283
    %5013 = vmatpush.bf16.msra.mxu0 %v4279
    %5014 = vmatpush.bf16.msra.mxu0 %v4275
    %5015 = vmatpush.bf16.msra.mxu0 %v4271
    %5016 = vmatmul.bf16.gmra.mxu0 %v3040
    %v5017 = vpop.f32.mrf.mxu0
    %v5018 = vadd.f32 %v5004, %v5017
    %v5019 = vpop.f32.mrf.mxu0
    %v5020 = vadd.f32 %v5006, %v5019
    %5021 = vdwg.mxu0
    %5022 = vmatpush.bf16.msra.mxu0 %v4331
    %5023 = vmatpush.bf16.msra.mxu0 %v4327
    %5024 = vmatpush.bf16.msra.mxu0 %v4323
    %5025 = vmatpush.bf16.msra.mxu0 %v4319
    %5026 = vmatpush.bf16.msra.mxu0 %v4315
    %5027 = vmatpush.bf16.msra.mxu0 %v4311
    %5028 = vmatpush.bf16.msra.mxu0 %v4307
    %5029 = vmatpush.bf16.msra.mxu0 %v4303
    %5030 = vmatmul.bf16.gmra.mxu0 %v3041
    %v5031 = vpop.f32.mrf.mxu0
    %v5032 = vadd.f32 %v5018, %v5031
    %v5033 = vpop.f32.mrf.mxu0
    %v5034 = vadd.f32 %v5020, %v5033
    %5035 = vdwg.mxu0
    %v5036 = vmax.f32 %v4696, 0.0
    %v5037 = vmax.f32 %v4808, 0.0
    %v5038 = vmax.f32 %v4920, 0.0
    %v5039 = vmax.f32 %v5032, 0.0
    %v5040 = vmax.f32 %v4698, 0.0
    %v5041 = vmax.f32 %v4810, 0.0
    %v5042 = vmax.f32 %v4922, 0.0
    %v5043 = vmax.f32 %v5034, 0.0
    %v5044 = vpack.c.bf16 %v5040, %v5036
    %v5045 = vpack.c.bf16 %v5041, %v5037
    %v5046 = vpack.c.bf16 %v5042, %v5038
    %v5047 = vpack.c.bf16 %v5043, %v5039
    %v5048 = vld [vmem:[#allocation12] sm:$0xff]
    %v5049 = vld [vmem:[#allocation12 + $0x8] sm:$0xff]
    %v5050 = vld [vmem:[#allocation12 + $0x10] sm:$0xff]
    %v5051 = vld [vmem:[#allocation12 + $0x18] sm:$0xff]
    %v5052 = vld [vmem:[#allocation12 + $0x20] sm:$0xff]
    %v5053 = vld [vmem:[#allocation12 + $0x28] sm:$0xff]
    %v5054 = vld [vmem:[#allocation12 + $0x30] sm:$0xff]
    %v5055 = vld [vmem:[#allocation12 + $0x38] sm:$0xff]
    %v5056 = vld [vmem:[#allocation12 + $0x40] sm:$0xff]
    %v5057 = vld [vmem:[#allocation12 + $0x48] sm:$0xff]
    %v5058 = vld [vmem:[#allocation12 + $0x50] sm:$0xff]
    %v5059 = vld [vmem:[#allocation12 + $0x58] sm:$0xff]
    %v5060 = vld [vmem:[#allocation12 + $0x60] sm:$0xff]
    %v5061 = vld [vmem:[#allocation12 + $0x68] sm:$0xff]
    %v5062 = vld [vmem:[#allocation12 + $0x70] sm:$0xff]
    %v5063 = vld [vmem:[#allocation12 + $0x78] sm:$0xff]
    %v5064 = vld [vmem:[#allocation12 + $0x80] sm:$0xff]
    %v5065 = vld [vmem:[#allocation12 + $0x88] sm:$0xff]
    %v5066 = vld [vmem:[#allocation12 + $0x90] sm:$0xff]
    %v5067 = vld [vmem:[#allocation12 + $0x98] sm:$0xff]
    %v5068 = vld [vmem:[#allocation12 + $0xa0] sm:$0xff]
    %v5069 = vld [vmem:[#allocation12 + $0xa8] sm:$0xff]
    %v5070 = vld [vmem:[#allocation12 + $0xb0] sm:$0xff]
    %v5071 = vld [vmem:[#allocation12 + $0xb8] sm:$0xff]
    %v5072 = vld [vmem:[#allocation12 + $0xc0] sm:$0xff]
    %v5073 = vld [vmem:[#allocation12 + $0xc8] sm:$0xff]
    %v5074 = vld [vmem:[#allocation12 + $0xd0] sm:$0xff]
    %v5075 = vld [vmem:[#allocation12 + $0xd8] sm:$0xff]
    %v5076 = vld [vmem:[#allocation12 + $0xe0] sm:$0xff]
    %v5077 = vld [vmem:[#allocation12 + $0xe8] sm:$0xff]
    %v5078 = vld [vmem:[#allocation12 + $0xf0] sm:$0xff]
    %v5079 = vld [vmem:[#allocation12 + $0xf8] sm:$0xff]
    %v5080 = vld [vmem:[#allocation12 + $0x100] sm:$0xff]
    %v5081 = vld [vmem:[#allocation12 + $0x108] sm:$0xff]
    %v5082 = vld [vmem:[#allocation12 + $0x110] sm:$0xff]
    %v5083 = vld [vmem:[#allocation12 + $0x118] sm:$0xff]
    %v5084 = vld [vmem:[#allocation12 + $0x120] sm:$0xff]
    %v5085 = vld [vmem:[#allocation12 + $0x128] sm:$0xff]
    %v5086 = vld [vmem:[#allocation12 + $0x130] sm:$0xff]
    %v5087 = vld [vmem:[#allocation12 + $0x138] sm:$0xff]
    %v5088 = vld [vmem:[#allocation12 + $0x140] sm:$0xff]
    %v5089 = vld [vmem:[#allocation12 + $0x148] sm:$0xff]
    %v5090 = vld [vmem:[#allocation12 + $0x150] sm:$0xff]
    %v5091 = vld [vmem:[#allocation12 + $0x158] sm:$0xff]
    %v5092 = vld [vmem:[#allocation12 + $0x160] sm:$0xff]
    %v5093 = vld [vmem:[#allocation12 + $0x168] sm:$0xff]
    %v5094 = vld [vmem:[#allocation12 + $0x170] sm:$0xff]
    %v5095 = vld [vmem:[#allocation12 + $0x178] sm:$0xff]
    %v5096 = vld [vmem:[#allocation12 + $0x180] sm:$0xff]
    %v5097 = vld [vmem:[#allocation12 + $0x188] sm:$0xff]
    %v5098 = vld [vmem:[#allocation12 + $0x190] sm:$0xff]
    %v5099 = vld [vmem:[#allocation12 + $0x198] sm:$0xff]
    %v5100 = vld [vmem:[#allocation12 + $0x1a0] sm:$0xff]
    %v5101 = vld [vmem:[#allocation12 + $0x1a8] sm:$0xff]
    %v5102 = vld [vmem:[#allocation12 + $0x1b0] sm:$0xff]
    %v5103 = vld [vmem:[#allocation12 + $0x1b8] sm:$0xff]
    %v5104 = vld [vmem:[#allocation12 + $0x1c0] sm:$0xff]
    %v5105 = vld [vmem:[#allocation12 + $0x1c8] sm:$0xff]
    %v5106 = vld [vmem:[#allocation12 + $0x1d0] sm:$0xff]
    %v5107 = vld [vmem:[#allocation12 + $0x1d8] sm:$0xff]
    %v5108 = vld [vmem:[#allocation12 + $0x1e0] sm:$0xff]
    %v5109 = vld [vmem:[#allocation12 + $0x1e8] sm:$0xff]
    %v5110 = vld [vmem:[#allocation12 + $0x1f0] sm:$0xff]
    %v5111 = vld [vmem:[#allocation12 + $0x1f8] sm:$0xff]
    %v5112 = vld [vmem:[#allocation21] sm:$0x3]
    %v5114 = vperm.slane %v5112, 0
    %v5115 = vperm.slane %v5112, 1
    %v5182 = vunpack.c.l.b16 %v5048
    %v5183 = vunpack.c.h.b16 %v5048
    %v5184 = vunpack.c.l.b16 %v5049
    %v5185 = vunpack.c.h.b16 %v5049
    %v5186 = vunpack.c.l.b16 %v5050
    %v5187 = vunpack.c.h.b16 %v5050
    %v5188 = vunpack.c.l.b16 %v5051
    %v5189 = vunpack.c.h.b16 %v5051
    %v5190 = vunpack.c.l.b16 %v5052
    %v5191 = vunpack.c.h.b16 %v5052
    %v5192 = vunpack.c.l.b16 %v5053
    %v5193 = vunpack.c.h.b16 %v5053
    %v5194 = vunpack.c.l.b16 %v5054
    %v5195 = vunpack.c.h.b16 %v5054
    %v5196 = vunpack.c.l.b16 %v5055
    %v5197 = vunpack.c.h.b16 %v5055
    %v5198 = vunpack.c.l.b16 %v5056
    %v5199 = vunpack.c.h.b16 %v5056
    %v5200 = vunpack.c.l.b16 %v5057
    %v5201 = vunpack.c.h.b16 %v5057
    %v5202 = vunpack.c.l.b16 %v5058
    %v5203 = vunpack.c.h.b16 %v5058
    %v5204 = vunpack.c.l.b16 %v5059
    %v5205 = vunpack.c.h.b16 %v5059
    %v5206 = vunpack.c.l.b16 %v5060
    %v5207 = vunpack.c.h.b16 %v5060
    %v5208 = vunpack.c.l.b16 %v5061
    %v5209 = vunpack.c.h.b16 %v5061
    %v5210 = vunpack.c.l.b16 %v5062
    %v5211 = vunpack.c.h.b16 %v5062
    %v5212 = vunpack.c.l.b16 %v5063
    %v5213 = vunpack.c.h.b16 %v5063
    %v5214 = vunpack.c.l.b16 %v5064
    %v5215 = vunpack.c.h.b16 %v5064
    %v5216 = vunpack.c.l.b16 %v5065
    %v5217 = vunpack.c.h.b16 %v5065
    %v5218 = vunpack.c.l.b16 %v5066
    %v5219 = vunpack.c.h.b16 %v5066
    %v5220 = vunpack.c.l.b16 %v5067
    %v5221 = vunpack.c.h.b16 %v5067
    %v5222 = vunpack.c.l.b16 %v5068
    %v5223 = vunpack.c.h.b16 %v5068
    %v5224 = vunpack.c.l.b16 %v5069
    %v5225 = vunpack.c.h.b16 %v5069
    %v5226 = vunpack.c.l.b16 %v5070
    %v5227 = vunpack.c.h.b16 %v5070
    %v5228 = vunpack.c.l.b16 %v5071
    %v5229 = vunpack.c.h.b16 %v5071
    %v5230 = vunpack.c.l.b16 %v5072
    %v5231 = vunpack.c.h.b16 %v5072
    %v5232 = vunpack.c.l.b16 %v5073
    %v5233 = vunpack.c.h.b16 %v5073
    %v5234 = vunpack.c.l.b16 %v5074
    %v5235 = vunpack.c.h.b16 %v5074
    %v5236 = vunpack.c.l.b16 %v5075
    %v5237 = vunpack.c.h.b16 %v5075
    %v5238 = vunpack.c.l.b16 %v5076
    %v5239 = vunpack.c.h.b16 %v5076
    %v5240 = vunpack.c.l.b16 %v5077
    %v5241 = vunpack.c.h.b16 %v5077
    %v5242 = vunpack.c.l.b16 %v5078
    %v5243 = vunpack.c.h.b16 %v5078
    %v5244 = vunpack.c.l.b16 %v5079
    %v5245 = vunpack.c.h.b16 %v5079
    %v5246 = vunpack.c.l.b16 %v5080
    %v5247 = vunpack.c.h.b16 %v5080
    %v5248 = vunpack.c.l.b16 %v5081
    %v5249 = vunpack.c.h.b16 %v5081
    %v5250 = vunpack.c.l.b16 %v5082
    %v5251 = vunpack.c.h.b16 %v5082
    %v5252 = vunpack.c.l.b16 %v5083
    %v5253 = vunpack.c.h.b16 %v5083
    %v5254 = vunpack.c.l.b16 %v5084
    %v5255 = vunpack.c.h.b16 %v5084
    %v5256 = vunpack.c.l.b16 %v5085
    %v5257 = vunpack.c.h.b16 %v5085
    %v5258 = vunpack.c.l.b16 %v5086
    %v5259 = vunpack.c.h.b16 %v5086
    %v5260 = vunpack.c.l.b16 %v5087
    %v5261 = vunpack.c.h.b16 %v5087
    %v5262 = vunpack.c.l.b16 %v5088
    %v5263 = vunpack.c.h.b16 %v5088
    %v5264 = vunpack.c.l.b16 %v5089
    %v5265 = vunpack.c.h.b16 %v5089
    %v5266 = vunpack.c.l.b16 %v5090
    %v5267 = vunpack.c.h.b16 %v5090
    %v5268 = vunpack.c.l.b16 %v5091
    %v5269 = vunpack.c.h.b16 %v5091
    %v5270 = vunpack.c.l.b16 %v5092
    %v5271 = vunpack.c.h.b16 %v5092
    %v5272 = vunpack.c.l.b16 %v5093
    %v5273 = vunpack.c.h.b16 %v5093
    %v5274 = vunpack.c.l.b16 %v5094
    %v5275 = vunpack.c.h.b16 %v5094
    %v5276 = vunpack.c.l.b16 %v5095
    %v5277 = vunpack.c.h.b16 %v5095
    %v5278 = vunpack.c.l.b16 %v5096
    %v5279 = vunpack.c.h.b16 %v5096
    %v5280 = vunpack.c.l.b16 %v5097
    %v5281 = vunpack.c.h.b16 %v5097
    %v5282 = vunpack.c.l.b16 %v5098
    %v5283 = vunpack.c.h.b16 %v5098
    %v5284 = vunpack.c.l.b16 %v5099
    %v5285 = vunpack.c.h.b16 %v5099
    %v5286 = vunpack.c.l.b16 %v5100
    %v5287 = vunpack.c.h.b16 %v5100
    %v5288 = vunpack.c.l.b16 %v5101
    %v5289 = vunpack.c.h.b16 %v5101
    %v5290 = vunpack.c.l.b16 %v5102
    %v5291 = vunpack.c.h.b16 %v5102
    %v5292 = vunpack.c.l.b16 %v5103
    %v5293 = vunpack.c.h.b16 %v5103
    %v5294 = vunpack.c.l.b16 %v5104
    %v5295 = vunpack.c.h.b16 %v5104
    %v5296 = vunpack.c.l.b16 %v5105
    %v5297 = vunpack.c.h.b16 %v5105
    %v5298 = vunpack.c.l.b16 %v5106
    %v5299 = vunpack.c.h.b16 %v5106
    %v5300 = vunpack.c.l.b16 %v5107
    %v5301 = vunpack.c.h.b16 %v5107
    %v5302 = vunpack.c.l.b16 %v5108
    %v5303 = vunpack.c.h.b16 %v5108
    %v5304 = vunpack.c.l.b16 %v5109
    %v5305 = vunpack.c.h.b16 %v5109
    %v5306 = vunpack.c.l.b16 %v5110
    %v5307 = vunpack.c.h.b16 %v5110
    %v5308 = vunpack.c.l.b16 %v5111
    %v5309 = vunpack.c.h.b16 %v5111
    %v5310 = vpack.c.b16 %v5184, %v5182
    %v5311 = vpack.c.b16 %v5185, %v5183
    %v5312 = vpack.c.b16 %v5188, %v5186
    %v5313 = vpack.c.b16 %v5189, %v5187
    %v5314 = vpack.c.b16 %v5192, %v5190
    %v5315 = vpack.c.b16 %v5193, %v5191
    %v5316 = vpack.c.b16 %v5196, %v5194
    %v5317 = vpack.c.b16 %v5197, %v5195
    %v5318 = vpack.c.b16 %v5200, %v5198
    %v5319 = vpack.c.b16 %v5201, %v5199
    %v5320 = vpack.c.b16 %v5204, %v5202
    %v5321 = vpack.c.b16 %v5205, %v5203
    %v5322 = vpack.c.b16 %v5208, %v5206
    %v5323 = vpack.c.b16 %v5209, %v5207
    %v5324 = vpack.c.b16 %v5212, %v5210
    %v5325 = vpack.c.b16 %v5213, %v5211
    %v5326 = vpack.c.b16 %v5216, %v5214
    %v5327 = vpack.c.b16 %v5217, %v5215
    %v5328 = vpack.c.b16 %v5220, %v5218
    %v5329 = vpack.c.b16 %v5221, %v5219
    %v5330 = vpack.c.b16 %v5224, %v5222
    %v5331 = vpack.c.b16 %v5225, %v5223
    %v5332 = vpack.c.b16 %v5228, %v5226
    %v5333 = vpack.c.b16 %v5229, %v5227
    %v5334 = vpack.c.b16 %v5232, %v5230
    %v5335 = vpack.c.b16 %v5233, %v5231
    %v5336 = vpack.c.b16 %v5236, %v5234
    %v5337 = vpack.c.b16 %v5237, %v5235
    %v5338 = vpack.c.b16 %v5240, %v5238
    %v5339 = vpack.c.b16 %v5241, %v5239
    %v5340 = vpack.c.b16 %v5244, %v5242
    %v5341 = vpack.c.b16 %v5245, %v5243
    %v5342 = vpack.c.b16 %v5248, %v5246
    %v5343 = vpack.c.b16 %v5249, %v5247
    %v5344 = vpack.c.b16 %v5252, %v5250
    %v5345 = vpack.c.b16 %v5253, %v5251
    %v5346 = vpack.c.b16 %v5256, %v5254
    %v5347 = vpack.c.b16 %v5257, %v5255
    %v5348 = vpack.c.b16 %v5260, %v5258
    %v5349 = vpack.c.b16 %v5261, %v5259
    %v5350 = vpack.c.b16 %v5264, %v5262
    %v5351 = vpack.c.b16 %v5265, %v5263
    %v5352 = vpack.c.b16 %v5268, %v5266
    %v5353 = vpack.c.b16 %v5269, %v5267
    %v5354 = vpack.c.b16 %v5272, %v5270
    %v5355 = vpack.c.b16 %v5273, %v5271
    %v5356 = vpack.c.b16 %v5276, %v5274
    %v5357 = vpack.c.b16 %v5277, %v5275
    %v5358 = vpack.c.b16 %v5280, %v5278
    %v5359 = vpack.c.b16 %v5281, %v5279
    %v5360 = vpack.c.b16 %v5284, %v5282
    %v5361 = vpack.c.b16 %v5285, %v5283
    %v5362 = vpack.c.b16 %v5288, %v5286
    %v5363 = vpack.c.b16 %v5289, %v5287
    %v5364 = vpack.c.b16 %v5292, %v5290
    %v5365 = vpack.c.b16 %v5293, %v5291
    %v5366 = vpack.c.b16 %v5296, %v5294
    %v5367 = vpack.c.b16 %v5297, %v5295
    %v5368 = vpack.c.b16 %v5300, %v5298
    %v5369 = vpack.c.b16 %v5301, %v5299
    %v5370 = vpack.c.b16 %v5304, %v5302
    %v5371 = vpack.c.b16 %v5305, %v5303
    %v5372 = vpack.c.b16 %v5308, %v5306
    %v5373 = vpack.c.b16 %v5309, %v5307
    %5438 = vmatpush.bf16.msra.mxu0 %v5324
    %5439 = vmatpush.bf16.msra.mxu0 %v5322
    %5440 = vmatpush.bf16.msra.mxu0 %v5320
    %5441 = vmatpush.bf16.msra.mxu0 %v5318
    %5442 = vmatpush.bf16.msra.mxu0 %v5316
    %5443 = vmatpush.bf16.msra.mxu0 %v5314
    %5444 = vmatpush.bf16.msra.mxu0 %v5312
    %5445 = vmatpush.bf16.msra.mxu0 %v5310
    %5446 = vmatmul.bf16.gmra.mxu0 %v5044
    %v5447 = vpop.f32.mrf.mxu0
    %v5448 = vadd.f32 %v5114, %v5447
    %v5449 = vpop.f32.mrf.mxu0
    %v5450 = vadd.f32 %v5114, %v5449
    %5451 = vdwg.mxu0
    %5452 = vmatpush.bf16.msra.mxu0 %v5340
    %5453 = vmatpush.bf16.msra.mxu0 %v5338
    %5454 = vmatpush.bf16.msra.mxu0 %v5336
    %5455 = vmatpush.bf16.msra.mxu0 %v5334
    %5456 = vmatpush.bf16.msra.mxu0 %v5332
    %5457 = vmatpush.bf16.msra.mxu0 %v5330
    %5458 = vmatpush.bf16.msra.mxu0 %v5328
    %5459 = vmatpush.bf16.msra.mxu0 %v5326
    %5460 = vmatmul.bf16.gmra.mxu0 %v5045
    %v5461 = vpop.f32.mrf.mxu0
    %v5462 = vadd.f32 %v5448, %v5461
    %v5463 = vpop.f32.mrf.mxu0
    %v5464 = vadd.f32 %v5450, %v5463
    %5465 = vdwg.mxu0
    %5466 = vmatpush.bf16.msra.mxu0 %v5356
    %5467 = vmatpush.bf16.msra.mxu0 %v5354
    %5468 = vmatpush.bf16.msra.mxu0 %v5352
    %5469 = vmatpush.bf16.msra.mxu0 %v5350
    %5470 = vmatpush.bf16.msra.mxu0 %v5348
    %5471 = vmatpush.bf16.msra.mxu0 %v5346
    %5472 = vmatpush.bf16.msra.mxu0 %v5344
    %5473 = vmatpush.bf16.msra.mxu0 %v5342
    %5474 = vmatmul.bf16.gmra.mxu0 %v5046
    %v5475 = vpop.f32.mrf.mxu0
    %v5476 = vadd.f32 %v5462, %v5475
    %v5477 = vpop.f32.mrf.mxu0
    %v5478 = vadd.f32 %v5464, %v5477
    %5479 = vdwg.mxu0
    %5480 = vmatpush.bf16.msra.mxu0 %v5372
    %5481 = vmatpush.bf16.msra.mxu0 %v5370
    %5482 = vmatpush.bf16.msra.mxu0 %v5368
    %5483 = vmatpush.bf16.msra.mxu0 %v5366
    %5484 = vmatpush.bf16.msra.mxu0 %v5364
    %5485 = vmatpush.bf16.msra.mxu0 %v5362
    %5486 = vmatpush.bf16.msra.mxu0 %v5360
    %5487 = vmatpush.bf16.msra.mxu0 %v5358
    %5488 = vmatmul.bf16.gmra.mxu0 %v5047
    %v5489 = vpop.f32.mrf.mxu0
    %v5490 = vadd.f32 %v5476, %v5489
    %v5491 = vpop.f32.mrf.mxu0
    %v5492 = vadd.f32 %v5478, %v5491
    %5493 = vdwg.mxu0
    %5494 = vmatpush.bf16.msra.mxu0 %v5325
    %5495 = vmatpush.bf16.msra.mxu0 %v5323
    %5496 = vmatpush.bf16.msra.mxu0 %v5321
    %5497 = vmatpush.bf16.msra.mxu0 %v5319
    %5498 = vmatpush.bf16.msra.mxu0 %v5317
    %5499 = vmatpush.bf16.msra.mxu0 %v5315
    %5500 = vmatpush.bf16.msra.mxu0 %v5313
    %5501 = vmatpush.bf16.msra.mxu0 %v5311
    %5502 = vmatmul.bf16.gmra.mxu0 %v5044
    %v5503 = vpop.f32.mrf.mxu0
    %v5504 = vadd.f32 %v5115, %v5503
    %v5505 = vpop.f32.mrf.mxu0
    %v5506 = vadd.f32 %v5115, %v5505
    %5507 = vdwg.mxu0
    %5508 = vmatpush.bf16.msra.mxu0 %v5341
    %5509 = vmatpush.bf16.msra.mxu0 %v5339
    %5510 = vmatpush.bf16.msra.mxu0 %v5337
    %5511 = vmatpush.bf16.msra.mxu0 %v5335
    %5512 = vmatpush.bf16.msra.mxu0 %v5333
    %5513 = vmatpush.bf16.msra.mxu0 %v5331
    %5514 = vmatpush.bf16.msra.mxu0 %v5329
    %5515 = vmatpush.bf16.msra.mxu0 %v5327
    %5516 = vmatmul.bf16.gmra.mxu0 %v5045
    %v5517 = vpop.f32.mrf.mxu0
    %v5518 = vadd.f32 %v5504, %v5517
    %v5519 = vpop.f32.mrf.mxu0
    %v5520 = vadd.f32 %v5506, %v5519
    %5521 = vdwg.mxu0
    %5522 = vmatpush.bf16.msra.mxu0 %v5357
    %5523 = vmatpush.bf16.msra.mxu0 %v5355
    %5524 = vmatpush.bf16.msra.mxu0 %v5353
    %5525 = vmatpush.bf16.msra.mxu0 %v5351
    %5526 = vmatpush.bf16.msra.mxu0 %v5349
    %5527 = vmatpush.bf16.msra.mxu0 %v5347
    %5528 = vmatpush.bf16.msra.mxu0 %v5345
    %5529 = vmatpush.bf16.msra.mxu0 %v5343
    %5530 = vmatmul.bf16.gmra.mxu0 %v5046
    %v5531 = vpop.f32.mrf.mxu0
    %v5532 = vadd.f32 %v5518, %v5531
    %v5533 = vpop.f32.mrf.mxu0
    %v5534 = vadd.f32 %v5520, %v5533
    %5535 = vdwg.mxu0
    %5536 = vmatpush.bf16.msra.mxu0 %v5373
    %5537 = vmatpush.bf16.msra.mxu0 %v5371
    %5538 = vmatpush.bf16.msra.mxu0 %v5369
    %5539 = vmatpush.bf16.msra.mxu0 %v5367
    %5540 = vmatpush.bf16.msra.mxu0 %v5365
    %5541 = vmatpush.bf16.msra.mxu0 %v5363
    %5542 = vmatpush.bf16.msra.mxu0 %v5361
    %5543 = vmatpush.bf16.msra.mxu0 %v5359
    %5544 = vmatmul.bf16.gmra.mxu0 %v5047
    %v5545 = vpop.f32.mrf.mxu0
    %v5546 = vadd.f32 %v5532, %v5545
    %v5547 = vpop.f32.mrf.mxu0
    %v5548 = vadd.f32 %v5534, %v5547
    %5549 = vdwg.mxu0
    %v5550 = vmax.f32 %v5490, 0.0
    %v5551 = vmax.f32 %v5546, 0.0
    %v5552 = vmax.f32 %v5492, 0.0
    %v5553 = vmax.f32 %v5548, 0.0
    %v5554 = vpack.c.bf16 %v5552, %v5550
    %v5555 = vpack.c.bf16 %v5553, %v5551
    %v5556 = vld [vmem:[%s8] sm:$0xf]
    %v5557 = vld [vmem:[%s8 + $0x4] sm:$0xf]
    %v5558 = vld [vmem:[%s8 + $0x8] sm:$0xf]
    %v5559 = vld [vmem:[%s8 + $0xc] sm:$0xf]
    %v5560 = vld [vmem:[%s8 + $0x10] sm:$0xf]
    %v5561 = vld [vmem:[%s8 + $0x14] sm:$0xf]
    %v5562 = vld [vmem:[%s8 + $0x18] sm:$0xf]
    %v5563 = vld [vmem:[%s8 + $0x1c] sm:$0xf]
    %v5564 = vld [vmem:[%s8 + $0x20] sm:$0xf]
    %v5565 = vld [vmem:[%s8 + $0x24] sm:$0xf]
    %v5566 = vld [vmem:[%s8 + $0x28] sm:$0xf]
    %v5567 = vld [vmem:[%s8 + $0x2c] sm:$0xf]
    %v5568 = vld [vmem:[%s8 + $0x30] sm:$0xf]
    %v5569 = vld [vmem:[%s8 + $0x34] sm:$0xf]
    %v5570 = vld [vmem:[%s8 + $0x38] sm:$0xf]
    %v5571 = vld [vmem:[%s8 + $0x3c] sm:$0xf]
    %v5572 = vld [vmem:[%s8 + $0x40] sm:$0xf]
    %v5573 = vld [vmem:[%s8 + $0x44] sm:$0xf]
    %v5574 = vld [vmem:[%s8 + $0x48] sm:$0xf]
    %v5575 = vld [vmem:[%s8 + $0x4c] sm:$0xf]
    %v5576 = vld [vmem:[%s8 + $0x50] sm:$0xf]
    %v5577 = vld [vmem:[%s8 + $0x54] sm:$0xf]
    %v5578 = vld [vmem:[%s8 + $0x58] sm:$0xf]
    %v5579 = vld [vmem:[%s8 + $0x5c] sm:$0xf]
    %v5580 = vld [vmem:[%s8 + $0x60] sm:$0xf]
    %v5581 = vld [vmem:[%s8 + $0x64] sm:$0xf]
    %v5582 = vld [vmem:[%s8 + $0x68] sm:$0xf]
    %v5583 = vld [vmem:[%s8 + $0x6c] sm:$0xf]
    %v5584 = vld [vmem:[%s8 + $0x70] sm:$0xf]
    %v5585 = vld [vmem:[%s8 + $0x74] sm:$0xf]
    %v5586 = vld [vmem:[%s8 + $0x78] sm:$0xf]
    %v5587 = vld [vmem:[%s8 + $0x7c] sm:$0xf]
    %v5588 = vld [vmem:[%s18] sm:$0x1]
    %v5590 = vperm.slane %v5588, 0
    %v5624 = vunpack.c.l.b16 %v5556
    %v5625 = vunpack.c.l.b16 %v5557
    %v5626 = vunpack.c.l.b16 %v5558
    %v5627 = vunpack.c.l.b16 %v5559
    %v5628 = vunpack.c.l.b16 %v5560
    %v5629 = vunpack.c.l.b16 %v5561
    %v5630 = vunpack.c.l.b16 %v5562
    %v5631 = vunpack.c.l.b16 %v5563
    %v5632 = vunpack.c.l.b16 %v5564
    %v5633 = vunpack.c.l.b16 %v5565
    %v5634 = vunpack.c.l.b16 %v5566
    %v5635 = vunpack.c.l.b16 %v5567
    %v5636 = vunpack.c.l.b16 %v5568
    %v5637 = vunpack.c.l.b16 %v5569
    %v5638 = vunpack.c.l.b16 %v5570
    %v5639 = vunpack.c.l.b16 %v5571
    %v5640 = vunpack.c.l.b16 %v5572
    %v5641 = vunpack.c.l.b16 %v5573
    %v5642 = vunpack.c.l.b16 %v5574
    %v5643 = vunpack.c.l.b16 %v5575
    %v5644 = vunpack.c.l.b16 %v5576
    %v5645 = vunpack.c.l.b16 %v5577
    %v5646 = vunpack.c.l.b16 %v5578
    %v5647 = vunpack.c.l.b16 %v5579
    %v5648 = vunpack.c.l.b16 %v5580
    %v5649 = vunpack.c.l.b16 %v5581
    %v5650 = vunpack.c.l.b16 %v5582
    %v5651 = vunpack.c.l.b16 %v5583
    %v5652 = vunpack.c.l.b16 %v5584
    %v5653 = vunpack.c.l.b16 %v5585
    %v5654 = vunpack.c.l.b16 %v5586
    %v5655 = vunpack.c.l.b16 %v5587
    %v5656 = vpack.c.b16 %v5625, %v5624
    %v5657 = vpack.c.b16 %v5627, %v5626
    %v5658 = vpack.c.b16 %v5629, %v5628
    %v5659 = vpack.c.b16 %v5631, %v5630
    %v5660 = vpack.c.b16 %v5633, %v5632
    %v5661 = vpack.c.b16 %v5635, %v5634
    %v5662 = vpack.c.b16 %v5637, %v5636
    %v5663 = vpack.c.b16 %v5639, %v5638
    %v5664 = vpack.c.b16 %v5641, %v5640
    %v5665 = vpack.c.b16 %v5643, %v5642
    %v5666 = vpack.c.b16 %v5645, %v5644
    %v5667 = vpack.c.b16 %v5647, %v5646
    %v5668 = vpack.c.b16 %v5649, %v5648
    %v5669 = vpack.c.b16 %v5651, %v5650
    %v5670 = vpack.c.b16 %v5653, %v5652
    %v5671 = vpack.c.b16 %v5655, %v5654
    %5688 = vmatpush.bf16.msra.mxu0 %v5663
    %5689 = vmatpush.bf16.msra.mxu0 %v5662
    %5690 = vmatpush.bf16.msra.mxu0 %v5661
    %5691 = vmatpush.bf16.msra.mxu0 %v5660
    %5692 = vmatpush.bf16.msra.mxu0 %v5659
    %5693 = vmatpush.bf16.msra.mxu0 %v5658
    %5694 = vmatpush.bf16.msra.mxu0 %v5657
    %5695 = vmatpush.bf16.msra.mxu0 %v5656
    %5696 = vmatmul.bf16.gmra.mxu0 %v5554
    %v5697 = vpop.f32.mrf.mxu0
    %v5698 = vadd.f32 %v5590, %v5697
    %v5699 = vpop.f32.mrf.mxu0
    %v5700 = vadd.f32 %v5590, %v5699
    %5701 = vdwg.mxu0
    %5702 = vmatpush.bf16.msra.mxu0 %v5671
    %5703 = vmatpush.bf16.msra.mxu0 %v5670
    %5704 = vmatpush.bf16.msra.mxu0 %v5669
    %5705 = vmatpush.bf16.msra.mxu0 %v5668
    %5706 = vmatpush.bf16.msra.mxu0 %v5667
    %5707 = vmatpush.bf16.msra.mxu0 %v5666
    %5708 = vmatpush.bf16.msra.mxu0 %v5665
    %5709 = vmatpush.bf16.msra.mxu0 %v5664
    %5710 = vmatmul.bf16.gmra.mxu0 %v5555
    %v5711 = vpop.f32.mrf.mxu0
    %v5712 = vadd.f32 %v5698, %v5711
    %v5713 = vpop.f32.mrf.mxu0
    %v5714 = vadd.f32 %v5700, %v5713
    %5715 = vdwg.mxu0
    %v5716 = vmax.f32 %v5712, 0.0
    %v5717 = vmax.f32 %v5714, 0.0
    %v5718 = vpack.c.bf16 %v5717, %v5716
    %v5719 = vld [vmem:[%s9] sm:$0xf]
    %v5720 = vld [vmem:[%s9 + $0x4] sm:$0xf]
    %v5721 = vld [vmem:[%s9 + $0x8] sm:$0xf]
    %v5722 = vld [vmem:[%s9 + $0xc] sm:$0xf]
    %v5723 = vld [vmem:[%s9 + $0x10] sm:$0xf]
    %v5724 = vld [vmem:[%s9 + $0x14] sm:$0xf]
    %v5725 = vld [vmem:[%s9 + $0x18] sm:$0xf]
    %v5726 = vld [vmem:[%s9 + $0x1c] sm:$0xf]
    %v5727 = vld [vmem:[%s9 + $0x20] sm:$0xf]
    %v5728 = vld [vmem:[%s9 + $0x24] sm:$0xf]
    %v5729 = vld [vmem:[%s9 + $0x28] sm:$0xf]
    %v5730 = vld [vmem:[%s9 + $0x2c] sm:$0xf]
    %v5731 = vld [vmem:[%s9 + $0x30] sm:$0xf]
    %v5732 = vld [vmem:[%s9 + $0x34] sm:$0xf]
    %v5733 = vld [vmem:[%s9 + $0x38] sm:$0xf]
    %v5734 = vld [vmem:[%s9 + $0x3c] sm:$0xf]
    %v5735 = vld [vmem:[%s19] sm:$0x1]
    %v5737 = vperm.slane %v5735, 0
    %v5755 = vunpack.c.l.b16 %v5719
    %v5756 = vunpack.c.l.b16 %v5720
    %v5757 = vunpack.c.l.b16 %v5721
    %v5758 = vunpack.c.l.b16 %v5722
    %v5759 = vunpack.c.l.b16 %v5723
    %v5760 = vunpack.c.l.b16 %v5724
    %v5761 = vunpack.c.l.b16 %v5725
    %v5762 = vunpack.c.l.b16 %v5726
    %v5763 = vunpack.c.l.b16 %v5727
    %v5764 = vunpack.c.l.b16 %v5728
    %v5765 = vunpack.c.l.b16 %v5729
    %v5766 = vunpack.c.l.b16 %v5730
    %v5767 = vunpack.c.l.b16 %v5731
    %v5768 = vunpack.c.l.b16 %v5732
    %v5769 = vunpack.c.l.b16 %v5733
    %v5770 = vunpack.c.l.b16 %v5734
    %v5771 = vpack.c.b16 %v5756, %v5755
    %v5772 = vpack.c.b16 %v5758, %v5757
    %v5773 = vpack.c.b16 %v5760, %v5759
    %v5774 = vpack.c.b16 %v5762, %v5761
    %v5775 = vpack.c.b16 %v5764, %v5763
    %v5776 = vpack.c.b16 %v5766, %v5765
    %v5777 = vpack.c.b16 %v5768, %v5767
    %v5778 = vpack.c.b16 %v5770, %v5769
    %5787 = vmatpush.bf16.msra.mxu0 %v5778
    %5788 = vmatpush.bf16.msra.mxu0 %v5777
    %5789 = vmatpush.bf16.msra.mxu0 %v5776
    %5790 = vmatpush.bf16.msra.mxu0 %v5775
    %5791 = vmatpush.bf16.msra.mxu0 %v5774
    %5792 = vmatpush.bf16.msra.mxu0 %v5773
    %5793 = vmatpush.bf16.msra.mxu0 %v5772
    %5794 = vmatpush.bf16.msra.mxu0 %v5771
    %5795 = vmatmul.bf16.gmra.mxu0 %v5718
    %v5796 = vpop.f32.mrf.mxu0
    %v5797 = vadd.f32 %v5737, %v5796
    %v5798 = vpop.f32.mrf.mxu0
    %v5799 = vadd.f32 %v5737, %v5798
    %5800 = vdwg.mxu0
    %v5801 = vmax.f32 %v5797, 0.0
    %v5802 = vmax.f32 %v5799, 0.0
    %v5803 = vpack.c.bf16 %v5802, %v5801
    %v5804 = vld [vmem:[#allocation13] sm:$0xf]
    %v5805 = vld [vmem:[#allocation13 + $0x4] sm:$0xf]
    %v5806 = vld [vmem:[#allocation13 + $0x8] sm:$0xf]
    %v5807 = vld [vmem:[#allocation13 + $0xc] sm:$0xf]
    %v5808 = vld [vmem:[#allocation13 + $0x10] sm:$0xf]
    %v5809 = vld [vmem:[#allocation13 + $0x14] sm:$0xf]
    %v5810 = vld [vmem:[#allocation13 + $0x18] sm:$0xf]
    %v5811 = vld [vmem:[#allocation13 + $0x1c] sm:$0xf]
    %v5812 = vld [vmem:[%s20] sm:$0x1]
    %v5814 = vperm.slane %v5812, 0
    %v5824 = vunpack.c.l.b16 %v5804
    %v5825 = vunpack.c.l.b16 %v5805
    %v5826 = vunpack.c.l.b16 %v5806
    %v5827 = vunpack.c.l.b16 %v5807
    %v5828 = vunpack.c.l.b16 %v5808
    %v5829 = vunpack.c.l.b16 %v5809
    %v5830 = vunpack.c.l.b16 %v5810
    %v5831 = vunpack.c.l.b16 %v5811
    %v5832 = vpack.c.b16 %v5825, %v5824
    %v5833 = vpack.c.b16 %v5827, %v5826
    %v5834 = vpack.c.b16 %v5829, %v5828
    %v5835 = vpack.c.b16 %v5831, %v5830
    %v5841 = vsel %vm341, %v5803, 0
    %5843 = vmatpush.bf16.msra.mxu0 0
    %5844 = vmatpush.bf16.msra.mxu0 0
    %5845 = vmatpush.bf16.msra.mxu0 0
    %5846 = vmatpush.bf16.msra.mxu0 0
    %5847 = vmatpush.bf16.msra.mxu0 %v5835
    %5848 = vmatpush.bf16.msra.mxu0 %v5834
    %5849 = vmatpush.bf16.msra.mxu0 %v5833
    %5850 = vmatpush.bf16.msra.mxu0 %v5832
    %5851 = vmatmul.bf16.gmra.mxu0 %v5841
    %v5852 = vpop.f32.mrf.mxu0
    %v5853 = vadd.f32 %v5814, %v5852
    %v5854 = vpop.f32.mrf.mxu0
    %v5855 = vadd.f32 %v5814, %v5854
    %5856 = vdwg.mxu0
    %5857 = vst [vmem:[%s21] sm:$0xff] %v5853
    %5858 = vst [vmem:[%s21 + $0x8] sm:$0xff] %v5855
    // Predicated region
    $region138: #{generator_forward.1} parent=1 // pred_check
      _
    $region139: #{generator_forward.1} parent=1 // pred_check_branch
      %5860 = sbr.rel (0) target = $region141
    $region140: #{generator_forward.1} parent=1 // pred_region
      _
    $region141: #{generator_forward.1} parent=1 // pred_fallthru
      _
    // Predicated region
    $region142: #{generator_forward.1} parent=1 // pred_check
      _
    $region143: #{generator_forward.1} parent=1 // pred_check_branch
      %5862 = sbr.rel (0) target = $region145
    $region144: #{generator_forward.1} parent=1 // pred_region
      _
    $region145: #{generator_forward.1} parent=1 // pred_fallthru
      _
    %5863 = vsyncpa [#allocation3], 1
    %5864 = vsyncpa [#allocation5], 1
    %5865 = vsyncpa [#allocation8], 1
    %5866 = vsyncpa [#allocation11], 1
    %5867 = vsyncpa [#allocation14], 1
    %5868 = vsyncpa [#allocation17], 1
    %5869 = vsyncpa [#allocation20], 1

</llo_original>
